<compile_context>
chip_gen: v6e
topology: v6e:2x2x1
jax: 0.10.0
libtpu: 0.0.40
codegen_flags: <defaults>
</compile_context>

<pallas_src>
import functools

import jax
import jax.numpy as jnp
from jax.experimental import pallas as pl
from jax.experimental.pallas import tpu as pltpu


def _round_up(x, m):
    return (x + m - 1) // m * m


def _bottleneck_kernel(x_ref, w1_ref, b1_ref, w2_ref, b2_ref, w3_ref, b3_ref,
                       weca_ref, o_ref, slab_ref, *, H, W):
    """One grid step == one batch element.

    x_ref   : (1, H*W, Cp)  f32   flattened NHWC input (channels padded to 128)
    w1_ref  : (Cp, Pp)      bf16  conv1 (1x1), BN1 scale folded in
    w2_ref  : (3, 3*Pp, Pp) bf16  conv2 (3x3) as per-ky stacked-kx weight
    w3_ref  : (Pp, Cp)      bf16  conv3 (1x1), BN3 scale folded in
    b*_ref  : (1, C)        f32   folded BatchNorm shift
    weca_ref: (3,) SMEM     f32   ECA 1-D conv weight (k_size=3)
    slab_ref: ((H+2)*W, 3*Pp) bf16 VMEM scratch: [left | center | right] taps
    """
    HW = H * W
    Pp = w1_ref.shape[1]
    Cp = w3_ref.shape[1]
    bf16 = jnp.bfloat16

    x = x_ref[0]                                                  # (HW, Cp) f32

    # ---- conv1 (1x1, BN scale pre-folded) + bias + ReLU ----
    h1 = jnp.dot(x.astype(bf16), w1_ref[...],
                 preferred_element_type=jnp.float32)
    h1 = jnp.maximum(h1 + b1_ref[...], 0.0)                       # (HW, Pp) f32

    # ---- conv2 (3x3, stride 1, pad 1) + bias + ReLU ----
    # Zero only the 2*W halo pad rows.  (No pl.when(program_id==0) guard: under
    # megacore the grid is split across cores and a core's first step may not
    # be program_id 0; per-step zeroing of just the halo is cheap and safe.)
    zeros_pad = jnp.zeros((W, 3 * Pp), bf16)
    slab_ref[0:W, :] = zeros_pad
    slab_ref[W + HW:(H + 2) * W, :] = zeros_pad

    # Slab column blocks hold [h1[x-1] | h1[x] | h1[x+1]].  The horizontal
    # shifts are sublane rolls of h1 (non-negative shifts; wrap-around rows are
    # exactly the rows the column masks zero out).  All slab stores / the three
    # ky-loop reads below are at sublane offsets 0, W, 2W (aligned).
    col = jax.lax.broadcasted_iota(jnp.int32, (HW, 1), 0) % W
    left = jnp.where(col == 0, 0.0, pltpu.roll(h1, shift=1, axis=0))
    right = jnp.where(col == W - 1, 0.0, pltpu.roll(h1, shift=HW - 1, axis=0))
    slab_ref[W:W + HW, 0:Pp] = left.astype(bf16)
    slab_ref[W:W + HW, Pp:2 * Pp] = h1.astype(bf16)
    slab_ref[W:W + HW, 2 * Pp:3 * Pp] = right.astype(bf16)

    # Three fused MXU dots (K = 3*Pp), one per vertical tap; slab loads are at
    # static row offsets {0, W, 2W}.
    acc = jnp.zeros((HW, Pp), jnp.float32)
    for ky in range(3):
        acc = acc + jnp.dot(slab_ref[ky * W:ky * W + HW, :], w2_ref[ky],
                            preferred_element_type=jnp.float32)
    h2 = jnp.maximum(acc + b2_ref[...], 0.0)                      # (HW, Pp) f32

    # ---- conv3 (1x1) + bias ----
    h3 = jnp.dot(h2.astype(bf16), w3_ref[...],
                 preferred_element_type=jnp.float32)
    h3 = h3 + b3_ref[...]                                         # (HW, Cp) f32

    # ---- ECA: global average pool + 1-D conv (k=3, zero pad) over channels ----
    # Lane rolls (XLU) + two boundary masks; padded channels of h3 are exactly
    # zero so they behave as the conv's zero pad.  shift = Cp - 1 is the
    # non-negative equivalent of rolling by -1.
    y = jnp.mean(h3, axis=0, keepdims=True)                       # (1, Cp)
    cidx = jax.lax.broadcasted_iota(jnp.int32, (1, Cp), 1)
    y_m1 = jnp.where(cidx == 0, 0.0, pltpu.roll(y, shift=1, axis=1))
    y_p1 = jnp.where(cidx == Cp - 1, 0.0, pltpu.roll(y, shift=Cp - 1, axis=1))
    yc = weca_ref[0] * y_m1 + weca_ref[1] * y + weca_ref[2] * y_p1
    gate = jax.nn.sigmoid(yc)                                     # (1, Cp)
    out = h3 * gate

    # ---- residual add + ReLU ----
    out = jnp.maximum(out + x, 0.0)
    o_ref[0] = out.astype(o_ref.dtype)


def prepare_kernel_params(params, cin, lane=128):
    """Fold BN scales into conv weights, pad channels to lane multiples, cast
    matmul weights to bf16.  One-time transform in plain JAX (glue)."""
    w1, s1, b1, w2, s2, b2, w3, s3, b3, weca = params
    P = w1.shape[1]
    C4 = w3.shape[1]
    Pp = _round_up(P, lane)
    Cp = _round_up(max(cin, C4), lane)

    w1f = w1 * s1                                   # (Cin, P) * (1, P)
    w2f = w2 * s2[0][None, None, None, :]           # (3,3,P,P) * (P,) on O axis
    w3f = w3 * s3                                   # (P, C4) * (1, C4)

    w1p = jnp.zeros((Cp, Pp), jnp.float32).at[:cin, :P].set(w1f)
    b1p = jnp.zeros((1, Pp), jnp.float32).at[:, :P].set(b1)
    w2p = jnp.zeros((3, 3, Pp, Pp), jnp.float32).at[:, :, :P, :P].set(w2f)
    b2p = jnp.zeros((1, Pp), jnp.float32).at[:, :P].set(b2)
    w3p = jnp.zeros((Pp, Cp), jnp.float32).at[:P, :C4].set(w3f)
    b3p = jnp.zeros((1, Cp), jnp.float32).at[:, :C4].set(b3)

    # im2col-lite layout for conv2: per ky, stack kx blocks on the contraction
    # dim in order [kx=0 | kx=1 | kx=2] to match the slab's [left|center|right].
    w2p = w2p.reshape(3, 3 * Pp, Pp)

    return (w1p.astype(jnp.bfloat16), b1p,
            w2p.astype(jnp.bfloat16), b2p,
            w3p.astype(jnp.bfloat16), b3p, weca)


def eca_bottleneck_forward(x_nchw, params):
    """Pallas forward pass.  x_nchw: (N, Cin, H, W), Cin == planes*4."""
    N, Cin, H, W = x_nchw.shape
    w1, _, _, _, _, _, w3, _, _, _ = params
    P = w1.shape[1]
    C4 = w3.shape[1]
    assert Cin == C4, "downsample=None requires inplanes == planes * 4"
    Pp = _round_up(P, 128)
    Cp = _round_up(C4, 128)

    w1p, b1p, w2p, b2p, w3p, b3p, weca = prepare_kernel_params(params, Cin)

    # NCHW -> NHWC -> (N, H*W, Cp) with zero-padded channels (glue).
    x = jnp.transpose(x_nchw, (0, 2, 3, 1)).reshape(N, H * W, Cin)
    x = jnp.pad(x, ((0, 0), (0, 0), (0, Cp - Cin)))

    kernel = functools.partial(_bottleneck_kernel, H=H, W=W)

    def full_spec(shape):
        return pl.BlockSpec(shape, lambda n: (0,) * len(shape))

    out_flat = pl.pallas_call(
        kernel,
        out_shape=jax.ShapeDtypeStruct((N, H * W, Cp), jnp.float32),
        grid_spec=pltpu.PrefetchScalarGridSpec(
            num_scalar_prefetch=0,
            grid=(N,),
            in_specs=[
                pl.BlockSpec((1, H * W, Cp), lambda n: (n, 0, 0)),
                full_spec(w1p.shape), full_spec(b1p.shape),
                full_spec(w2p.shape), full_spec(b2p.shape),
                full_spec(w3p.shape), full_spec(b3p.shape),
                pl.BlockSpec(memory_space=pltpu.MemorySpace.SMEM),
            ],
            out_specs=pl.BlockSpec((1, H * W, Cp), lambda n: (n, 0, 0)),
            scratch_shapes=[pltpu.VMEM(((H + 2) * W, 3 * Pp), jnp.bfloat16)],
        ),
        compiler_params=pltpu.CompilerParams(
            dimension_semantics=("parallel",),
            vmem_limit_bytes=64 * 1024 * 1024),
    )(x, w1p, b1p, w2p, b2p, w3p, b3p, weca)

    # (N, H*W, Cp) -> drop channel padding -> NCHW
    return out_flat[:, :, :C4].reshape(N, H, W, C4).transpose(0, 3, 1, 2)


def init_params(key, inplanes, planes, k_size=3, eps=1e-5):
    """Deterministic synthetic parameters matching ECABottleneck shapes."""
    C4 = planes * 4
    keys = jax.random.split(key, 16)

    def bn(kg, kb, km, kv, c):
        gamma = jax.random.uniform(kg, (c,), jnp.float32, 0.5, 1.5)
        beta = 0.1 * jax.random.normal(kb, (c,), jnp.float32)
        mean = 0.1 * jax.random.normal(km, (c,), jnp.float32)
        var = jax.random.uniform(kv, (c,), jnp.float32, 0.5, 1.5)
        scale = gamma / jnp.sqrt(var + eps)
        bias = beta - mean * scale
        return scale.reshape(1, c), bias.reshape(1, c)

    w1 = 0.2 * jax.random.normal(keys[0], (inplanes, planes), jnp.float32)
    s1, b1 = bn(keys[1], keys[2], keys[3], keys[4], planes)
    w2 = 0.2 * jax.random.normal(keys[5], (3, 3, planes, planes), jnp.float32)  # HWIO
    s2, b2 = bn(keys[6], keys[7], keys[8], keys[9], planes)
    w3 = 0.2 * jax.random.normal(keys[10], (planes, C4), jnp.float32)
    s3, b3 = bn(keys[11], keys[12], keys[13], keys[14], C4)
    weca = 0.5 * jax.random.normal(keys[15], (k_size,), jnp.float32)
    return (w1, s1, b1, w2, s2, b2, w3, s3, b3, weca)


def reference_forward(x_nchw, params):
    """Pure-JAX reference with the same quantization points as the kernel
    (BN-folded bf16 weights / bf16 matmul inputs, f32 accumulation), so the
    comparison isolates the Pallas implementation from bf16 rounding."""
    w1, s1, b1, w2, s2, b2, w3, s3, b3, weca = params
    bf = jnp.bfloat16
    f32 = jnp.float32
    w1f = (w1 * s1).astype(bf)
    w2f = (w2 * s2[0][None, None, None, :]).astype(bf)
    w3f = (w3 * s3).astype(bf)

    x = jnp.transpose(x_nchw, (0, 2, 3, 1))                       # NHWC
    h1 = jnp.einsum("nhwc,cp->nhwp", x.astype(bf), w1f,
                    preferred_element_type=f32)
    h1 = jnp.maximum(h1 + b1[0], 0.0)
    h2 = jax.lax.conv_general_dilated(
        h1.astype(bf), w2f, window_strides=(1, 1), padding=((1, 1), (1, 1)),
        dimension_numbers=("NHWC", "HWIO", "NHWC"),
        preferred_element_type=f32)
    h2 = jnp.maximum(h2 + b2[0], 0.0)
    h3 = jnp.einsum("nhwp,pc->nhwc", h2.astype(bf), w3f,
                    preferred_element_type=f32)
    h3 = h3 + b3[0]
    y = jnp.mean(h3, axis=(1, 2))                                 # (N, C4)
    yp = jnp.pad(y, ((0, 0), (1, 1)))
    yc = weca[0] * yp[:, :-2] + weca[1] * yp[:, 1:-1] + weca[2] * yp[:, 2:]
    gate = jax.nn.sigmoid(yc)[:, None, None, :]
    out = jnp.maximum(h3 * gate + x, 0.0)
    return jnp.transpose(out, (0, 3, 1, 2))


if __name__ == "__main__":
    key = jax.random.PRNGKey(0)
    k_x, k_p = jax.random.split(key)

    N, inplanes, planes, H, W = 2, 16, 4, 16, 16                  # inplanes == planes*4
    x = jax.random.normal(k_x, (N, inplanes, H, W), jnp.float32)
    params = init_params(k_p, inplanes, planes, k_size=3)

    out = jax.block_until_ready(eca_bottleneck_forward(x, params))
    ref = jax.block_until_ready(reference_forward(x, params))

    assert out.shape == (N, planes * 4, H, W), out.shape
    err = float(jnp.max(jnp.abs(out - ref)))
    assert jnp.allclose(out, ref, atol=2e-2, rtol=2e-2), f"max abs err = {err}"
    print("KERNEL_OK")
</pallas_src>

<mosaic_0001>
module attributes {stable_mosaic.version = 11 : i64} {
  func.func @_bottleneck_kernel(%arg0: i32, %arg1: memref<1x256x128xf32, #tpu.memory_space<vmem>>, %arg2: memref<128x128xbf16, #tpu.memory_space<vmem>>, %arg3: memref<1x128xf32, #tpu.memory_space<vmem>>, %arg4: memref<3x384x128xbf16, #tpu.memory_space<vmem>>, %arg5: memref<1x128xf32, #tpu.memory_space<vmem>>, %arg6: memref<128x128xbf16, #tpu.memory_space<vmem>>, %arg7: memref<1x128xf32, #tpu.memory_space<vmem>>, %arg8: memref<3xf32, #tpu.memory_space<smem>>, %arg9: memref<1x256x128xf32, #tpu.memory_space<vmem>>, %arg10: memref<288x384xbf16, #tpu.memory_space<vmem>>) attributes {dimension_semantics = [#tpu.dimension_semantics<parallel>], iteration_bounds = array<i64: 2>, scalar_prefetch = 0 : i64, scratch_operands = 1 : i64, tpu.core_type = #tpu.core_type<tc>, window_params = [{transform_indices = @transform_0, window_bounds = array<i64: 1, 256, 128>}, {pipeline_mode = #tpu.pipeline_mode<synchronous>, transform_indices = @transform_1, window_bounds = array<i64: 128, 128>}, {pipeline_mode = #tpu.pipeline_mode<synchronous>, transform_indices = @transform_2, window_bounds = array<i64: 1, 128>}, {pipeline_mode = #tpu.pipeline_mode<synchronous>, transform_indices = @transform_3, window_bounds = array<i64: 3, 384, 128>}, {pipeline_mode = #tpu.pipeline_mode<synchronous>, transform_indices = @transform_4, window_bounds = array<i64: 1, 128>}, {pipeline_mode = #tpu.pipeline_mode<synchronous>, transform_indices = @transform_5, window_bounds = array<i64: 128, 128>}, {pipeline_mode = #tpu.pipeline_mode<synchronous>, transform_indices = @transform_6, window_bounds = array<i64: 1, 128>}, {transform_indices = @transform_7, window_bounds = array<i64: 3>}, {transform_indices = @transform_8, window_bounds = array<i64: 1, 256, 128>}]} {
    %c0 = arith.constant 0 : index
    %c0_0 = arith.constant 0 : index
    %c0_1 = arith.constant 0 : index
    %0 = vector.load %arg1[%c0, %c0_0, %c0_1] : memref<1x256x128xf32, #tpu.memory_space<vmem>>, vector<1x256x128xf32>
    %1 = vector.shape_cast %0 : vector<1x256x128xf32> to vector<256x128xf32>
    %2 = arith.truncf %1 : vector<256x128xf32> to vector<256x128xbf16>
    %c0_2 = arith.constant 0 : index
    %c0_3 = arith.constant 0 : index
    %3 = vector.load %arg2[%c0_2, %c0_3] : memref<128x128xbf16, #tpu.memory_space<vmem>>, vector<128x128xbf16>
    %cst = arith.constant dense<0.000000e+00> : vector<256x128xf32>
    %4 = tpu.matmul %2, %3, %cst {dimension_numbers = #tpu.dot_dimension_numbers<[1], [0], [0], [1], [0, 0, 1, 1], [], []>} : vector<256x128xbf16>, vector<128x128xbf16>, vector<256x128xf32> -> vector<256x128xf32>
    %c0_4 = arith.constant 0 : index
    %c0_5 = arith.constant 0 : index
    %5 = vector.load %arg3[%c0_4, %c0_5] : memref<1x128xf32, #tpu.memory_space<vmem>>, vector<1x128xf32>
    %6 = vector.broadcast %5 : vector<1x128xf32> to vector<256x128xf32>
    %7 = arith.addf %4, %6 : vector<256x128xf32>
    %cst_6 = arith.constant 0.000000e+00 : f32
    %8 = vector.broadcast %cst_6 : f32 to vector<256x128xf32>
    %9 = arith.maximumf %7, %8 : vector<256x128xf32>
    %cst_7 = arith.constant 0.000000e+00 : bf16
    %10 = vector.broadcast %cst_7 : bf16 to vector<16x384xbf16>
    %c0_8 = arith.constant 0 : index
    %c0_9 = arith.constant 0 : index
    %11 = vector.load %arg10[%c0_8, %c0_9] : memref<288x384xbf16, #tpu.memory_space<vmem>>, vector<16x384xbf16>
    tpu.vector_store %arg10[%c0_8, %c0_9], %10 {strides = array<i32>} : memref<288x384xbf16, #tpu.memory_space<vmem>>, vector<16x384xbf16>,
    %c272 = arith.constant 272 : index
    %c0_10 = arith.constant 0 : index
    %12 = vector.load %arg10[%c272, %c0_10] : memref<288x384xbf16, #tpu.memory_space<vmem>>, vector<16x384xbf16>
    tpu.vector_store %arg10[%c272, %c0_10], %10 {strides = array<i32>} : memref<288x384xbf16, #tpu.memory_space<vmem>>, vector<16x384xbf16>,
    %13 = tpu.iota {dimensions = array<i32: 0>} : vector<256x1xi32>
    %c16_i32 = arith.constant 16 : i32
    %c0_i32 = arith.constant 0 : i32
    %14 = arith.cmpi eq, %c16_i32, %c0_i32 : i32
    %c1_i32 = arith.constant 1 : i32
    %15 = arith.select %14, %c1_i32, %c16_i32 : i32
    %16 = vector.broadcast %15 : i32 to vector<256x1xi32>
    %17 = arith.remsi %13, %16 : vector<256x1xi32>
    %c0_i32_11 = arith.constant 0 : i32
    %18 = vector.broadcast %c0_i32_11 : i32 to vector<256x1xi32>
    %19 = arith.cmpi ne, %17, %18 : vector<256x1xi32>
    %c0_i32_12 = arith.constant 0 : i32
    %20 = vector.broadcast %c0_i32_12 : i32 to vector<256x1xi32>
    %21 = arith.cmpi slt, %17, %20 : vector<256x1xi32>
    %c0_i32_13 = arith.constant 0 : i32
    %22 = arith.cmpi slt, %15, %c0_i32_13 : i32
    %23 = vector.broadcast %22 : i1 to vector<256x1xi1>
    %24 = vector.broadcast %23 : vector<256x1xi1> to vector<256x1xi1>
    %25 = arith.xori %21, %24 : vector<256x1xi1>
    %26 = arith.andi %25, %19 : vector<256x1xi1>
    %27 = vector.broadcast %15 : i32 to vector<256x1xi32>
    %28 = arith.addi %17, %27 : vector<256x1xi32>
    %29 = arith.select %26, %28, %17 : vector<256x1xi1>, vector<256x1xi32>
    %c0_i32_14 = arith.constant 0 : i32
    %30 = vector.broadcast %c0_i32_14 : i32 to vector<256x1xi32>
    %31 = arith.cmpi eq, %29, %30 : vector<256x1xi32>
    %c1_i32_15 = arith.constant 1 : i32
    %32 = tpu.dynamic_rotate %9 by %c1_i32_15 dim 0 : vector<256x128xf32>, i32 -> vector<256x128xf32>
    %cst_16 = arith.constant 0.000000e+00 : f32
    %33 = vector.shape_cast %31 : vector<256x1xi1> to vector<256x1xi1>
    %34 = vector.broadcast %33 : vector<256x1xi1> to vector<256x128xi1>
    %35 = vector.broadcast %cst_16 : f32 to vector<256x128xf32>
    %36 = arith.select %34, %35, %32 : vector<256x128xi1>, vector<256x128xf32>
    %c15_i32 = arith.constant 15 : i32
    %37 = vector.broadcast %c15_i32 : i32 to vector<256x1xi32>
    %38 = arith.cmpi eq, %29, %37 : vector<256x1xi32>
    %c255_i32 = arith.constant 255 : i32
    %39 = tpu.dynamic_rotate %9 by %c255_i32 dim 0 : vector<256x128xf32>, i32 -> vector<256x128xf32>
    %cst_17 = arith.constant 0.000000e+00 : f32
    %40 = vector.shape_cast %38 : vector<256x1xi1> to vector<256x1xi1>
    %41 = vector.broadcast %40 : vector<256x1xi1> to vector<256x128xi1>
    %42 = vector.broadcast %cst_17 : f32 to vector<256x128xf32>
    %43 = arith.select %41, %42, %39 : vector<256x128xi1>, vector<256x128xf32>
    %44 = arith.truncf %36 : vector<256x128xf32> to vector<256x128xbf16>
    %c16 = arith.constant 16 : index
    %c0_18 = arith.constant 0 : index
    %45 = vector.load %arg10[%c16, %c0_18] : memref<288x384xbf16, #tpu.memory_space<vmem>>, vector<256x128xbf16>
    tpu.vector_store %arg10[%c16, %c0_18], %44 {strides = array<i32>} : memref<288x384xbf16, #tpu.memory_space<vmem>>, vector<256x128xbf16>,
    %46 = arith.truncf %9 : vector<256x128xf32> to vector<256x128xbf16>
    %c16_19 = arith.constant 16 : index
    %c128 = arith.constant 128 : index
    %47 = vector.load %arg10[%c16_19, %c128] : memref<288x384xbf16, #tpu.memory_space<vmem>>, vector<256x128xbf16>
    tpu.vector_store %arg10[%c16_19, %c128], %46 {strides = array<i32>} : memref<288x384xbf16, #tpu.memory_space<vmem>>, vector<256x128xbf16>,
    %48 = arith.truncf %43 : vector<256x128xf32> to vector<256x128xbf16>
    %c16_20 = arith.constant 16 : index
    %c256 = arith.constant 256 : index
    %49 = vector.load %arg10[%c16_20, %c256] : memref<288x384xbf16, #tpu.memory_space<vmem>>, vector<256x128xbf16>
    tpu.vector_store %arg10[%c16_20, %c256], %48 {strides = array<i32>} : memref<288x384xbf16, #tpu.memory_space<vmem>>, vector<256x128xbf16>,
    %cst_21 = arith.constant 0.000000e+00 : f32
    %50 = vector.broadcast %cst_21 : f32 to vector<256x128xf32>
    %c0_22 = arith.constant 0 : index
    %c0_23 = arith.constant 0 : index
    %51 = vector.load %arg10[%c0_22, %c0_23] : memref<288x384xbf16, #tpu.memory_space<vmem>>, vector<256x384xbf16>
    %c0_24 = arith.constant 0 : index
    %c0_25 = arith.constant 0 : index
    %c0_26 = arith.constant 0 : index
    %52 = vector.load %arg4[%c0_24, %c0_25, %c0_26] : memref<3x384x128xbf16, #tpu.memory_space<vmem>>, vector<1x384x128xbf16>
    %53 = vector.shape_cast %52 : vector<1x384x128xbf16> to vector<384x128xbf16>
    %cst_27 = arith.constant dense<0.000000e+00> : vector<256x128xf32>
    %54 = tpu.matmul %51, %53, %cst_27 {dimension_numbers = #tpu.dot_dimension_numbers<[1], [0], [0], [1], [0, 0, 1, 1], [], []>} : vector<256x384xbf16>, vector<384x128xbf16>, vector<256x128xf32> -> vector<256x128xf32>
    %55 = arith.addf %50, %54 : vector<256x128xf32>
    %c16_28 = arith.constant 16 : index
    %c0_29 = arith.constant 0 : index
    %56 = vector.load %arg10[%c16_28, %c0_29] : memref<288x384xbf16, #tpu.memory_space<vmem>>, vector<256x384xbf16>
    %c1 = arith.constant 1 : index
    %c0_30 = arith.constant 0 : index
    %c0_31 = arith.constant 0 : index
    %57 = vector.load %arg4[%c1, %c0_30, %c0_31] : memref<3x384x128xbf16, #tpu.memory_space<vmem>>, vector<1x384x128xbf16>
    %58 = vector.shape_cast %57 : vector<1x384x128xbf16> to vector<384x128xbf16>
    %cst_32 = arith.constant dense<0.000000e+00> : vector<256x128xf32>
    %59 = tpu.matmul %56, %58, %cst_32 {dimension_numbers = #tpu.dot_dimension_numbers<[1], [0], [0], [1], [0, 0, 1, 1], [], []>} : vector<256x384xbf16>, vector<384x128xbf16>, vector<256x128xf32> -> vector<256x128xf32>
    %60 = arith.addf %55, %59 : vector<256x128xf32>
    %c32 = arith.constant 32 : index
    %c0_33 = arith.constant 0 : index
    %61 = vector.load %arg10[%c32, %c0_33] : memref<288x384xbf16, #tpu.memory_space<vmem>>, vector<256x384xbf16>
    %c2 = arith.constant 2 : index
    %c0_34 = arith.constant 0 : index
    %c0_35 = arith.constant 0 : index
    %62 = vector.load %arg4[%c2, %c0_34, %c0_35] : memref<3x384x128xbf16, #tpu.memory_space<vmem>>, vector<1x384x128xbf16>
    %63 = vector.shape_cast %62 : vector<1x384x128xbf16> to vector<384x128xbf16>
    %cst_36 = arith.constant dense<0.000000e+00> : vector<256x128xf32>
    %64 = tpu.matmul %61, %63, %cst_36 {dimension_numbers = #tpu.dot_dimension_numbers<[1], [0], [0], [1], [0, 0, 1, 1], [], []>} : vector<256x384xbf16>, vector<384x128xbf16>, vector<256x128xf32> -> vector<256x128xf32>
    %65 = arith.addf %60, %64 : vector<256x128xf32>
    %c0_37 = arith.constant 0 : index
    %c0_38 = arith.constant 0 : index
    %66 = vector.load %arg5[%c0_37, %c0_38] : memref<1x128xf32, #tpu.memory_space<vmem>>, vector<1x128xf32>
    %67 = vector.broadcast %66 : vector<1x128xf32> to vector<256x128xf32>
    %68 = arith.addf %65, %67 : vector<256x128xf32>
    %cst_39 = arith.constant 0.000000e+00 : f32
    %69 = vector.broadcast %cst_39 : f32 to vector<256x128xf32>
    %70 = arith.maximumf %68, %69 : vector<256x128xf32>
    %71 = arith.truncf %70 : vector<256x128xf32> to vector<256x128xbf16>
    %c0_40 = arith.constant 0 : index
    %c0_41 = arith.constant 0 : index
    %72 = vector.load %arg6[%c0_40, %c0_41] : memref<128x128xbf16, #tpu.memory_space<vmem>>, vector<128x128xbf16>
    %cst_42 = arith.constant dense<0.000000e+00> : vector<256x128xf32>
    %73 = tpu.matmul %71, %72, %cst_42 {dimension_numbers = #tpu.dot_dimension_numbers<[1], [0], [0], [1], [0, 0, 1, 1], [], []>} : vector<256x128xbf16>, vector<128x128xbf16>, vector<256x128xf32> -> vector<256x128xf32>
    %c0_43 = arith.constant 0 : index
    %c0_44 = arith.constant 0 : index
    %74 = vector.load %arg7[%c0_43, %c0_44] : memref<1x128xf32, #tpu.memory_space<vmem>>, vector<1x128xf32>
    %75 = vector.broadcast %74 : vector<1x128xf32> to vector<256x128xf32>
    %76 = arith.addf %73, %75 : vector<256x128xf32>
    %cst_45 = arith.constant dense<0.000000e+00> : vector<128xf32>
    %77 = vector.multi_reduction <add>, %76, %cst_45 [0] : vector<256x128xf32> to vector<128xf32>
    %78 = vector.shape_cast %77 : vector<128xf32> to vector<1x128xf32>
    %cst_46 = arith.constant 2.560000e+02 : f32
    %79 = vector.broadcast %cst_46 : f32 to vector<1x128xf32>
    %80 = arith.divf %78, %79 : vector<1x128xf32>
    %81 = tpu.iota {dimensions = array<i32: 1>} : vector<1x128xi32>
    %c0_i32_47 = arith.constant 0 : i32
    %82 = vector.broadcast %c0_i32_47 : i32 to vector<1x128xi32>
    %83 = arith.cmpi eq, %81, %82 : vector<1x128xi32>
    %c1_i32_48 = arith.constant 1 : i32
    %84 = tpu.dynamic_rotate %80 by %c1_i32_48 dim 1 : vector<1x128xf32>, i32 -> vector<1x128xf32>
    %cst_49 = arith.constant 0.000000e+00 : f32
    %85 = vector.broadcast %cst_49 : f32 to vector<1x128xf32>
    %86 = arith.select %83, %85, %84 : vector<1x128xi1>, vector<1x128xf32>
    %c127_i32 = arith.constant 127 : i32
    %87 = vector.broadcast %c127_i32 : i32 to vector<1x128xi32>
    %88 = arith.cmpi eq, %81, %87 : vector<1x128xi32>
    %c127_i32_50 = arith.constant 127 : i32
    %89 = tpu.dynamic_rotate %80 by %c127_i32_50 dim 1 : vector<1x128xf32>, i32 -> vector<1x128xf32>
    %cst_51 = arith.constant 0.000000e+00 : f32
    %90 = vector.broadcast %cst_51 : f32 to vector<1x128xf32>
    %91 = arith.select %88, %90, %89 : vector<1x128xi1>, vector<1x128xf32>
    %c0_52 = arith.constant 0 : index
    %92 = memref.load %arg8[%c0_52] : memref<3xf32, #tpu.memory_space<smem>>
    %93 = vector.broadcast %92 : f32 to vector<1x128xf32>
    %94 = arith.mulf %93, %86 : vector<1x128xf32>
    %c1_53 = arith.constant 1 : index
    %95 = memref.load %arg8[%c1_53] : memref<3xf32, #tpu.memory_space<smem>>
    %96 = vector.broadcast %95 : f32 to vector<1x128xf32>
    %97 = arith.mulf %96, %80 : vector<1x128xf32>
    %98 = arith.addf %94, %97 : vector<1x128xf32>
    %c2_54 = arith.constant 2 : index
    %99 = memref.load %arg8[%c2_54] : memref<3xf32, #tpu.memory_space<smem>>
    %100 = vector.broadcast %99 : f32 to vector<1x128xf32>
    %101 = arith.mulf %100, %91 : vector<1x128xf32>
    %102 = arith.addf %98, %101 : vector<1x128xf32>
    %103 = arith.negf %102 : vector<1x128xf32>
    %104 = math.exp %103 : vector<1x128xf32>
    %cst_55 = arith.constant 1.000000e+00 : f32
    %105 = vector.broadcast %cst_55 : f32 to vector<1x128xf32>
    %106 = arith.addf %105, %104 : vector<1x128xf32>
    %107 = arith.divf %105, %106 : vector<1x128xf32>
    %108 = vector.broadcast %107 : vector<1x128xf32> to vector<256x128xf32>
    %109 = arith.mulf %76, %108 : vector<256x128xf32>
    %110 = arith.addf %109, %1 : vector<256x128xf32>
    %cst_56 = arith.constant 0.000000e+00 : f32
    %111 = vector.broadcast %cst_56 : f32 to vector<256x128xf32>
    %112 = arith.maximumf %110, %111 : vector<256x128xf32>
    %c0_57 = arith.constant 0 : index
    %c0_58 = arith.constant 0 : index
    %c0_59 = arith.constant 0 : index
    %113 = vector.load %arg9[%c0_57, %c0_58, %c0_59] : memref<1x256x128xf32, #tpu.memory_space<vmem>>, vector<1x256x128xf32>
    %114 = vector.shape_cast %113 : vector<1x256x128xf32> to vector<256x128xf32>
    %115 = vector.shape_cast %112 : vector<256x128xf32> to vector<1x256x128xf32>
    tpu.vector_store %arg9[%c0_57, %c0_58, %c0_59], %115 {strides = array<i32>} : memref<1x256x128xf32, #tpu.memory_space<vmem>>, vector<1x256x128xf32>,
    return
  }
  func.func @transform_0(%arg0: i32) -> (i32, i32, i32) {
    %c0_i32 = arith.constant 0 : i32
    %c0_i32_0 = arith.constant 0 : i32
    %c0_i32_1 = arith.constant 0 : i32
    return %arg0, %c0_i32, %c0_i32_0 : i32, i32, i32
  }
  func.func @transform_1(%arg0: i32) -> (i32, i32) {
    %c0_i32 = arith.constant 0 : i32
    %c0_i32_0 = arith.constant 0 : i32
    %c0_i32_1 = arith.constant 0 : i32
    return %c0_i32, %c0_i32_0 : i32, i32
  }
  func.func @transform_2(%arg0: i32) -> (i32, i32) {
    %c0_i32 = arith.constant 0 : i32
    %c0_i32_0 = arith.constant 0 : i32
    %c0_i32_1 = arith.constant 0 : i32
    return %c0_i32, %c0_i32_0 : i32, i32
  }
  func.func @transform_3(%arg0: i32) -> (i32, i32, i32) {
    %c0_i32 = arith.constant 0 : i32
    %c0_i32_0 = arith.constant 0 : i32
    %c0_i32_1 = arith.constant 0 : i32
    %c0_i32_2 = arith.constant 0 : i32
    return %c0_i32, %c0_i32_0, %c0_i32_1 : i32, i32, i32
  }
  func.func @transform_4(%arg0: i32) -> (i32, i32) {
    %c0_i32 = arith.constant 0 : i32
    %c0_i32_0 = arith.constant 0 : i32
    %c0_i32_1 = arith.constant 0 : i32
    return %c0_i32, %c0_i32_0 : i32, i32
  }
  func.func @transform_5(%arg0: i32) -> (i32, i32) {
    %c0_i32 = arith.constant 0 : i32
    %c0_i32_0 = arith.constant 0 : i32
    %c0_i32_1 = arith.constant 0 : i32
    return %c0_i32, %c0_i32_0 : i32, i32
  }
  func.func @transform_6(%arg0: i32) -> (i32, i32) {
    %c0_i32 = arith.constant 0 : i32
    %c0_i32_0 = arith.constant 0 : i32
    %c0_i32_1 = arith.constant 0 : i32
    return %c0_i32, %c0_i32_0 : i32, i32
  }
  func.func @transform_7(%arg0: i32) -> i32 {
    %c0_i32 = arith.constant 0 : i32
    %c0_i32_0 = arith.constant 0 : i32
    return %c0_i32 : i32
  }
  func.func @transform_8(%arg0: i32) -> (i32, i32, i32) {
    %c0_i32 = arith.constant 0 : i32
    %c0_i32_0 = arith.constant 0 : i32
    %c0_i32_1 = arith.constant 0 : i32
    return %arg0, %c0_i32, %c0_i32_0 : i32, i32, i32
  }
}

</mosaic_0001>

<llo_original>
// kernel: tpu_custom_call.1
$region0: #{tpu_custom_call.1}
  #allocation0 [shape = 'u32[]', space=smem, size = 0x4, offset = 0x4, fixed_abs, tag = 'smem constant byte address 0x4 - core index']
  #allocation1 [shape = 'u32[144,128]{1,0:T(1,128)}', space=vmem, size = 0x12000, scoped, tag = 'internal scratch']
  #allocation2 [shape = 'bf16[288,384]{1,0:T(8,128)(2,1)}', space=vmem, size = 0x36000, scoped, tag = 'scratch operand']
  %s0 = inlined_call_operand.hbm [shape: f32[2,256,128], index: 0, kind: input, shape index: {}]
  %s1 = inlined_call_operand.hbm [shape: bf16[128,128], index: 1, kind: input, shape index: {}]
  %s2 = inlined_call_operand.vmem [shape: f32[1,128], index: 2, kind: input, shape index: {}]
  %s3 = inlined_call_operand.hbm [shape: bf16[3,384,128], index: 3, kind: input, shape index: {}]
  %s4 = inlined_call_operand.vmem [shape: f32[1,128], index: 4, kind: input, shape index: {}]
  %s5 = inlined_call_operand.hbm [shape: bf16[128,128], index: 5, kind: input, shape index: {}]
  %s6 = inlined_call_operand.vmem [shape: f32[1,128], index: 6, kind: input, shape index: {}]
  %s7 = inlined_call_operand.vmem [shape: f32[3], index: 7, kind: input, shape index: {}]
  %s8 = inlined_call_operand.hbm [shape: f32[2,256,128], index: 8, kind: output, shape index: {}]
  %s9 = sld [smem:[#allocation0]]
  $region85: #{tpu_custom_call.1} parent=0
    _
  %s11 = ssub.s32 1, %s9
  %s12 = scalar_select 0, %s11, %s9
  $region1: #{tpu_custom_call.1} parent=0
    #allocation3 [shape = 'u8[262144]{0}', space=vmem, size = 0x40000, scoped, tag = 'input window, operand 0']
    #allocation4 [shape = 's32[2]{0}', space=sflag, size = 0x8, scoped, tag = 'scoped memory for tpu_custom_call.1']
    #allocation5 [shape = 's32[2]{0}', space=sflag, size = 0x8, scoped, tag = 'scoped memory for tpu_custom_call.1']
    #allocation6 [shape = 's32[2]{0}', space=sflag, size = 0x8, scoped, tag = 'scoped memory for tpu_custom_call.1']
    #allocation7 [shape = 'u8[32768]{0}', space=vmem, size = 0x8000, scoped, tag = 'input window, operand 1, single buffered']
    #allocation8 [shape = 's32[1]{0}', space=sflag, size = 0x4, scoped, tag = 'scoped memory for tpu_custom_call.1']
    #allocation9 [shape = 'u8[294912]{0}', space=vmem, size = 0x48000, scoped, tag = 'input window, operand 3, single buffered']
    #allocation10 [shape = 'u8[32768]{0}', space=vmem, size = 0x8000, scoped, tag = 'input window, operand 5, single buffered']
    #allocation11 [shape = 's32[1]{0}', space=sflag, size = 0x4, scoped, tag = 'scoped memory for tpu_custom_call.1']
    #allocation12 [shape = 'u8[512]{0}', space=smem, size = 0x200, scoped, tag = 'input window, operand 7, single buffered']
    #allocation13 [shape = 'u8[262144]{0}', space=vmem, size = 0x40000, scoped, tag = 'output window, operand 0']
    %13 = vsyncpa [#allocation4], 0
    %s14 = scalar_lea.sflag [#allocation4], 1
    %15 = vsyncpa %s14, 0
    %16 = vsyncpa [#allocation8], 0
    %17 = vsyncpa [#allocation11], 0
    %18 = vsyncpa [#allocation6], 0
    %19 = vsyncpa [#allocation5], 0
    %s20 = scalar_lea.sflag [#allocation5], 1
    %21 = vsyncpa %s20, 0
    loop: start=0, step=1, limit=4
    $region2: #{tpu_custom_call.1} parent=1 // loop_pre_header
      _
    $region3: #{tpu_custom_call.1} parent=1 // loop_header
      %s23 = sphi 0, %s27
      %p24 = scmp.ge.s32.totalorder %s23, 4
      %s33 = sphi 0, %s35
      %s36 = sphi 0, %s33
      %s37 = sphi 0, %s36
      %s53 = sphi 0, %s37
      %s57 = sphi 0, %s57
      %s59 = sphi 0, %s57
      %s60 = sphi 0, %s59
      %s74 = sphi 0, %s60
      %s78 = sphi 0, %s78
      %s80 = sphi 0, %s78
      %s81 = sphi 0, %s80
      %s95 = sphi 0, %s81
      %s99 = sphi 0, %s99
      %s101 = sphi 0, %s99
      %s102 = sphi 0, %s101
      %s116 = sphi 0, %s102
      %s120 = sphi 0, %s120
      %s122 = sphi 0, %s120
      %s123 = sphi 0, %s122
      %s137 = sphi 0, %s123
      %s141 = sphi 0, %s141
      %s143 = sphi 0, %s141
      %s144 = sphi 0, %s143
      %s158 = sphi 0, %s144
      %s162 = sphi 0, %s162
      %s164 = sphi 0, %s162
      %s165 = sphi 0, %s164
      %s179 = sphi 0, %s165
      %s183 = sphi 0, %s183
      %s185 = sphi 0, %s183
      %s186 = sphi 0, %s185
      %s200 = sphi 0, %s186
      %s206 = sphi 0, %s208
      %s209 = sphi 0, %s206
      %s210 = sphi 0, %s209
      %s226 = sphi 0, %s210
    $region4: #{tpu_custom_call.1} parent=1 // loop_header_branch
      %26 = sbr.rel (%p24) target = $region8
    $region5: #{tpu_custom_call.1} parent=1 // loop_body
      %s28 = ssub.s32 %s23, 1
      %s29 = ssub.s32 %s23, 2
      %s30 = sadd.s32 %s23, 1
      %s31 = ssub.s32 %s23, %s30
      %p32 = scmp.eq.s32.totalorder %s31, 0
      %s34 = sadd.s32 %s33, 1
      %s35 = scalar_select %p32, %s33, %s34
      %p38 = pneg %p32
      %p39 = scmp.eq.s32.totalorder %s23, 1
      %p40 = por %p38, %p39
      %p41 = scmp.ne.s32.totalorder %s33, %s36
      %p42 = scmp.eq.s32.totalorder %s23, 0
      %p43 = por %p41, %p42
      %p44 = scmp.ne.s32.totalorder %s33, %s36
      %p45 = scmp.eq.s32.totalorder %s28, 1
      %p46 = por %p44, %p45
      %p47 = scmp.ne.s32.totalorder %s36, %s37
      %p48 = scmp.eq.s32.totalorder %s28, 0
      %p49 = por %p47, %p48
      %p50 = scmp.ne.s32.totalorder %s36, %s37
      %p51 = scmp.eq.s32.totalorder %s29, 1
      %p52 = por %p50, %p51
      %p54 = scmp.ne.s32.totalorder %s37, %s53
      %p55 = scmp.eq.s32.totalorder %s29, 0
      %p56 = por %p54, %p55
      %s58 = sadd.s32 %s57, 1
      %p61 = scmp.eq.s32.totalorder %s23, 1
      %p62 = scmp.ne.s32.totalorder %s57, %s59
      %p63 = scmp.eq.s32.totalorder %s23, 0
      %p64 = por %p62, %p63
      %p65 = scmp.ne.s32.totalorder %s57, %s59
      %p66 = scmp.eq.s32.totalorder %s28, 1
      %p67 = por %p65, %p66
      %p68 = scmp.ne.s32.totalorder %s59, %s60
      %p69 = scmp.eq.s32.totalorder %s28, 0
      %p70 = por %p68, %p69
      %p71 = scmp.ne.s32.totalorder %s59, %s60
      %p72 = scmp.eq.s32.totalorder %s29, 1
      %p73 = por %p71, %p72
      %p75 = scmp.ne.s32.totalorder %s60, %s74
      %p76 = scmp.eq.s32.totalorder %s29, 0
      %p77 = por %p75, %p76
      %s79 = sadd.s32 %s78, 1
      %p82 = scmp.eq.s32.totalorder %s23, 1
      %p83 = scmp.ne.s32.totalorder %s78, %s80
      %p84 = scmp.eq.s32.totalorder %s23, 0
      %p85 = por %p83, %p84
      %p86 = scmp.ne.s32.totalorder %s78, %s80
      %p87 = scmp.eq.s32.totalorder %s28, 1
      %p88 = por %p86, %p87
      %p89 = scmp.ne.s32.totalorder %s80, %s81
      %p90 = scmp.eq.s32.totalorder %s28, 0
      %p91 = por %p89, %p90
      %p92 = scmp.ne.s32.totalorder %s80, %s81
      %p93 = scmp.eq.s32.totalorder %s29, 1
      %p94 = por %p92, %p93
      %p96 = scmp.ne.s32.totalorder %s81, %s95
      %p97 = scmp.eq.s32.totalorder %s29, 0
      %p98 = por %p96, %p97
      %s100 = sadd.s32 %s99, 1
      %p103 = scmp.eq.s32.totalorder %s23, 1
      %p104 = scmp.ne.s32.totalorder %s99, %s101
      %p105 = scmp.eq.s32.totalorder %s23, 0
      %p106 = por %p104, %p105
      %p107 = scmp.ne.s32.totalorder %s99, %s101
      %p108 = scmp.eq.s32.totalorder %s28, 1
      %p109 = por %p107, %p108
      %p110 = scmp.ne.s32.totalorder %s101, %s102
      %p111 = scmp.eq.s32.totalorder %s28, 0
      %p112 = por %p110, %p111
      %p113 = scmp.ne.s32.totalorder %s101, %s102
      %p114 = scmp.eq.s32.totalorder %s29, 1
      %p115 = por %p113, %p114
      %p117 = scmp.ne.s32.totalorder %s102, %s116
      %p118 = scmp.eq.s32.totalorder %s29, 0
      %p119 = por %p117, %p118
      %s121 = sadd.s32 %s120, 1
      %p124 = scmp.eq.s32.totalorder %s23, 1
      %p125 = scmp.ne.s32.totalorder %s120, %s122
      %p126 = scmp.eq.s32.totalorder %s23, 0
      %p127 = por %p125, %p126
      %p128 = scmp.ne.s32.totalorder %s120, %s122
      %p129 = scmp.eq.s32.totalorder %s28, 1
      %p130 = por %p128, %p129
      %p131 = scmp.ne.s32.totalorder %s122, %s123
      %p132 = scmp.eq.s32.totalorder %s28, 0
      %p133 = por %p131, %p132
      %p134 = scmp.ne.s32.totalorder %s122, %s123
      %p135 = scmp.eq.s32.totalorder %s29, 1
      %p136 = por %p134, %p135
      %p138 = scmp.ne.s32.totalorder %s123, %s137
      %p139 = scmp.eq.s32.totalorder %s29, 0
      %p140 = por %p138, %p139
      %s142 = sadd.s32 %s141, 1
      %p145 = scmp.eq.s32.totalorder %s23, 1
      %p146 = scmp.ne.s32.totalorder %s141, %s143
      %p147 = scmp.eq.s32.totalorder %s23, 0
      %p148 = por %p146, %p147
      %p149 = scmp.ne.s32.totalorder %s141, %s143
      %p150 = scmp.eq.s32.totalorder %s28, 1
      %p151 = por %p149, %p150
      %p152 = scmp.ne.s32.totalorder %s143, %s144
      %p153 = scmp.eq.s32.totalorder %s28, 0
      %p154 = por %p152, %p153
      %p155 = scmp.ne.s32.totalorder %s143, %s144
      %p156 = scmp.eq.s32.totalorder %s29, 1
      %p157 = por %p155, %p156
      %p159 = scmp.ne.s32.totalorder %s144, %s158
      %p160 = scmp.eq.s32.totalorder %s29, 0
      %p161 = por %p159, %p160
      %s163 = sadd.s32 %s162, 1
      %p166 = scmp.eq.s32.totalorder %s23, 1
      %p167 = scmp.ne.s32.totalorder %s162, %s164
      %p168 = scmp.eq.s32.totalorder %s23, 0
      %p169 = por %p167, %p168
      %p170 = scmp.ne.s32.totalorder %s162, %s164
      %p171 = scmp.eq.s32.totalorder %s28, 1
      %p172 = por %p170, %p171
      %p173 = scmp.ne.s32.totalorder %s164, %s165
      %p174 = scmp.eq.s32.totalorder %s28, 0
      %p175 = por %p173, %p174
      %p176 = scmp.ne.s32.totalorder %s164, %s165
      %p177 = scmp.eq.s32.totalorder %s29, 1
      %p178 = por %p176, %p177
      %p180 = scmp.ne.s32.totalorder %s165, %s179
      %p181 = scmp.eq.s32.totalorder %s29, 0
      %p182 = por %p180, %p181
      %s184 = sadd.s32 %s183, 1
      %p187 = scmp.eq.s32.totalorder %s23, 1
      %p188 = scmp.ne.s32.totalorder %s183, %s185
      %p189 = scmp.eq.s32.totalorder %s23, 0
      %p190 = por %p188, %p189
      %p191 = scmp.ne.s32.totalorder %s183, %s185
      %p192 = scmp.eq.s32.totalorder %s28, 1
      %p193 = por %p191, %p192
      %p194 = scmp.ne.s32.totalorder %s185, %s186
      %p195 = scmp.eq.s32.totalorder %s28, 0
      %p196 = por %p194, %p195
      %p197 = scmp.ne.s32.totalorder %s185, %s186
      %p198 = scmp.eq.s32.totalorder %s29, 1
      %p199 = por %p197, %p198
      %p201 = scmp.ne.s32.totalorder %s186, %s200
      %p202 = scmp.eq.s32.totalorder %s29, 0
      %p203 = por %p201, %p202
      %s204 = ssub.s32 %s23, %s30
      %p205 = scmp.eq.s32.totalorder %s204, 0
      %s207 = sadd.s32 %s206, 1
      %s208 = scalar_select %p205, %s206, %s207
      %p211 = pneg %p205
      %p212 = scmp.eq.s32.totalorder %s23, 1
      %p213 = por %p211, %p212
      %p214 = scmp.ne.s32.totalorder %s206, %s209
      %p215 = scmp.eq.s32.totalorder %s23, 0
      %p216 = por %p214, %p215
      %p217 = scmp.ne.s32.totalorder %s206, %s209
      %p218 = scmp.eq.s32.totalorder %s28, 1
      %p219 = por %p217, %p218
      %p220 = scmp.ne.s32.totalorder %s209, %s210
      %p221 = scmp.eq.s32.totalorder %s28, 0
      %p222 = por %p220, %p221
      %p223 = scmp.ne.s32.totalorder %s209, %s210
      %p224 = scmp.eq.s32.totalorder %s29, 1
      %p225 = por %p223, %p224
      %p227 = scmp.ne.s32.totalorder %s210, %s226
      %p228 = scmp.eq.s32.totalorder %s29, 0
      %p229 = por %p227, %p228
      %p230 = scmp.le.s32.totalorder 1, %s23
      %p231 = scmp.lt.s32.totalorder %s23, 3
      %p232 = pnand %p230, %p231
      %p233 = pneg %p232
      // Predicated region
      $region9: #{tpu_custom_call.1} parent=5 // pred_check
        _
      $region10: #{tpu_custom_call.1} parent=5 // pred_check_branch
        %235 = sbr.rel (%p232) target = $region12
      $region11: #{tpu_custom_call.1} parent=5 // pred_region
        %s236 = ssub.s32 %s23, 1
        // Predicated region
        $region13: #{tpu_custom_call.1} parent=11 // pred_check
          %p237 = pneg %p70
        $region14: #{tpu_custom_call.1} parent=11 // pred_check_branch
          %239 = sbr.rel (%p237) target = $region16
        $region15: #{tpu_custom_call.1} parent=11 // pred_region
          %s241 = ssub.s32 1024, 1024
          %242 = vsyncadd [#allocation8], %s241
          %s243 = sshll.u32 [#allocation7], 4
          %s244 = int_to_ptr.vmem [resolvable:$true] %s243
          %249 = dma.hbm_to_vmem [thread:$0]  %s1, 1024, %s244, [#allocation8], 64, 64, 4
        $region16: #{tpu_custom_call.1} parent=11 // pred_fallthru
          _
        // Predicated region
        $region17: #{tpu_custom_call.1} parent=11 // pred_check
          %p250 = pneg %p91
        $region18: #{tpu_custom_call.1} parent=11 // pred_check_branch
          %252 = sbr.rel (%p250) target = $region20
        $region19: #{tpu_custom_call.1} parent=11 // pred_region
          _
        $region20: #{tpu_custom_call.1} parent=11 // pred_fallthru
          _
        // Predicated region
        $region21: #{tpu_custom_call.1} parent=11 // pred_check
          %p253 = pneg %p112
        $region22: #{tpu_custom_call.1} parent=11 // pred_check_branch
          %255 = sbr.rel (%p253) target = $region24
        $region23: #{tpu_custom_call.1} parent=11 // pred_region
          %s257 = ssub.s32 9216, 9216
          %258 = vsyncadd [#allocation8], %s257
          %s259 = sshll.u32 [#allocation9], 4
          %s260 = int_to_ptr.vmem [resolvable:$true] %s259
          %265 = dma.hbm_to_vmem [thread:$0]  %s3, 9216, %s260, [#allocation8], 64, 64, 4
        $region24: #{tpu_custom_call.1} parent=11 // pred_fallthru
          _
        // Predicated region
        $region25: #{tpu_custom_call.1} parent=11 // pred_check
          %p266 = pneg %p133
        $region26: #{tpu_custom_call.1} parent=11 // pred_check_branch
          %268 = sbr.rel (%p266) target = $region28
        $region27: #{tpu_custom_call.1} parent=11 // pred_region
          _
        $region28: #{tpu_custom_call.1} parent=11 // pred_fallthru
          _
        // Predicated region
        $region29: #{tpu_custom_call.1} parent=11 // pred_check
          %p269 = pneg %p154
        $region30: #{tpu_custom_call.1} parent=11 // pred_check_branch
          %271 = sbr.rel (%p269) target = $region32
        $region31: #{tpu_custom_call.1} parent=11 // pred_region
          %s273 = ssub.s32 1024, 1024
          %274 = vsyncadd [#allocation11], %s273
          %s275 = sshll.u32 [#allocation10], 4
          %s276 = int_to_ptr.vmem [resolvable:$true] %s275
          %281 = dma.hbm_to_vmem [thread:$0]  %s5, 1024, %s276, [#allocation11], 64, 64, 4
        $region32: #{tpu_custom_call.1} parent=11 // pred_fallthru
          _
        // Predicated region
        $region33: #{tpu_custom_call.1} parent=11 // pred_check
          %p282 = pneg %p175
        $region34: #{tpu_custom_call.1} parent=11 // pred_check_branch
          %284 = sbr.rel (%p282) target = $region36
        $region35: #{tpu_custom_call.1} parent=11 // pred_region
          _
        $region36: #{tpu_custom_call.1} parent=11 // pred_fallthru
          _
        // Predicated region
        $region37: #{tpu_custom_call.1} parent=11 // pred_check
          %p285 = pneg %p196
        $region38: #{tpu_custom_call.1} parent=11 // pred_check_branch
          %287 = sbr.rel (%p285) target = $region40
        $region39: #{tpu_custom_call.1} parent=11 // pred_region
          %s289 = ssub.s32 16, 16
          %290 = vsyncadd [#allocation6], %s289
          %s292 = sshll.u32 %s7, 4
          %s293 = int_to_ptr.vmem [resolvable:$true] %s292
          %295 = dma.vmem_to_smem %s293, 16, [#allocation12], [#allocation6]
        $region40: #{tpu_custom_call.1} parent=11 // pred_fallthru
          _
      $region12: #{tpu_custom_call.1} parent=5 // pred_fallthru
        _
      %p296 = scmp.lt.s32.totalorder %s23, 2
      // Predicated region
      $region41: #{tpu_custom_call.1} parent=5 // pred_check
        %p297 = pneg %p296
      $region42: #{tpu_custom_call.1} parent=5 // pred_check_branch
        %299 = sbr.rel (%p297) target = $region44
      $region43: #{tpu_custom_call.1} parent=5 // pred_region
        // Predicated region
        $region45: #{tpu_custom_call.1} parent=43 // pred_check
          %p300 = pneg %p43
        $region46: #{tpu_custom_call.1} parent=43 // pred_check_branch
          %302 = sbr.rel (%p300) target = $region48
        $region47: #{tpu_custom_call.1} parent=43 // pred_region
          %s303 = sand.u32 %s33, 1
          %s304 = scalar_lea.sflag [#allocation4], %s303
          %s305 = sand.u32 %s33, 1
          %s306 = smul.addr %s305, 256
          %s307 = scalar_lea.vmem [#allocation3], %s306
          %s309 = ssub.s32 4096, 4096
          %310 = vsyncadd %s304, %s309
          %s311 = smul.addr %s23, 32
          %s312 = smul.addr %s311, 128
          %s313 = scalar_lea.hbm %s0, %s312
          %s314 = sshll.u32 %s307, 4
          %s315 = int_to_ptr.vmem [resolvable:$true] %s314
          %320 = dma.hbm_to_vmem [thread:$0]  %s313, 4096, %s315, %s304, 128, 128, 8
        $region48: #{tpu_custom_call.1} parent=43 // pred_fallthru
          _
      $region44: #{tpu_custom_call.1} parent=5 // pred_fallthru
        _
      %p321 = scmp.le.s32.totalorder 1, %s23
      %p322 = scmp.lt.s32.totalorder %s23, 3
      %p323 = pnand %p321, %p322
      %p324 = pneg %p323
      // Predicated region
      $region49: #{tpu_custom_call.1} parent=5 // pred_check
        _
      $region50: #{tpu_custom_call.1} parent=5 // pred_check_branch
        %326 = sbr.rel (%p323) target = $region52
      $region51: #{tpu_custom_call.1} parent=5 // pred_region
        %s327 = ssub.s32 %s23, 1
        %s328 = sand.u32 %s36, 1
        %s329 = scalar_lea.sflag [#allocation4], %s328
        %s330 = sand.u32 %s36, 1
        %s331 = smul.addr %s330, 256
        %s332 = scalar_lea.vmem [#allocation3], %s331
        // Predicated region
        $region53: #{tpu_custom_call.1} parent=51 // pred_check
          %p333 = pneg %p49
        $region54: #{tpu_custom_call.1} parent=51 // pred_check_branch
          %335 = sbr.rel (%p333) target = $region56
        $region55: #{tpu_custom_call.1} parent=51 // pred_region
          %336 = dma.done %s329, 4096
        $region56: #{tpu_custom_call.1} parent=51 // pred_fallthru
          _
        // Predicated region
        $region57: #{tpu_custom_call.1} parent=51 // pred_check
          %p337 = pneg %p70
        $region58: #{tpu_custom_call.1} parent=51 // pred_check_branch
          %339 = sbr.rel (%p337) target = $region60
        $region59: #{tpu_custom_call.1} parent=51 // pred_region
          %340 = dma.done [#allocation8], 1024
        $region60: #{tpu_custom_call.1} parent=51 // pred_fallthru
          _
        // Predicated region
        $region61: #{tpu_custom_call.1} parent=51 // pred_check
          %p341 = pneg %p112
        $region62: #{tpu_custom_call.1} parent=51 // pred_check_branch
          %343 = sbr.rel (%p341) target = $region64
        $region63: #{tpu_custom_call.1} parent=51 // pred_region
          %344 = dma.done [#allocation8], 9216
        $region64: #{tpu_custom_call.1} parent=51 // pred_fallthru
          _
        // Predicated region
        $region65: #{tpu_custom_call.1} parent=51 // pred_check
          %p345 = pneg %p154
        $region66: #{tpu_custom_call.1} parent=51 // pred_check_branch
          %347 = sbr.rel (%p345) target = $region68
        $region67: #{tpu_custom_call.1} parent=51 // pred_region
          %348 = dma.done [#allocation11], 1024
        $region68: #{tpu_custom_call.1} parent=51 // pred_fallthru
          _
        // Predicated region
        $region69: #{tpu_custom_call.1} parent=51 // pred_check
          %p349 = pneg %p196
        $region70: #{tpu_custom_call.1} parent=51 // pred_check_branch
          %351 = sbr.rel (%p349) target = $region72
        $region71: #{tpu_custom_call.1} parent=51 // pred_region
          %352 = dma.done [#allocation6], 16
        $region72: #{tpu_custom_call.1} parent=51 // pred_fallthru
          _
        %353 = sfence
        %s354 = sand.u32 %s36, 1
        %s355 = scalar_lea.sflag [#allocation4], %s354
        %s356 = sand.u32 %s36, 1
        %s357 = smul.addr %s356, 256
        %s358 = scalar_lea.vmem [#allocation3], %s357
        %p359 = pneg %p49
        %p360 = pneg %p46
        %p361 = pneg %p70
        %p362 = pneg %p67
        %p363 = pneg %p91
        %p364 = pneg %p88
        %p365 = pneg %p112
        %p366 = pneg %p109
        %p367 = pneg %p133
        %p368 = pneg %p130
        %p369 = pneg %p154
        %p370 = pneg %p151
        %p371 = pneg %p175
        %p372 = pneg %p172
        %p373 = pneg %p196
        %p374 = pneg %p193
        %p375 = pneg %p222
        %p376 = pneg %p219
        %s377 = sand.u32 %s209, 1
        %s378 = scalar_lea.sflag [#allocation5], %s377
        %s379 = sand.u32 %s209, 1
        %s380 = smul.addr %s379, 256
        %s381 = scalar_lea.vmem [#allocation13], %s380
        %v383 = vld [vmem:[%s332] sm:$0xff]
        %v384 = vld [vmem:[%s332 + $0x8] sm:$0xff]
        %v385 = vld [vmem:[%s332 + $0x10] sm:$0xff]
        %v386 = vld [vmem:[%s332 + $0x18] sm:$0xff]
        %v387 = vld [vmem:[%s332 + $0x20] sm:$0xff]
        %v388 = vld [vmem:[%s332 + $0x28] sm:$0xff]
        %v389 = vld [vmem:[%s332 + $0x30] sm:$0xff]
        %v390 = vld [vmem:[%s332 + $0x38] sm:$0xff]
        %v391 = vld [vmem:[%s332 + $0x40] sm:$0xff]
        %v392 = vld [vmem:[%s332 + $0x48] sm:$0xff]
        %v393 = vld [vmem:[%s332 + $0x50] sm:$0xff]
        %v394 = vld [vmem:[%s332 + $0x58] sm:$0xff]
        %v395 = vld [vmem:[%s332 + $0x60] sm:$0xff]
        %v396 = vld [vmem:[%s332 + $0x68] sm:$0xff]
        %v397 = vld [vmem:[%s332 + $0x70] sm:$0xff]
        %v398 = vld [vmem:[%s332 + $0x78] sm:$0xff]
        %v399 = vld [vmem:[%s332 + $0x80] sm:$0xff]
        %v400 = vld [vmem:[%s332 + $0x88] sm:$0xff]
        %v401 = vld [vmem:[%s332 + $0x90] sm:$0xff]
        %v402 = vld [vmem:[%s332 + $0x98] sm:$0xff]
        %v403 = vld [vmem:[%s332 + $0xa0] sm:$0xff]
        %v404 = vld [vmem:[%s332 + $0xa8] sm:$0xff]
        %v405 = vld [vmem:[%s332 + $0xb0] sm:$0xff]
        %v406 = vld [vmem:[%s332 + $0xb8] sm:$0xff]
        %v407 = vld [vmem:[%s332 + $0xc0] sm:$0xff]
        %v408 = vld [vmem:[%s332 + $0xc8] sm:$0xff]
        %v409 = vld [vmem:[%s332 + $0xd0] sm:$0xff]
        %v410 = vld [vmem:[%s332 + $0xd8] sm:$0xff]
        %v411 = vld [vmem:[%s332 + $0xe0] sm:$0xff]
        %v412 = vld [vmem:[%s332 + $0xe8] sm:$0xff]
        %v413 = vld [vmem:[%s332 + $0xf0] sm:$0xff]
        %v414 = vld [vmem:[%s332 + $0xf8] sm:$0xff]
        %v415 = vpack.c.bf16 %v384, %v383
        %v416 = vpack.c.bf16 %v386, %v385
        %v417 = vpack.c.bf16 %v388, %v387
        %v418 = vpack.c.bf16 %v390, %v389
        %v419 = vpack.c.bf16 %v392, %v391
        %v420 = vpack.c.bf16 %v394, %v393
        %v421 = vpack.c.bf16 %v396, %v395
        %v422 = vpack.c.bf16 %v398, %v397
        %v423 = vpack.c.bf16 %v400, %v399
        %v424 = vpack.c.bf16 %v402, %v401
        %v425 = vpack.c.bf16 %v404, %v403
        %v426 = vpack.c.bf16 %v406, %v405
        %v427 = vpack.c.bf16 %v408, %v407
        %v428 = vpack.c.bf16 %v410, %v409
        %v429 = vpack.c.bf16 %v412, %v411
        %v430 = vpack.c.bf16 %v414, %v413
        %v431 = vld [vmem:[#allocation7] sm:$0xf]
        %v432 = vld [vmem:[#allocation7 + $0x4] sm:$0xf]
        %v433 = vld [vmem:[#allocation7 + $0x8] sm:$0xf]
        %v434 = vld [vmem:[#allocation7 + $0xc] sm:$0xf]
        %v435 = vld [vmem:[#allocation7 + $0x10] sm:$0xf]
        %v436 = vld [vmem:[#allocation7 + $0x14] sm:$0xf]
        %v437 = vld [vmem:[#allocation7 + $0x18] sm:$0xf]
        %v438 = vld [vmem:[#allocation7 + $0x1c] sm:$0xf]
        %v439 = vld [vmem:[#allocation7 + $0x20] sm:$0xf]
        %v440 = vld [vmem:[#allocation7 + $0x24] sm:$0xf]
        %v441 = vld [vmem:[#allocation7 + $0x28] sm:$0xf]
        %v442 = vld [vmem:[#allocation7 + $0x2c] sm:$0xf]
        %v443 = vld [vmem:[#allocation7 + $0x30] sm:$0xf]
        %v444 = vld [vmem:[#allocation7 + $0x34] sm:$0xf]
        %v445 = vld [vmem:[#allocation7 + $0x38] sm:$0xf]
        %v446 = vld [vmem:[#allocation7 + $0x3c] sm:$0xf]
        %v447 = vld [vmem:[%s2] sm:$0x1]
        %v449 = vlaneseq
        %v450 = vshrl.u32 %v449, 7
        %v451 = vsub.s32 0, %v450
        %v452 = vrot.slane %v447, %v451
        %v470 = vunpack.c.l.b16 %v431
        %v471 = vunpack.c.l.b16 %v432
        %v472 = vunpack.c.l.b16 %v433
        %v473 = vunpack.c.l.b16 %v434
        %v474 = vunpack.c.l.b16 %v435
        %v475 = vunpack.c.l.b16 %v436
        %v476 = vunpack.c.l.b16 %v437
        %v477 = vunpack.c.l.b16 %v438
        %v478 = vunpack.c.l.b16 %v439
        %v479 = vunpack.c.l.b16 %v440
        %v480 = vunpack.c.l.b16 %v441
        %v481 = vunpack.c.l.b16 %v442
        %v482 = vunpack.c.l.b16 %v443
        %v483 = vunpack.c.l.b16 %v444
        %v484 = vunpack.c.l.b16 %v445
        %v485 = vunpack.c.l.b16 %v446
        %v486 = vpack.c.b16 %v471, %v470
        %v487 = vpack.c.b16 %v473, %v472
        %v488 = vpack.c.b16 %v475, %v474
        %v489 = vpack.c.b16 %v477, %v476
        %v490 = vpack.c.b16 %v479, %v478
        %v491 = vpack.c.b16 %v481, %v480
        %v492 = vpack.c.b16 %v483, %v482
        %v493 = vpack.c.b16 %v485, %v484
        %502 = vmatprep.subr.bf16.mxu0 0
        %503 = vmatpush1.bf16.msra.mxu0 %v493
        %504 = vmatprep.subr.bf16.mxu0 0
        %505 = vmatpush1.bf16.msra.mxu0 %v492
        %506 = vmatprep.subr.bf16.mxu0 0
        %507 = vmatpush1.bf16.msra.mxu0 %v491
        %508 = vmatprep.subr.bf16.mxu0 0
        %509 = vmatpush1.bf16.msra.mxu0 %v490
        %510 = vmatprep.subr.bf16.mxu0 0
        %511 = vmatpush1.bf16.msra.mxu0 %v489
        %512 = vmatprep.subr.bf16.mxu0 0
        %513 = vmatpush1.bf16.msra.mxu0 %v488
        %514 = vmatprep.subr.bf16.mxu0 0
        %515 = vmatpush1.bf16.msra.mxu0 %v487
        %516 = vmatprep.subr.bf16.mxu0 0
        %517 = vmatpush1.bf16.msra.mxu0 %v486
        %518 = vmatprep.subr.bf16.mxu0 0
        %519 = vmatpush2.bf16.msra.mxu0 0
        %520 = vmatprep.subr.bf16.mxu0 0
        %521 = vmatpush2.bf16.msra.mxu0 0
        %522 = vmatprep.subr.bf16.mxu0 0
        %523 = vmatpush2.bf16.msra.mxu0 0
        %524 = vmatprep.subr.bf16.mxu0 0
        %525 = vmatpush2.bf16.msra.mxu0 0
        %526 = vmatprep.subr.bf16.mxu0 0
        %527 = vmatpush2.bf16.msra.mxu0 0
        %528 = vmatprep.subr.bf16.mxu0 0
        %529 = vmatpush2.bf16.msra.mxu0 0
        %530 = vmatprep.subr.bf16.mxu0 0
        %531 = vmatpush2.bf16.msra.mxu0 0
        %532 = vmatprep.subr.bf16.mxu0 0
        %533 = vmatpush2.bf16.msra.mxu0 0
        %534 = vmatprep.mubr.bf16.mxu0 0
        %535 = vmatmul.mubr.bf16.gmra.mxu0 %v415
        %v536 = vpop.f32.mrf.mxu0
        %v537 = vadd.f32 %v452, %v536
        %v538 = vpop.f32.mrf.mxu0
        %v539 = vpop.f32.mrf.mxu0
        %v540 = vadd.f32 %v452, %v539
        %v541 = vpop.f32.mrf.mxu0
        %542 = vmatprep.mubr.bf16.mxu0 0
        %543 = vmatmul.mubr.bf16.gmra.mxu0 %v416
        %v544 = vpop.f32.mrf.mxu0
        %v545 = vadd.f32 %v452, %v544
        %v546 = vpop.f32.mrf.mxu0
        %v547 = vpop.f32.mrf.mxu0
        %v548 = vadd.f32 %v452, %v547
        %v549 = vpop.f32.mrf.mxu0
        %550 = vmatprep.mubr.bf16.mxu0 0
        %551 = vmatmul.mubr.bf16.gmra.mxu0 %v417
        %v552 = vpop.f32.mrf.mxu0
        %v553 = vadd.f32 %v452, %v552
        %v554 = vpop.f32.mrf.mxu0
        %v555 = vpop.f32.mrf.mxu0
        %v556 = vadd.f32 %v452, %v555
        %v557 = vpop.f32.mrf.mxu0
        %558 = vmatprep.mubr.bf16.mxu0 0
        %559 = vmatmul.mubr.bf16.gmra.mxu0 %v418
        %v560 = vpop.f32.mrf.mxu0
        %v561 = vadd.f32 %v452, %v560
        %v562 = vpop.f32.mrf.mxu0
        %v563 = vpop.f32.mrf.mxu0
        %v564 = vadd.f32 %v452, %v563
        %v565 = vpop.f32.mrf.mxu0
        %566 = vmatprep.mubr.bf16.mxu0 0
        %567 = vmatmul.mubr.bf16.gmra.mxu0 %v419
        %v568 = vpop.f32.mrf.mxu0
        %v569 = vadd.f32 %v452, %v568
        %v570 = vpop.f32.mrf.mxu0
        %v571 = vpop.f32.mrf.mxu0
        %v572 = vadd.f32 %v452, %v571
        %v573 = vpop.f32.mrf.mxu0
        %574 = vmatprep.mubr.bf16.mxu0 0
        %575 = vmatmul.mubr.bf16.gmra.mxu0 %v420
        %v576 = vpop.f32.mrf.mxu0
        %v577 = vadd.f32 %v452, %v576
        %v578 = vpop.f32.mrf.mxu0
        %v579 = vpop.f32.mrf.mxu0
        %v580 = vadd.f32 %v452, %v579
        %v581 = vpop.f32.mrf.mxu0
        %582 = vmatprep.mubr.bf16.mxu0 0
        %583 = vmatmul.mubr.bf16.gmra.mxu0 %v421
        %v584 = vpop.f32.mrf.mxu0
        %v585 = vadd.f32 %v452, %v584
        %v586 = vpop.f32.mrf.mxu0
        %v587 = vpop.f32.mrf.mxu0
        %v588 = vadd.f32 %v452, %v587
        %v589 = vpop.f32.mrf.mxu0
        %590 = vmatprep.mubr.bf16.mxu0 0
        %591 = vmatmul.mubr.bf16.gmra.mxu0 %v422
        %v592 = vpop.f32.mrf.mxu0
        %v593 = vadd.f32 %v452, %v592
        %v594 = vpop.f32.mrf.mxu0
        %v595 = vpop.f32.mrf.mxu0
        %v596 = vadd.f32 %v452, %v595
        %v597 = vpop.f32.mrf.mxu0
        %598 = vmatprep.mubr.bf16.mxu0 0
        %599 = vmatmul.mubr.bf16.gmra.mxu0 %v423
        %v600 = vpop.f32.mrf.mxu0
        %v601 = vadd.f32 %v452, %v600
        %v602 = vpop.f32.mrf.mxu0
        %v603 = vpop.f32.mrf.mxu0
        %v604 = vadd.f32 %v452, %v603
        %v605 = vpop.f32.mrf.mxu0
        %606 = vmatprep.mubr.bf16.mxu0 0
        %607 = vmatmul.mubr.bf16.gmra.mxu0 %v424
        %v608 = vpop.f32.mrf.mxu0
        %v609 = vadd.f32 %v452, %v608
        %v610 = vpop.f32.mrf.mxu0
        %v611 = vpop.f32.mrf.mxu0
        %v612 = vadd.f32 %v452, %v611
        %v613 = vpop.f32.mrf.mxu0
        %614 = vmatprep.mubr.bf16.mxu0 0
        %615 = vmatmul.mubr.bf16.gmra.mxu0 %v425
        %v616 = vpop.f32.mrf.mxu0
        %v617 = vadd.f32 %v452, %v616
        %v618 = vpop.f32.mrf.mxu0
        %v619 = vpop.f32.mrf.mxu0
        %v620 = vadd.f32 %v452, %v619
        %v621 = vpop.f32.mrf.mxu0
        %622 = vmatprep.mubr.bf16.mxu0 0
        %623 = vmatmul.mubr.bf16.gmra.mxu0 %v426
        %v624 = vpop.f32.mrf.mxu0
        %v625 = vadd.f32 %v452, %v624
        %v626 = vpop.f32.mrf.mxu0
        %v627 = vpop.f32.mrf.mxu0
        %v628 = vadd.f32 %v452, %v627
        %v629 = vpop.f32.mrf.mxu0
        %630 = vmatprep.mubr.bf16.mxu0 0
        %631 = vmatmul.mubr.bf16.gmra.mxu0 %v427
        %v632 = vpop.f32.mrf.mxu0
        %v633 = vadd.f32 %v452, %v632
        %v634 = vpop.f32.mrf.mxu0
        %v635 = vpop.f32.mrf.mxu0
        %v636 = vadd.f32 %v452, %v635
        %v637 = vpop.f32.mrf.mxu0
        %638 = vmatprep.mubr.bf16.mxu0 0
        %639 = vmatmul.mubr.bf16.gmra.mxu0 %v428
        %v640 = vpop.f32.mrf.mxu0
        %v641 = vadd.f32 %v452, %v640
        %v642 = vpop.f32.mrf.mxu0
        %v643 = vpop.f32.mrf.mxu0
        %v644 = vadd.f32 %v452, %v643
        %v645 = vpop.f32.mrf.mxu0
        %646 = vmatprep.mubr.bf16.mxu0 0
        %647 = vmatmul.mubr.bf16.gmra.mxu0 %v429
        %v648 = vpop.f32.mrf.mxu0
        %v649 = vadd.f32 %v452, %v648
        %v650 = vpop.f32.mrf.mxu0
        %v651 = vpop.f32.mrf.mxu0
        %v652 = vadd.f32 %v452, %v651
        %v653 = vpop.f32.mrf.mxu0
        %654 = vmatprep.mubr.bf16.mxu0 0
        %655 = vmatmul.mubr.bf16.gmra.mxu0 %v430
        %v656 = vpop.f32.mrf.mxu0
        %v657 = vadd.f32 %v452, %v656
        %v658 = vpop.f32.mrf.mxu0
        %v659 = vpop.f32.mrf.mxu0
        %v660 = vadd.f32 %v452, %v659
        %v661 = vpop.f32.mrf.mxu0
        %662 = vdwg.mxu0
        %v663 = vmax.f32 %v537, 0.0
        %v664 = vmax.f32 %v540, 0.0
        %v665 = vmax.f32 %v545, 0.0
        %v666 = vmax.f32 %v548, 0.0
        %v667 = vmax.f32 %v553, 0.0
        %v668 = vmax.f32 %v556, 0.0
        %v669 = vmax.f32 %v561, 0.0
        %v670 = vmax.f32 %v564, 0.0
        %v671 = vmax.f32 %v569, 0.0
        %v672 = vmax.f32 %v572, 0.0
        %v673 = vmax.f32 %v577, 0.0
        %v674 = vmax.f32 %v580, 0.0
        %v675 = vmax.f32 %v585, 0.0
        %v676 = vmax.f32 %v588, 0.0
        %v677 = vmax.f32 %v593, 0.0
        %v678 = vmax.f32 %v596, 0.0
        %v679 = vmax.f32 %v601, 0.0
        %v680 = vmax.f32 %v604, 0.0
        %v681 = vmax.f32 %v609, 0.0
        %v682 = vmax.f32 %v612, 0.0
        %v683 = vmax.f32 %v617, 0.0
        %v684 = vmax.f32 %v620, 0.0
        %v685 = vmax.f32 %v625, 0.0
        %v686 = vmax.f32 %v628, 0.0
        %v687 = vmax.f32 %v633, 0.0
        %v688 = vmax.f32 %v636, 0.0
        %v689 = vmax.f32 %v641, 0.0
        %v690 = vmax.f32 %v644, 0.0
        %v691 = vmax.f32 %v649, 0.0
        %v692 = vmax.f32 %v652, 0.0
        %v693 = vmax.f32 %v657, 0.0
        %v694 = vmax.f32 %v660, 0.0
        %695 = vst [vmem:[#allocation2] sm:$0xff] 0
        %696 = vst [vmem:[#allocation2 + $0x8] sm:$0xf] 0
        %697 = vst [vmem:[#allocation2 + $0xc] sm:$0xff] 0
        %698 = vst [vmem:[#allocation2 + $0x14] sm:$0xf] 0
        %699 = vst [vmem:[#allocation2 + $0x198] sm:$0xff] 0
        %700 = vst [vmem:[#allocation2 + $0x1a0] sm:$0xf] 0
        %701 = vst [vmem:[#allocation2 + $0x1a4] sm:$0xff] 0
        %702 = vst [vmem:[#allocation2 + $0x1ac] sm:$0xf] 0
        %v703 = vlaneseq
        %v704 = vshrl.u32 %v703, 7
        %v705 = vadd.s32 %v704, 8
        %v706 = vadd.s32 %v704, 16
        %v707 = vadd.s32 %v704, 24
        %v708 = vadd.s32 %v704, 32
        %v709 = vadd.s32 %v704, 40
        %v710 = vadd.s32 %v704, 48
        %v711 = vadd.s32 %v704, 56
        %v712 = vadd.s32 %v704, 64
        %v713 = vadd.s32 %v704, 72
        %v714 = vadd.s32 %v704, 80
        %v715 = vadd.s32 %v704, 88
        %v716 = vadd.s32 %v704, 96
        %v717 = vadd.s32 %v704, 104
        %v718 = vadd.s32 %v704, 112
        %v719 = vadd.s32 %v704, 120
        %v720 = vadd.s32 %v704, 128
        %v721 = vadd.s32 %v704, 136
        %v722 = vadd.s32 %v704, 144
        %v723 = vadd.s32 %v704, 152
        %v724 = vadd.s32 %v704, 160
        %v725 = vadd.s32 %v704, 168
        %v726 = vadd.s32 %v704, 176
        %v727 = vadd.s32 %v704, 184
        %v728 = vadd.s32 %v704, 192
        %v729 = vadd.s32 %v704, 200
        %v730 = vadd.s32 %v704, 208
        %v731 = vadd.s32 %v704, 216
        %v732 = vadd.s32 %v704, 224
        %v733 = vadd.s32 %v704, 232
        %v734 = vadd.s32 %v704, 240
        %v735 = vadd.s32 %v704, 248
        %vm736 = vcmp.lt.s32.totalorder %v704, 0
        %v737 = vsub.s32 0, %v704
        %v738 = vsel %vm736, %v737, %v704
        %v739 = vshrl.u32 %v738, 4
        %v740 = vand.u32 %v738, 15
        %v741 = vsub.s32 0, %v740
        %v742 = vsel %vm736, %v741, %v740
        %vm743 = vcmp.lt.s32.totalorder %v705, 0
        %v744 = vsub.s32 0, %v705
        %v745 = vsel %vm743, %v744, %v705
        %v746 = vshrl.u32 %v745, 4
        %v747 = vand.u32 %v745, 15
        %v748 = vsub.s32 0, %v747
        %v749 = vsel %vm743, %v748, %v747
        %vm750 = vcmp.lt.s32.totalorder %v706, 0
        %v751 = vsub.s32 0, %v706
        %v752 = vsel %vm750, %v751, %v706
        %v753 = vshrl.u32 %v752, 4
        %v754 = vand.u32 %v752, 15
        %v755 = vsub.s32 0, %v754
        %v756 = vsel %vm750, %v755, %v754
        %vm757 = vcmp.lt.s32.totalorder %v707, 0
        %v758 = vsub.s32 0, %v707
        %v759 = vsel %vm757, %v758, %v707
        %v760 = vshrl.u32 %v759, 4
        %v761 = vand.u32 %v759, 15
        %v762 = vsub.s32 0, %v761
        %v763 = vsel %vm757, %v762, %v761
        %vm764 = vcmp.lt.s32.totalorder %v708, 0
        %v765 = vsub.s32 0, %v708
        %v766 = vsel %vm764, %v765, %v708
        %v767 = vshrl.u32 %v766, 4
        %v768 = vand.u32 %v766, 15
        %v769 = vsub.s32 0, %v768
        %v770 = vsel %vm764, %v769, %v768
        %vm771 = vcmp.lt.s32.totalorder %v709, 0
        %v772 = vsub.s32 0, %v709
        %v773 = vsel %vm771, %v772, %v709
        %v774 = vshrl.u32 %v773, 4
        %v775 = vand.u32 %v773, 15
        %v776 = vsub.s32 0, %v775
        %v777 = vsel %vm771, %v776, %v775
        %vm778 = vcmp.lt.s32.totalorder %v710, 0
        %v779 = vsub.s32 0, %v710
        %v780 = vsel %vm778, %v779, %v710
        %v781 = vshrl.u32 %v780, 4
        %v782 = vand.u32 %v780, 15
        %v783 = vsub.s32 0, %v782
        %v784 = vsel %vm778, %v783, %v782
        %vm785 = vcmp.lt.s32.totalorder %v711, 0
        %v786 = vsub.s32 0, %v711
        %v787 = vsel %vm785, %v786, %v711
        %v788 = vshrl.u32 %v787, 4
        %v789 = vand.u32 %v787, 15
        %v790 = vsub.s32 0, %v789
        %v791 = vsel %vm785, %v790, %v789
        %vm792 = vcmp.lt.s32.totalorder %v712, 0
        %v793 = vsub.s32 0, %v712
        %v794 = vsel %vm792, %v793, %v712
        %v795 = vshrl.u32 %v794, 4
        %v796 = vand.u32 %v794, 15
        %v797 = vsub.s32 0, %v796
        %v798 = vsel %vm792, %v797, %v796
        %vm799 = vcmp.lt.s32.totalorder %v713, 0
        %v800 = vsub.s32 0, %v713
        %v801 = vsel %vm799, %v800, %v713
        %v802 = vshrl.u32 %v801, 4
        %v803 = vand.u32 %v801, 15
        %v804 = vsub.s32 0, %v803
        %v805 = vsel %vm799, %v804, %v803
        %vm806 = vcmp.lt.s32.totalorder %v714, 0
        %v807 = vsub.s32 0, %v714
        %v808 = vsel %vm806, %v807, %v714
        %v809 = vshrl.u32 %v808, 4
        %v810 = vand.u32 %v808, 15
        %v811 = vsub.s32 0, %v810
        %v812 = vsel %vm806, %v811, %v810
        %vm813 = vcmp.lt.s32.totalorder %v715, 0
        %v814 = vsub.s32 0, %v715
        %v815 = vsel %vm813, %v814, %v715
        %v816 = vshrl.u32 %v815, 4
        %v817 = vand.u32 %v815, 15
        %v818 = vsub.s32 0, %v817
        %v819 = vsel %vm813, %v818, %v817
        %vm820 = vcmp.lt.s32.totalorder %v716, 0
        %v821 = vsub.s32 0, %v716
        %v822 = vsel %vm820, %v821, %v716
        %v823 = vshrl.u32 %v822, 4
        %v824 = vand.u32 %v822, 15
        %v825 = vsub.s32 0, %v824
        %v826 = vsel %vm820, %v825, %v824
        %vm827 = vcmp.lt.s32.totalorder %v717, 0
        %v828 = vsub.s32 0, %v717
        %v829 = vsel %vm827, %v828, %v717
        %v830 = vshrl.u32 %v829, 4
        %v831 = vand.u32 %v829, 15
        %v832 = vsub.s32 0, %v831
        %v833 = vsel %vm827, %v832, %v831
        %vm834 = vcmp.lt.s32.totalorder %v718, 0
        %v835 = vsub.s32 0, %v718
        %v836 = vsel %vm834, %v835, %v718
        %v837 = vshrl.u32 %v836, 4
        %v838 = vand.u32 %v836, 15
        %v839 = vsub.s32 0, %v838
        %v840 = vsel %vm834, %v839, %v838
        %vm841 = vcmp.lt.s32.totalorder %v719, 0
        %v842 = vsub.s32 0, %v719
        %v843 = vsel %vm841, %v842, %v719
        %v844 = vshrl.u32 %v843, 4
        %v845 = vand.u32 %v843, 15
        %v846 = vsub.s32 0, %v845
        %v847 = vsel %vm841, %v846, %v845
        %vm848 = vcmp.lt.s32.totalorder %v720, 0
        %v849 = vsub.s32 0, %v720
        %v850 = vsel %vm848, %v849, %v720
        %v851 = vshrl.u32 %v850, 4
        %v852 = vand.u32 %v850, 15
        %v853 = vsub.s32 0, %v852
        %v854 = vsel %vm848, %v853, %v852
        %vm855 = vcmp.lt.s32.totalorder %v721, 0
        %v856 = vsub.s32 0, %v721
        %v857 = vsel %vm855, %v856, %v721
        %v858 = vshrl.u32 %v857, 4
        %v859 = vand.u32 %v857, 15
        %v860 = vsub.s32 0, %v859
        %v861 = vsel %vm855, %v860, %v859
        %vm862 = vcmp.lt.s32.totalorder %v722, 0
        %v863 = vsub.s32 0, %v722
        %v864 = vsel %vm862, %v863, %v722
        %v865 = vshrl.u32 %v864, 4
        %v866 = vand.u32 %v864, 15
        %v867 = vsub.s32 0, %v866
        %v868 = vsel %vm862, %v867, %v866
        %vm869 = vcmp.lt.s32.totalorder %v723, 0
        %v870 = vsub.s32 0, %v723
        %v871 = vsel %vm869, %v870, %v723
        %v872 = vshrl.u32 %v871, 4
        %v873 = vand.u32 %v871, 15
        %v874 = vsub.s32 0, %v873
        %v875 = vsel %vm869, %v874, %v873
        %vm876 = vcmp.lt.s32.totalorder %v724, 0
        %v877 = vsub.s32 0, %v724
        %v878 = vsel %vm876, %v877, %v724
        %v879 = vshrl.u32 %v878, 4
        %v880 = vand.u32 %v878, 15
        %v881 = vsub.s32 0, %v880
        %v882 = vsel %vm876, %v881, %v880
        %vm883 = vcmp.lt.s32.totalorder %v725, 0
        %v884 = vsub.s32 0, %v725
        %v885 = vsel %vm883, %v884, %v725
        %v886 = vshrl.u32 %v885, 4
        %v887 = vand.u32 %v885, 15
        %v888 = vsub.s32 0, %v887
        %v889 = vsel %vm883, %v888, %v887
        %vm890 = vcmp.lt.s32.totalorder %v726, 0
        %v891 = vsub.s32 0, %v726
        %v892 = vsel %vm890, %v891, %v726
        %v893 = vshrl.u32 %v892, 4
        %v894 = vand.u32 %v892, 15
        %v895 = vsub.s32 0, %v894
        %v896 = vsel %vm890, %v895, %v894
        %vm897 = vcmp.lt.s32.totalorder %v727, 0
        %v898 = vsub.s32 0, %v727
        %v899 = vsel %vm897, %v898, %v727
        %v900 = vshrl.u32 %v899, 4
        %v901 = vand.u32 %v899, 15
        %v902 = vsub.s32 0, %v901
        %v903 = vsel %vm897, %v902, %v901
        %vm904 = vcmp.lt.s32.totalorder %v728, 0
        %v905 = vsub.s32 0, %v728
        %v906 = vsel %vm904, %v905, %v728
        %v907 = vshrl.u32 %v906, 4
        %v908 = vand.u32 %v906, 15
        %v909 = vsub.s32 0, %v908
        %v910 = vsel %vm904, %v909, %v908
        %vm911 = vcmp.lt.s32.totalorder %v729, 0
        %v912 = vsub.s32 0, %v729
        %v913 = vsel %vm911, %v912, %v729
        %v914 = vshrl.u32 %v913, 4
        %v915 = vand.u32 %v913, 15
        %v916 = vsub.s32 0, %v915
        %v917 = vsel %vm911, %v916, %v915
        %vm918 = vcmp.lt.s32.totalorder %v730, 0
        %v919 = vsub.s32 0, %v730
        %v920 = vsel %vm918, %v919, %v730
        %v921 = vshrl.u32 %v920, 4
        %v922 = vand.u32 %v920, 15
        %v923 = vsub.s32 0, %v922
        %v924 = vsel %vm918, %v923, %v922
        %vm925 = vcmp.lt.s32.totalorder %v731, 0
        %v926 = vsub.s32 0, %v731
        %v927 = vsel %vm925, %v926, %v731
        %v928 = vshrl.u32 %v927, 4
        %v929 = vand.u32 %v927, 15
        %v930 = vsub.s32 0, %v929
        %v931 = vsel %vm925, %v930, %v929
        %vm932 = vcmp.lt.s32.totalorder %v732, 0
        %v933 = vsub.s32 0, %v732
        %v934 = vsel %vm932, %v933, %v732
        %v935 = vshrl.u32 %v934, 4
        %v936 = vand.u32 %v934, 15
        %v937 = vsub.s32 0, %v936
        %v938 = vsel %vm932, %v937, %v936
        %vm939 = vcmp.lt.s32.totalorder %v733, 0
        %v940 = vsub.s32 0, %v733
        %v941 = vsel %vm939, %v940, %v733
        %v942 = vshrl.u32 %v941, 4
        %v943 = vand.u32 %v941, 15
        %v944 = vsub.s32 0, %v943
        %v945 = vsel %vm939, %v944, %v943
        %vm946 = vcmp.lt.s32.totalorder %v734, 0
        %v947 = vsub.s32 0, %v734
        %v948 = vsel %vm946, %v947, %v734
        %v949 = vshrl.u32 %v948, 4
        %v950 = vand.u32 %v948, 15
        %v951 = vsub.s32 0, %v950
        %v952 = vsel %vm946, %v951, %v950
        %vm953 = vcmp.lt.s32.totalorder %v735, 0
        %v954 = vsub.s32 0, %v735
        %v955 = vsel %vm953, %v954, %v735
        %v956 = vshrl.u32 %v955, 4
        %v957 = vand.u32 %v955, 15
        %v958 = vsub.s32 0, %v957
        %v959 = vsel %vm953, %v958, %v957
        %vm960 = vcmp.ne.s32.totalorder %v742, 0
        %vm961 = vcmp.ne.s32.totalorder %v749, 0
        %vm962 = vcmp.ne.s32.totalorder %v756, 0
        %vm963 = vcmp.ne.s32.totalorder %v763, 0
        %vm964 = vcmp.ne.s32.totalorder %v770, 0
        %vm965 = vcmp.ne.s32.totalorder %v777, 0
        %vm966 = vcmp.ne.s32.totalorder %v784, 0
        %vm967 = vcmp.ne.s32.totalorder %v791, 0
        %vm968 = vcmp.ne.s32.totalorder %v798, 0
        %vm969 = vcmp.ne.s32.totalorder %v805, 0
        %vm970 = vcmp.ne.s32.totalorder %v812, 0
        %vm971 = vcmp.ne.s32.totalorder %v819, 0
        %vm972 = vcmp.ne.s32.totalorder %v826, 0
        %vm973 = vcmp.ne.s32.totalorder %v833, 0
        %vm974 = vcmp.ne.s32.totalorder %v840, 0
        %vm975 = vcmp.ne.s32.totalorder %v847, 0
        %vm976 = vcmp.ne.s32.totalorder %v854, 0
        %vm977 = vcmp.ne.s32.totalorder %v861, 0
        %vm978 = vcmp.ne.s32.totalorder %v868, 0
        %vm979 = vcmp.ne.s32.totalorder %v875, 0
        %vm980 = vcmp.ne.s32.totalorder %v882, 0
        %vm981 = vcmp.ne.s32.totalorder %v889, 0
        %vm982 = vcmp.ne.s32.totalorder %v896, 0
        %vm983 = vcmp.ne.s32.totalorder %v903, 0
        %vm984 = vcmp.ne.s32.totalorder %v910, 0
        %vm985 = vcmp.ne.s32.totalorder %v917, 0
        %vm986 = vcmp.ne.s32.totalorder %v924, 0
        %vm987 = vcmp.ne.s32.totalorder %v931, 0
        %vm988 = vcmp.ne.s32.totalorder %v938, 0
        %vm989 = vcmp.ne.s32.totalorder %v945, 0
        %vm990 = vcmp.ne.s32.totalorder %v952, 0
        %vm991 = vcmp.ne.s32.totalorder %v959, 0
        %vm992 = vcmp.lt.s32.totalorder %v742, 0
        %vm993 = vcmp.lt.s32.totalorder %v749, 0
        %vm994 = vcmp.lt.s32.totalorder %v756, 0
        %vm995 = vcmp.lt.s32.totalorder %v763, 0
        %vm996 = vcmp.lt.s32.totalorder %v770, 0
        %vm997 = vcmp.lt.s32.totalorder %v777, 0
        %vm998 = vcmp.lt.s32.totalorder %v784, 0
        %vm999 = vcmp.lt.s32.totalorder %v791, 0
        %vm1000 = vcmp.lt.s32.totalorder %v798, 0
        %vm1001 = vcmp.lt.s32.totalorder %v805, 0
        %vm1002 = vcmp.lt.s32.totalorder %v812, 0
        %vm1003 = vcmp.lt.s32.totalorder %v819, 0
        %vm1004 = vcmp.lt.s32.totalorder %v826, 0
        %vm1005 = vcmp.lt.s32.totalorder %v833, 0
        %vm1006 = vcmp.lt.s32.totalorder %v840, 0
        %vm1007 = vcmp.lt.s32.totalorder %v847, 0
        %vm1008 = vcmp.lt.s32.totalorder %v854, 0
        %vm1009 = vcmp.lt.s32.totalorder %v861, 0
        %vm1010 = vcmp.lt.s32.totalorder %v868, 0
        %vm1011 = vcmp.lt.s32.totalorder %v875, 0
        %vm1012 = vcmp.lt.s32.totalorder %v882, 0
        %vm1013 = vcmp.lt.s32.totalorder %v889, 0
        %vm1014 = vcmp.lt.s32.totalorder %v896, 0
        %vm1015 = vcmp.lt.s32.totalorder %v903, 0
        %vm1016 = vcmp.lt.s32.totalorder %v910, 0
        %vm1017 = vcmp.lt.s32.totalorder %v917, 0
        %vm1018 = vcmp.lt.s32.totalorder %v924, 0
        %vm1019 = vcmp.lt.s32.totalorder %v931, 0
        %vm1020 = vcmp.lt.s32.totalorder %v938, 0
        %vm1021 = vcmp.lt.s32.totalorder %v945, 0
        %vm1022 = vcmp.lt.s32.totalorder %v952, 0
        %vm1023 = vcmp.lt.s32.totalorder %v959, 0
        %vm1024 = vmand %vm992, %vm960
        %vm1025 = vmand %vm993, %vm961
        %vm1026 = vmand %vm994, %vm962
        %vm1027 = vmand %vm995, %vm963
        %vm1028 = vmand %vm996, %vm964
        %vm1029 = vmand %vm997, %vm965
        %vm1030 = vmand %vm998, %vm966
        %vm1031 = vmand %vm999, %vm967
        %vm1032 = vmand %vm1000, %vm968
        %vm1033 = vmand %vm1001, %vm969
        %vm1034 = vmand %vm1002, %vm970
        %vm1035 = vmand %vm1003, %vm971
        %vm1036 = vmand %vm1004, %vm972
        %vm1037 = vmand %vm1005, %vm973
        %vm1038 = vmand %vm1006, %vm974
        %vm1039 = vmand %vm1007, %vm975
        %vm1040 = vmand %vm1008, %vm976
        %vm1041 = vmand %vm1009, %vm977
        %vm1042 = vmand %vm1010, %vm978
        %vm1043 = vmand %vm1011, %vm979
        %vm1044 = vmand %vm1012, %vm980
        %vm1045 = vmand %vm1013, %vm981
        %vm1046 = vmand %vm1014, %vm982
        %vm1047 = vmand %vm1015, %vm983
        %vm1048 = vmand %vm1016, %vm984
        %vm1049 = vmand %vm1017, %vm985
        %vm1050 = vmand %vm1018, %vm986
        %vm1051 = vmand %vm1019, %vm987
        %vm1052 = vmand %vm1020, %vm988
        %vm1053 = vmand %vm1021, %vm989
        %vm1054 = vmand %vm1022, %vm990
        %vm1055 = vmand %vm1023, %vm991
        %v1056 = vadd.s32 %v742, 16
        %v1057 = vadd.s32 %v749, 16
        %v1058 = vadd.s32 %v756, 16
        %v1059 = vadd.s32 %v763, 16
        %v1060 = vadd.s32 %v770, 16
        %v1061 = vadd.s32 %v777, 16
        %v1062 = vadd.s32 %v784, 16
        %v1063 = vadd.s32 %v791, 16
        %v1064 = vadd.s32 %v798, 16
        %v1065 = vadd.s32 %v805, 16
        %v1066 = vadd.s32 %v812, 16
        %v1067 = vadd.s32 %v819, 16
        %v1068 = vadd.s32 %v826, 16
        %v1069 = vadd.s32 %v833, 16
        %v1070 = vadd.s32 %v840, 16
        %v1071 = vadd.s32 %v847, 16
        %v1072 = vadd.s32 %v854, 16
        %v1073 = vadd.s32 %v861, 16
        %v1074 = vadd.s32 %v868, 16
        %v1075 = vadd.s32 %v875, 16
        %v1076 = vadd.s32 %v882, 16
        %v1077 = vadd.s32 %v889, 16
        %v1078 = vadd.s32 %v896, 16
        %v1079 = vadd.s32 %v903, 16
        %v1080 = vadd.s32 %v910, 16
        %v1081 = vadd.s32 %v917, 16
        %v1082 = vadd.s32 %v924, 16
        %v1083 = vadd.s32 %v931, 16
        %v1084 = vadd.s32 %v938, 16
        %v1085 = vadd.s32 %v945, 16
        %v1086 = vadd.s32 %v952, 16
        %v1087 = vadd.s32 %v959, 16
        %v1088 = vsel %vm1024, %v1056, %v742
        %v1089 = vsel %vm1025, %v1057, %v749
        %v1090 = vsel %vm1026, %v1058, %v756
        %v1091 = vsel %vm1027, %v1059, %v763
        %v1092 = vsel %vm1028, %v1060, %v770
        %v1093 = vsel %vm1029, %v1061, %v777
        %v1094 = vsel %vm1030, %v1062, %v784
        %v1095 = vsel %vm1031, %v1063, %v791
        %v1096 = vsel %vm1032, %v1064, %v798
        %v1097 = vsel %vm1033, %v1065, %v805
        %v1098 = vsel %vm1034, %v1066, %v812
        %v1099 = vsel %vm1035, %v1067, %v819
        %v1100 = vsel %vm1036, %v1068, %v826
        %v1101 = vsel %vm1037, %v1069, %v833
        %v1102 = vsel %vm1038, %v1070, %v840
        %v1103 = vsel %vm1039, %v1071, %v847
        %v1104 = vsel %vm1040, %v1072, %v854
        %v1105 = vsel %vm1041, %v1073, %v861
        %v1106 = vsel %vm1042, %v1074, %v868
        %v1107 = vsel %vm1043, %v1075, %v875
        %v1108 = vsel %vm1044, %v1076, %v882
        %v1109 = vsel %vm1045, %v1077, %v889
        %v1110 = vsel %vm1046, %v1078, %v896
        %v1111 = vsel %vm1047, %v1079, %v903
        %v1112 = vsel %vm1048, %v1080, %v910
        %v1113 = vsel %vm1049, %v1081, %v917
        %v1114 = vsel %vm1050, %v1082, %v924
        %v1115 = vsel %vm1051, %v1083, %v931
        %v1116 = vsel %vm1052, %v1084, %v938
        %v1117 = vsel %vm1053, %v1085, %v945
        %v1118 = vsel %vm1054, %v1086, %v952
        %v1119 = vsel %vm1055, %v1087, %v959
        %vm1120 = vcmp.eq.s32.totalorder %v1088, 0
        %vm1121 = vcmp.eq.s32.totalorder %v1089, 0
        %vm1122 = vcmp.eq.s32.totalorder %v1090, 0
        %vm1123 = vcmp.eq.s32.totalorder %v1091, 0
        %vm1124 = vcmp.eq.s32.totalorder %v1092, 0
        %vm1125 = vcmp.eq.s32.totalorder %v1093, 0
        %vm1126 = vcmp.eq.s32.totalorder %v1094, 0
        %vm1127 = vcmp.eq.s32.totalorder %v1095, 0
        %vm1128 = vcmp.eq.s32.totalorder %v1096, 0
        %vm1129 = vcmp.eq.s32.totalorder %v1097, 0
        %vm1130 = vcmp.eq.s32.totalorder %v1098, 0
        %vm1131 = vcmp.eq.s32.totalorder %v1099, 0
        %vm1132 = vcmp.eq.s32.totalorder %v1100, 0
        %vm1133 = vcmp.eq.s32.totalorder %v1101, 0
        %vm1134 = vcmp.eq.s32.totalorder %v1102, 0
        %vm1135 = vcmp.eq.s32.totalorder %v1103, 0
        %vm1136 = vcmp.eq.s32.totalorder %v1104, 0
        %vm1137 = vcmp.eq.s32.totalorder %v1105, 0
        %vm1138 = vcmp.eq.s32.totalorder %v1106, 0
        %vm1139 = vcmp.eq.s32.totalorder %v1107, 0
        %vm1140 = vcmp.eq.s32.totalorder %v1108, 0
        %vm1141 = vcmp.eq.s32.totalorder %v1109, 0
        %vm1142 = vcmp.eq.s32.totalorder %v1110, 0
        %vm1143 = vcmp.eq.s32.totalorder %v1111, 0
        %vm1144 = vcmp.eq.s32.totalorder %v1112, 0
        %vm1145 = vcmp.eq.s32.totalorder %v1113, 0
        %vm1146 = vcmp.eq.s32.totalorder %v1114, 0
        %vm1147 = vcmp.eq.s32.totalorder %v1115, 0
        %vm1148 = vcmp.eq.s32.totalorder %v1116, 0
        %vm1149 = vcmp.eq.s32.totalorder %v1117, 0
        %vm1150 = vcmp.eq.s32.totalorder %v1118, 0
        %vm1151 = vcmp.eq.s32.totalorder %v1119, 0
        %v1152 = vrot.slane %v663, 7
        %v1153 = vrot.slane %v664, 7
        %v1154 = vrot.slane %v665, 7
        %v1155 = vrot.slane %v666, 7
        %v1156 = vrot.slane %v667, 7
        %v1157 = vrot.slane %v668, 7
        %v1158 = vrot.slane %v669, 7
        %v1159 = vrot.slane %v670, 7
        %v1160 = vrot.slane %v671, 7
        %v1161 = vrot.slane %v672, 7
        %v1162 = vrot.slane %v673, 7
        %v1163 = vrot.slane %v674, 7
        %v1164 = vrot.slane %v675, 7
        %v1165 = vrot.slane %v676, 7
        %v1166 = vrot.slane %v677, 7
        %v1167 = vrot.slane %v678, 7
        %v1168 = vrot.slane %v679, 7
        %v1169 = vrot.slane %v680, 7
        %v1170 = vrot.slane %v681, 7
        %v1171 = vrot.slane %v682, 7
        %v1172 = vrot.slane %v683, 7
        %v1173 = vrot.slane %v684, 7
        %v1174 = vrot.slane %v685, 7
        %v1175 = vrot.slane %v686, 7
        %v1176 = vrot.slane %v687, 7
        %v1177 = vrot.slane %v688, 7
        %v1178 = vrot.slane %v689, 7
        %v1179 = vrot.slane %v690, 7
        %v1180 = vrot.slane %v691, 7
        %v1181 = vrot.slane %v692, 7
        %v1182 = vrot.slane %v693, 7
        %v1183 = vrot.slane %v694, 7
        %vm1184 = vcmp.lt.s32.totalorder %v704, 1
        %v1185 = vsel %vm1184, %v1182, %v1183
        %v1186 = vsel %vm1184, %v1181, %v1182
        %v1187 = vsel %vm1184, %v1180, %v1181
        %v1188 = vsel %vm1184, %v1179, %v1180
        %v1189 = vsel %vm1184, %v1178, %v1179
        %v1190 = vsel %vm1184, %v1177, %v1178
        %v1191 = vsel %vm1184, %v1176, %v1177
        %v1192 = vsel %vm1184, %v1175, %v1176
        %v1193 = vsel %vm1184, %v1174, %v1175
        %v1194 = vsel %vm1184, %v1173, %v1174
        %v1195 = vsel %vm1184, %v1172, %v1173
        %v1196 = vsel %vm1184, %v1171, %v1172
        %v1197 = vsel %vm1184, %v1170, %v1171
        %v1198 = vsel %vm1184, %v1169, %v1170
        %v1199 = vsel %vm1184, %v1168, %v1169
        %v1200 = vsel %vm1184, %v1167, %v1168
        %v1201 = vsel %vm1184, %v1166, %v1167
        %v1202 = vsel %vm1184, %v1165, %v1166
        %v1203 = vsel %vm1184, %v1164, %v1165
        %v1204 = vsel %vm1184, %v1163, %v1164
        %v1205 = vsel %vm1184, %v1162, %v1163
        %v1206 = vsel %vm1184, %v1161, %v1162
        %v1207 = vsel %vm1184, %v1160, %v1161
        %v1208 = vsel %vm1184, %v1159, %v1160
        %v1209 = vsel %vm1184, %v1158, %v1159
        %v1210 = vsel %vm1184, %v1157, %v1158
        %v1211 = vsel %vm1184, %v1156, %v1157
        %v1212 = vsel %vm1184, %v1155, %v1156
        %v1213 = vsel %vm1184, %v1154, %v1155
        %v1214 = vsel %vm1184, %v1153, %v1154
        %v1215 = vsel %vm1184, %v1152, %v1153
        %v1216 = vsel %vm1184, %v1183, %v1152
        %v1217 = vsel %vm1120, 1, 0
        %v1218 = vsel %vm1121, 1, 0
        %v1219 = vsel %vm1122, 1, 0
        %v1220 = vsel %vm1123, 1, 0
        %v1221 = vsel %vm1124, 1, 0
        %v1222 = vsel %vm1125, 1, 0
        %v1223 = vsel %vm1126, 1, 0
        %v1224 = vsel %vm1127, 1, 0
        %v1225 = vsel %vm1128, 1, 0
        %v1226 = vsel %vm1129, 1, 0
        %v1227 = vsel %vm1130, 1, 0
        %v1228 = vsel %vm1131, 1, 0
        %v1229 = vsel %vm1132, 1, 0
        %v1230 = vsel %vm1133, 1, 0
        %v1231 = vsel %vm1134, 1, 0
        %v1232 = vsel %vm1135, 1, 0
        %v1233 = vsel %vm1136, 1, 0
        %v1234 = vsel %vm1137, 1, 0
        %v1235 = vsel %vm1138, 1, 0
        %v1236 = vsel %vm1139, 1, 0
        %v1237 = vsel %vm1140, 1, 0
        %v1238 = vsel %vm1141, 1, 0
        %v1239 = vsel %vm1142, 1, 0
        %v1240 = vsel %vm1143, 1, 0
        %v1241 = vsel %vm1144, 1, 0
        %v1242 = vsel %vm1145, 1, 0
        %v1243 = vsel %vm1146, 1, 0
        %v1244 = vsel %vm1147, 1, 0
        %v1245 = vsel %vm1148, 1, 0
        %v1246 = vsel %vm1149, 1, 0
        %v1247 = vsel %vm1150, 1, 0
        %v1248 = vsel %vm1151, 1, 0
        %vm1249 = vcmp.eq.s32.totalorder %v1217, 1
        %vm1250 = vcmp.eq.s32.totalorder %v1218, 1
        %vm1251 = vcmp.eq.s32.totalorder %v1219, 1
        %vm1252 = vcmp.eq.s32.totalorder %v1220, 1
        %vm1253 = vcmp.eq.s32.totalorder %v1221, 1
        %vm1254 = vcmp.eq.s32.totalorder %v1222, 1
        %vm1255 = vcmp.eq.s32.totalorder %v1223, 1
        %vm1256 = vcmp.eq.s32.totalorder %v1224, 1
        %vm1257 = vcmp.eq.s32.totalorder %v1225, 1
        %vm1258 = vcmp.eq.s32.totalorder %v1226, 1
        %vm1259 = vcmp.eq.s32.totalorder %v1227, 1
        %vm1260 = vcmp.eq.s32.totalorder %v1228, 1
        %vm1261 = vcmp.eq.s32.totalorder %v1229, 1
        %vm1262 = vcmp.eq.s32.totalorder %v1230, 1
        %vm1263 = vcmp.eq.s32.totalorder %v1231, 1
        %vm1264 = vcmp.eq.s32.totalorder %v1232, 1
        %vm1265 = vcmp.eq.s32.totalorder %v1233, 1
        %vm1266 = vcmp.eq.s32.totalorder %v1234, 1
        %vm1267 = vcmp.eq.s32.totalorder %v1235, 1
        %vm1268 = vcmp.eq.s32.totalorder %v1236, 1
        %vm1269 = vcmp.eq.s32.totalorder %v1237, 1
        %vm1270 = vcmp.eq.s32.totalorder %v1238, 1
        %vm1271 = vcmp.eq.s32.totalorder %v1239, 1
        %vm1272 = vcmp.eq.s32.totalorder %v1240, 1
        %vm1273 = vcmp.eq.s32.totalorder %v1241, 1
        %vm1274 = vcmp.eq.s32.totalorder %v1242, 1
        %vm1275 = vcmp.eq.s32.totalorder %v1243, 1
        %vm1276 = vcmp.eq.s32.totalorder %v1244, 1
        %vm1277 = vcmp.eq.s32.totalorder %v1245, 1
        %vm1278 = vcmp.eq.s32.totalorder %v1246, 1
        %vm1279 = vcmp.eq.s32.totalorder %v1247, 1
        %vm1280 = vcmp.eq.s32.totalorder %v1248, 1
        %v1281 = vsel %vm1249, 0.0, %v1216
        %v1282 = vsel %vm1250, 0.0, %v1215
        %v1283 = vsel %vm1251, 0.0, %v1214
        %v1284 = vsel %vm1252, 0.0, %v1213
        %v1285 = vsel %vm1253, 0.0, %v1212
        %v1286 = vsel %vm1254, 0.0, %v1211
        %v1287 = vsel %vm1255, 0.0, %v1210
        %v1288 = vsel %vm1256, 0.0, %v1209
        %v1289 = vsel %vm1257, 0.0, %v1208
        %v1290 = vsel %vm1258, 0.0, %v1207
        %v1291 = vsel %vm1259, 0.0, %v1206
        %v1292 = vsel %vm1260, 0.0, %v1205
        %v1293 = vsel %vm1261, 0.0, %v1204
        %v1294 = vsel %vm1262, 0.0, %v1203
        %v1295 = vsel %vm1263, 0.0, %v1202
        %v1296 = vsel %vm1264, 0.0, %v1201
        %v1297 = vsel %vm1265, 0.0, %v1200
        %v1298 = vsel %vm1266, 0.0, %v1199
        %v1299 = vsel %vm1267, 0.0, %v1198
        %v1300 = vsel %vm1268, 0.0, %v1197
        %v1301 = vsel %vm1269, 0.0, %v1196
        %v1302 = vsel %vm1270, 0.0, %v1195
        %v1303 = vsel %vm1271, 0.0, %v1194
        %v1304 = vsel %vm1272, 0.0, %v1193
        %v1305 = vsel %vm1273, 0.0, %v1192
        %v1306 = vsel %vm1274, 0.0, %v1191
        %v1307 = vsel %vm1275, 0.0, %v1190
        %v1308 = vsel %vm1276, 0.0, %v1189
        %v1309 = vsel %vm1277, 0.0, %v1188
        %v1310 = vsel %vm1278, 0.0, %v1187
        %v1311 = vsel %vm1279, 0.0, %v1186
        %v1312 = vsel %vm1280, 0.0, %v1185
        %vm1313 = vcmp.eq.s32.totalorder %v1088, 15
        %vm1314 = vcmp.eq.s32.totalorder %v1089, 15
        %vm1315 = vcmp.eq.s32.totalorder %v1090, 15
        %vm1316 = vcmp.eq.s32.totalorder %v1091, 15
        %vm1317 = vcmp.eq.s32.totalorder %v1092, 15
        %vm1318 = vcmp.eq.s32.totalorder %v1093, 15
        %vm1319 = vcmp.eq.s32.totalorder %v1094, 15
        %vm1320 = vcmp.eq.s32.totalorder %v1095, 15
        %vm1321 = vcmp.eq.s32.totalorder %v1096, 15
        %vm1322 = vcmp.eq.s32.totalorder %v1097, 15
        %vm1323 = vcmp.eq.s32.totalorder %v1098, 15
        %vm1324 = vcmp.eq.s32.totalorder %v1099, 15
        %vm1325 = vcmp.eq.s32.totalorder %v1100, 15
        %vm1326 = vcmp.eq.s32.totalorder %v1101, 15
        %vm1327 = vcmp.eq.s32.totalorder %v1102, 15
        %vm1328 = vcmp.eq.s32.totalorder %v1103, 15
        %vm1329 = vcmp.eq.s32.totalorder %v1104, 15
        %vm1330 = vcmp.eq.s32.totalorder %v1105, 15
        %vm1331 = vcmp.eq.s32.totalorder %v1106, 15
        %vm1332 = vcmp.eq.s32.totalorder %v1107, 15
        %vm1333 = vcmp.eq.s32.totalorder %v1108, 15
        %vm1334 = vcmp.eq.s32.totalorder %v1109, 15
        %vm1335 = vcmp.eq.s32.totalorder %v1110, 15
        %vm1336 = vcmp.eq.s32.totalorder %v1111, 15
        %vm1337 = vcmp.eq.s32.totalorder %v1112, 15
        %vm1338 = vcmp.eq.s32.totalorder %v1113, 15
        %vm1339 = vcmp.eq.s32.totalorder %v1114, 15
        %vm1340 = vcmp.eq.s32.totalorder %v1115, 15
        %vm1341 = vcmp.eq.s32.totalorder %v1116, 15
        %vm1342 = vcmp.eq.s32.totalorder %v1117, 15
        %vm1343 = vcmp.eq.s32.totalorder %v1118, 15
        %vm1344 = vcmp.eq.s32.totalorder %v1119, 15
        %v1345 = vrot.slane %v663, 1
        %v1346 = vrot.slane %v664, 1
        %v1347 = vrot.slane %v665, 1
        %v1348 = vrot.slane %v666, 1
        %v1349 = vrot.slane %v667, 1
        %v1350 = vrot.slane %v668, 1
        %v1351 = vrot.slane %v669, 1
        %v1352 = vrot.slane %v670, 1
        %v1353 = vrot.slane %v671, 1
        %v1354 = vrot.slane %v672, 1
        %v1355 = vrot.slane %v673, 1
        %v1356 = vrot.slane %v674, 1
        %v1357 = vrot.slane %v675, 1
        %v1358 = vrot.slane %v676, 1
        %v1359 = vrot.slane %v677, 1
        %v1360 = vrot.slane %v678, 1
        %v1361 = vrot.slane %v679, 1
        %v1362 = vrot.slane %v680, 1
        %v1363 = vrot.slane %v681, 1
        %v1364 = vrot.slane %v682, 1
        %v1365 = vrot.slane %v683, 1
        %v1366 = vrot.slane %v684, 1
        %v1367 = vrot.slane %v685, 1
        %v1368 = vrot.slane %v686, 1
        %v1369 = vrot.slane %v687, 1
        %v1370 = vrot.slane %v688, 1
        %v1371 = vrot.slane %v689, 1
        %v1372 = vrot.slane %v690, 1
        %v1373 = vrot.slane %v691, 1
        %v1374 = vrot.slane %v692, 1
        %v1375 = vrot.slane %v693, 1
        %v1376 = vrot.slane %v694, 1
        %vm1377 = vcmp.lt.s32.totalorder %v704, 7
        %v1378 = vsel %vm1377, %v1375, %v1376
        %v1379 = vsel %vm1377, %v1374, %v1375
        %v1380 = vsel %vm1377, %v1373, %v1374
        %v1381 = vsel %vm1377, %v1372, %v1373
        %v1382 = vsel %vm1377, %v1371, %v1372
        %v1383 = vsel %vm1377, %v1370, %v1371
        %v1384 = vsel %vm1377, %v1369, %v1370
        %v1385 = vsel %vm1377, %v1368, %v1369
        %v1386 = vsel %vm1377, %v1367, %v1368
        %v1387 = vsel %vm1377, %v1366, %v1367
        %v1388 = vsel %vm1377, %v1365, %v1366
        %v1389 = vsel %vm1377, %v1364, %v1365
        %v1390 = vsel %vm1377, %v1363, %v1364
        %v1391 = vsel %vm1377, %v1362, %v1363
        %v1392 = vsel %vm1377, %v1361, %v1362
        %v1393 = vsel %vm1377, %v1360, %v1361
        %v1394 = vsel %vm1377, %v1359, %v1360
        %v1395 = vsel %vm1377, %v1358, %v1359
        %v1396 = vsel %vm1377, %v1357, %v1358
        %v1397 = vsel %vm1377, %v1356, %v1357
        %v1398 = vsel %vm1377, %v1355, %v1356
        %v1399 = vsel %vm1377, %v1354, %v1355
        %v1400 = vsel %vm1377, %v1353, %v1354
        %v1401 = vsel %vm1377, %v1352, %v1353
        %v1402 = vsel %vm1377, %v1351, %v1352
        %v1403 = vsel %vm1377, %v1350, %v1351
        %v1404 = vsel %vm1377, %v1349, %v1350
        %v1405 = vsel %vm1377, %v1348, %v1349
        %v1406 = vsel %vm1377, %v1347, %v1348
        %v1407 = vsel %vm1377, %v1346, %v1347
        %v1408 = vsel %vm1377, %v1345, %v1346
        %v1409 = vsel %vm1377, %v1376, %v1345
        %v1410 = vsel %vm1313, 1, 0
        %v1411 = vsel %vm1314, 1, 0
        %v1412 = vsel %vm1315, 1, 0
        %v1413 = vsel %vm1316, 1, 0
        %v1414 = vsel %vm1317, 1, 0
        %v1415 = vsel %vm1318, 1, 0
        %v1416 = vsel %vm1319, 1, 0
        %v1417 = vsel %vm1320, 1, 0
        %v1418 = vsel %vm1321, 1, 0
        %v1419 = vsel %vm1322, 1, 0
        %v1420 = vsel %vm1323, 1, 0
        %v1421 = vsel %vm1324, 1, 0
        %v1422 = vsel %vm1325, 1, 0
        %v1423 = vsel %vm1326, 1, 0
        %v1424 = vsel %vm1327, 1, 0
        %v1425 = vsel %vm1328, 1, 0
        %v1426 = vsel %vm1329, 1, 0
        %v1427 = vsel %vm1330, 1, 0
        %v1428 = vsel %vm1331, 1, 0
        %v1429 = vsel %vm1332, 1, 0
        %v1430 = vsel %vm1333, 1, 0
        %v1431 = vsel %vm1334, 1, 0
        %v1432 = vsel %vm1335, 1, 0
        %v1433 = vsel %vm1336, 1, 0
        %v1434 = vsel %vm1337, 1, 0
        %v1435 = vsel %vm1338, 1, 0
        %v1436 = vsel %vm1339, 1, 0
        %v1437 = vsel %vm1340, 1, 0
        %v1438 = vsel %vm1341, 1, 0
        %v1439 = vsel %vm1342, 1, 0
        %v1440 = vsel %vm1343, 1, 0
        %v1441 = vsel %vm1344, 1, 0
        %vm1442 = vcmp.eq.s32.totalorder %v1410, 1
        %vm1443 = vcmp.eq.s32.totalorder %v1411, 1
        %vm1444 = vcmp.eq.s32.totalorder %v1412, 1
        %vm1445 = vcmp.eq.s32.totalorder %v1413, 1
        %vm1446 = vcmp.eq.s32.totalorder %v1414, 1
        %vm1447 = vcmp.eq.s32.totalorder %v1415, 1
        %vm1448 = vcmp.eq.s32.totalorder %v1416, 1
        %vm1449 = vcmp.eq.s32.totalorder %v1417, 1
        %vm1450 = vcmp.eq.s32.totalorder %v1418, 1
        %vm1451 = vcmp.eq.s32.totalorder %v1419, 1
        %vm1452 = vcmp.eq.s32.totalorder %v1420, 1
        %vm1453 = vcmp.eq.s32.totalorder %v1421, 1
        %vm1454 = vcmp.eq.s32.totalorder %v1422, 1
        %vm1455 = vcmp.eq.s32.totalorder %v1423, 1
        %vm1456 = vcmp.eq.s32.totalorder %v1424, 1
        %vm1457 = vcmp.eq.s32.totalorder %v1425, 1
        %vm1458 = vcmp.eq.s32.totalorder %v1426, 1
        %vm1459 = vcmp.eq.s32.totalorder %v1427, 1
        %vm1460 = vcmp.eq.s32.totalorder %v1428, 1
        %vm1461 = vcmp.eq.s32.totalorder %v1429, 1
        %vm1462 = vcmp.eq.s32.totalorder %v1430, 1
        %vm1463 = vcmp.eq.s32.totalorder %v1431, 1
        %vm1464 = vcmp.eq.s32.totalorder %v1432, 1
        %vm1465 = vcmp.eq.s32.totalorder %v1433, 1
        %vm1466 = vcmp.eq.s32.totalorder %v1434, 1
        %vm1467 = vcmp.eq.s32.totalorder %v1435, 1
        %vm1468 = vcmp.eq.s32.totalorder %v1436, 1
        %vm1469 = vcmp.eq.s32.totalorder %v1437, 1
        %vm1470 = vcmp.eq.s32.totalorder %v1438, 1
        %vm1471 = vcmp.eq.s32.totalorder %v1439, 1
        %vm1472 = vcmp.eq.s32.totalorder %v1440, 1
        %vm1473 = vcmp.eq.s32.totalorder %v1441, 1
        %v1474 = vsel %vm1442, 0.0, %v1408
        %v1475 = vsel %vm1443, 0.0, %v1407
        %v1476 = vsel %vm1444, 0.0, %v1406
        %v1477 = vsel %vm1445, 0.0, %v1405
        %v1478 = vsel %vm1446, 0.0, %v1404
        %v1479 = vsel %vm1447, 0.0, %v1403
        %v1480 = vsel %vm1448, 0.0, %v1402
        %v1481 = vsel %vm1449, 0.0, %v1401
        %v1482 = vsel %vm1450, 0.0, %v1400
        %v1483 = vsel %vm1451, 0.0, %v1399
        %v1484 = vsel %vm1452, 0.0, %v1398
        %v1485 = vsel %vm1453, 0.0, %v1397
        %v1486 = vsel %vm1454, 0.0, %v1396
        %v1487 = vsel %vm1455, 0.0, %v1395
        %v1488 = vsel %vm1456, 0.0, %v1394
        %v1489 = vsel %vm1457, 0.0, %v1393
        %v1490 = vsel %vm1458, 0.0, %v1392
        %v1491 = vsel %vm1459, 0.0, %v1391
        %v1492 = vsel %vm1460, 0.0, %v1390
        %v1493 = vsel %vm1461, 0.0, %v1389
        %v1494 = vsel %vm1462, 0.0, %v1388
        %v1495 = vsel %vm1463, 0.0, %v1387
        %v1496 = vsel %vm1464, 0.0, %v1386
        %v1497 = vsel %vm1465, 0.0, %v1385
        %v1498 = vsel %vm1466, 0.0, %v1384
        %v1499 = vsel %vm1467, 0.0, %v1383
        %v1500 = vsel %vm1468, 0.0, %v1382
        %v1501 = vsel %vm1469, 0.0, %v1381
        %v1502 = vsel %vm1470, 0.0, %v1380
        %v1503 = vsel %vm1471, 0.0, %v1379
        %v1504 = vsel %vm1472, 0.0, %v1378
        %v1505 = vsel %vm1473, 0.0, %v1409
        %v1506 = vpack.c.bf16 %v1282, %v1281
        %v1507 = vpack.c.bf16 %v1284, %v1283
        %v1508 = vpack.c.bf16 %v1286, %v1285
        %v1509 = vpack.c.bf16 %v1288, %v1287
        %v1510 = vpack.c.bf16 %v1290, %v1289
        %v1511 = vpack.c.bf16 %v1292, %v1291
        %v1512 = vpack.c.bf16 %v1294, %v1293
        %v1513 = vpack.c.bf16 %v1296, %v1295
        %v1514 = vpack.c.bf16 %v1298, %v1297
        %v1515 = vpack.c.bf16 %v1300, %v1299
        %v1516 = vpack.c.bf16 %v1302, %v1301
        %v1517 = vpack.c.bf16 %v1304, %v1303
        %v1518 = vpack.c.bf16 %v1306, %v1305
        %v1519 = vpack.c.bf16 %v1308, %v1307
        %v1520 = vpack.c.bf16 %v1310, %v1309
        %v1521 = vpack.c.bf16 %v1312, %v1311
        %v1538 = vunpack.c.l.b16 %v1506
        %v1539 = vunpack.c.h.b16 %v1506
        %v1540 = vunpack.c.l.b16 %v1507
        %v1541 = vunpack.c.h.b16 %v1507
        %v1542 = vunpack.c.l.b16 %v1508
        %v1543 = vunpack.c.h.b16 %v1508
        %v1544 = vunpack.c.l.b16 %v1509
        %v1545 = vunpack.c.h.b16 %v1509
        %v1546 = vunpack.c.l.b16 %v1510
        %v1547 = vunpack.c.h.b16 %v1510
        %v1548 = vunpack.c.l.b16 %v1511
        %v1549 = vunpack.c.h.b16 %v1511
        %v1550 = vunpack.c.l.b16 %v1512
        %v1551 = vunpack.c.h.b16 %v1512
        %v1552 = vunpack.c.l.b16 %v1513
        %v1553 = vunpack.c.h.b16 %v1513
        %v1554 = vunpack.c.l.b16 %v1514
        %v1555 = vunpack.c.h.b16 %v1514
        %v1556 = vunpack.c.l.b16 %v1515
        %v1557 = vunpack.c.h.b16 %v1515
        %v1558 = vunpack.c.l.b16 %v1516
        %v1559 = vunpack.c.h.b16 %v1516
        %v1560 = vunpack.c.l.b16 %v1517
        %v1561 = vunpack.c.h.b16 %v1517
        %v1562 = vunpack.c.l.b16 %v1518
        %v1563 = vunpack.c.h.b16 %v1518
        %v1564 = vunpack.c.l.b16 %v1519
        %v1565 = vunpack.c.h.b16 %v1519
        %v1566 = vunpack.c.l.b16 %v1520
        %v1567 = vunpack.c.h.b16 %v1520
        %v1568 = vunpack.c.l.b16 %v1521
        %v1569 = vunpack.c.h.b16 %v1521
        %v1570 = vpack.c.b16 %v1538, %v1538
        %v1571 = vpack.c.b16 %v1539, %v1539
        %v1572 = vpack.c.b16 %v1540, %v1540
        %v1573 = vpack.c.b16 %v1541, %v1541
        %v1574 = vpack.c.b16 %v1542, %v1542
        %v1575 = vpack.c.b16 %v1543, %v1543
        %v1576 = vpack.c.b16 %v1544, %v1544
        %v1577 = vpack.c.b16 %v1545, %v1545
        %v1578 = vpack.c.b16 %v1546, %v1546
        %v1579 = vpack.c.b16 %v1547, %v1547
        %v1580 = vpack.c.b16 %v1548, %v1548
        %v1581 = vpack.c.b16 %v1549, %v1549
        %v1582 = vpack.c.b16 %v1550, %v1550
        %v1583 = vpack.c.b16 %v1551, %v1551
        %v1584 = vpack.c.b16 %v1552, %v1552
        %v1585 = vpack.c.b16 %v1553, %v1553
        %v1586 = vpack.c.b16 %v1554, %v1554
        %v1587 = vpack.c.b16 %v1555, %v1555
        %v1588 = vpack.c.b16 %v1556, %v1556
        %v1589 = vpack.c.b16 %v1557, %v1557
        %v1590 = vpack.c.b16 %v1558, %v1558
        %v1591 = vpack.c.b16 %v1559, %v1559
        %v1592 = vpack.c.b16 %v1560, %v1560
        %v1593 = vpack.c.b16 %v1561, %v1561
        %v1594 = vpack.c.b16 %v1562, %v1562
        %v1595 = vpack.c.b16 %v1563, %v1563
        %v1596 = vpack.c.b16 %v1564, %v1564
        %v1597 = vpack.c.b16 %v1565, %v1565
        %v1598 = vpack.c.b16 %v1566, %v1566
        %v1599 = vpack.c.b16 %v1567, %v1567
        %v1600 = vpack.c.b16 %v1568, %v1568
        %v1601 = vpack.c.b16 %v1569, %v1569
        %1634 = vst [vmem:[#allocation2 + $0x18] sm:$0xf] %v1570
        %1635 = vst [vmem:[#allocation2 + $0x24] sm:$0xf] %v1571
        %1636 = vst [vmem:[#allocation2 + $0x30] sm:$0xf] %v1572
        %1637 = vst [vmem:[#allocation2 + $0x3c] sm:$0xf] %v1573
        %1638 = vst [vmem:[#allocation2 + $0x48] sm:$0xf] %v1574
        %1639 = vst [vmem:[#allocation2 + $0x54] sm:$0xf] %v1575
        %1640 = vst [vmem:[#allocation2 + $0x60] sm:$0xf] %v1576
        %1641 = vst [vmem:[#allocation2 + $0x6c] sm:$0xf] %v1577
        %1642 = vst [vmem:[#allocation2 + $0x78] sm:$0xf] %v1578
        %1643 = vst [vmem:[#allocation2 + $0x84] sm:$0xf] %v1579
        %1644 = vst [vmem:[#allocation2 + $0x90] sm:$0xf] %v1580
        %1645 = vst [vmem:[#allocation2 + $0x9c] sm:$0xf] %v1581
        %1646 = vst [vmem:[#allocation2 + $0xa8] sm:$0xf] %v1582
        %1647 = vst [vmem:[#allocation2 + $0xb4] sm:$0xf] %v1583
        %1648 = vst [vmem:[#allocation2 + $0xc0] sm:$0xf] %v1584
        %1649 = vst [vmem:[#allocation2 + $0xcc] sm:$0xf] %v1585
        %1650 = vst [vmem:[#allocation2 + $0xd8] sm:$0xf] %v1586
        %1651 = vst [vmem:[#allocation2 + $0xe4] sm:$0xf] %v1587
        %1652 = vst [vmem:[#allocation2 + $0xf0] sm:$0xf] %v1588
        %1653 = vst [vmem:[#allocation2 + $0xfc] sm:$0xf] %v1589
        %1654 = vst [vmem:[#allocation2 + $0x108] sm:$0xf] %v1590
        %1655 = vst [vmem:[#allocation2 + $0x114] sm:$0xf] %v1591
        %1656 = vst [vmem:[#allocation2 + $0x120] sm:$0xf] %v1592
        %1657 = vst [vmem:[#allocation2 + $0x12c] sm:$0xf] %v1593
        %1658 = vst [vmem:[#allocation2 + $0x138] sm:$0xf] %v1594
        %1659 = vst [vmem:[#allocation2 + $0x144] sm:$0xf] %v1595
        %1660 = vst [vmem:[#allocation2 + $0x150] sm:$0xf] %v1596
        %1661 = vst [vmem:[#allocation2 + $0x15c] sm:$0xf] %v1597
        %1662 = vst [vmem:[#allocation2 + $0x168] sm:$0xf] %v1598
        %1663 = vst [vmem:[#allocation2 + $0x174] sm:$0xf] %v1599
        %1664 = vst [vmem:[#allocation2 + $0x180] sm:$0xf] %v1600
        %1665 = vst [vmem:[#allocation2 + $0x18c] sm:$0xf] %v1601
        %v1666 = vpack.c.bf16 %v664, %v663
        %v1667 = vpack.c.bf16 %v666, %v665
        %v1668 = vpack.c.bf16 %v668, %v667
        %v1669 = vpack.c.bf16 %v670, %v669
        %v1670 = vpack.c.bf16 %v672, %v671
        %v1671 = vpack.c.bf16 %v674, %v673
        %v1672 = vpack.c.bf16 %v676, %v675
        %v1673 = vpack.c.bf16 %v678, %v677
        %v1674 = vpack.c.bf16 %v680, %v679
        %v1675 = vpack.c.bf16 %v682, %v681
        %v1676 = vpack.c.bf16 %v684, %v683
        %v1677 = vpack.c.bf16 %v686, %v685
        %v1678 = vpack.c.bf16 %v688, %v687
        %v1679 = vpack.c.bf16 %v690, %v689
        %v1680 = vpack.c.bf16 %v692, %v691
        %v1681 = vpack.c.bf16 %v694, %v693
        %v1698 = vunpack.c.l.b16 %v1666
        %v1699 = vunpack.c.h.b16 %v1666
        %v1700 = vunpack.c.l.b16 %v1667
        %v1701 = vunpack.c.h.b16 %v1667
        %v1702 = vunpack.c.l.b16 %v1668
        %v1703 = vunpack.c.h.b16 %v1668
        %v1704 = vunpack.c.l.b16 %v1669
        %v1705 = vunpack.c.h.b16 %v1669
        %v1706 = vunpack.c.l.b16 %v1670
        %v1707 = vunpack.c.h.b16 %v1670
        %v1708 = vunpack.c.l.b16 %v1671
        %v1709 = vunpack.c.h.b16 %v1671
        %v1710 = vunpack.c.l.b16 %v1672
        %v1711 = vunpack.c.h.b16 %v1672
        %v1712 = vunpack.c.l.b16 %v1673
        %v1713 = vunpack.c.h.b16 %v1673
        %v1714 = vunpack.c.l.b16 %v1674
        %v1715 = vunpack.c.h.b16 %v1674
        %v1716 = vunpack.c.l.b16 %v1675
        %v1717 = vunpack.c.h.b16 %v1675
        %v1718 = vunpack.c.l.b16 %v1676
        %v1719 = vunpack.c.h.b16 %v1676
        %v1720 = vunpack.c.l.b16 %v1677
        %v1721 = vunpack.c.h.b16 %v1677
        %v1722 = vunpack.c.l.b16 %v1678
        %v1723 = vunpack.c.h.b16 %v1678
        %v1724 = vunpack.c.l.b16 %v1679
        %v1725 = vunpack.c.h.b16 %v1679
        %v1726 = vunpack.c.l.b16 %v1680
        %v1727 = vunpack.c.h.b16 %v1680
        %v1728 = vunpack.c.l.b16 %v1681
        %v1729 = vunpack.c.h.b16 %v1681
        %v1730 = vpack.c.b16 %v1698, %v1698
        %v1731 = vpack.c.b16 %v1699, %v1699
        %v1732 = vpack.c.b16 %v1700, %v1700
        %v1733 = vpack.c.b16 %v1701, %v1701
        %v1734 = vpack.c.b16 %v1702, %v1702
        %v1735 = vpack.c.b16 %v1703, %v1703
        %v1736 = vpack.c.b16 %v1704, %v1704
        %v1737 = vpack.c.b16 %v1705, %v1705
        %v1738 = vpack.c.b16 %v1706, %v1706
        %v1739 = vpack.c.b16 %v1707, %v1707
        %v1740 = vpack.c.b16 %v1708, %v1708
        %v1741 = vpack.c.b16 %v1709, %v1709
        %v1742 = vpack.c.b16 %v1710, %v1710
        %v1743 = vpack.c.b16 %v1711, %v1711
        %v1744 = vpack.c.b16 %v1712, %v1712
        %v1745 = vpack.c.b16 %v1713, %v1713
        %v1746 = vpack.c.b16 %v1714, %v1714
        %v1747 = vpack.c.b16 %v1715, %v1715
        %v1748 = vpack.c.b16 %v1716, %v1716
        %v1749 = vpack.c.b16 %v1717, %v1717
        %v1750 = vpack.c.b16 %v1718, %v1718
        %v1751 = vpack.c.b16 %v1719, %v1719
        %v1752 = vpack.c.b16 %v1720, %v1720
        %v1753 = vpack.c.b16 %v1721, %v1721
        %v1754 = vpack.c.b16 %v1722, %v1722
        %v1755 = vpack.c.b16 %v1723, %v1723
        %v1756 = vpack.c.b16 %v1724, %v1724
        %v1757 = vpack.c.b16 %v1725, %v1725
        %v1758 = vpack.c.b16 %v1726, %v1726
        %v1759 = vpack.c.b16 %v1727, %v1727
        %v1760 = vpack.c.b16 %v1728, %v1728
        %v1761 = vpack.c.b16 %v1729, %v1729
        %1794 = vst [vmem:[#allocation2 + $0x1c] sm:$0xf] %v1730
        %1795 = vst [vmem:[#allocation2 + $0x28] sm:$0xf] %v1731
        %1796 = vst [vmem:[#allocation2 + $0x34] sm:$0xf] %v1732
        %1797 = vst [vmem:[#allocation2 + $0x40] sm:$0xf] %v1733
        %1798 = vst [vmem:[#allocation2 + $0x4c] sm:$0xf] %v1734
        %1799 = vst [vmem:[#allocation2 + $0x58] sm:$0xf] %v1735
        %1800 = vst [vmem:[#allocation2 + $0x64] sm:$0xf] %v1736
        %1801 = vst [vmem:[#allocation2 + $0x70] sm:$0xf] %v1737
        %1802 = vst [vmem:[#allocation2 + $0x7c] sm:$0xf] %v1738
        %1803 = vst [vmem:[#allocation2 + $0x88] sm:$0xf] %v1739
        %1804 = vst [vmem:[#allocation2 + $0x94] sm:$0xf] %v1740
        %1805 = vst [vmem:[#allocation2 + $0xa0] sm:$0xf] %v1741
        %1806 = vst [vmem:[#allocation2 + $0xac] sm:$0xf] %v1742
        %1807 = vst [vmem:[#allocation2 + $0xb8] sm:$0xf] %v1743
        %1808 = vst [vmem:[#allocation2 + $0xc4] sm:$0xf] %v1744
        %1809 = vst [vmem:[#allocation2 + $0xd0] sm:$0xf] %v1745
        %1810 = vst [vmem:[#allocation2 + $0xdc] sm:$0xf] %v1746
        %1811 = vst [vmem:[#allocation2 + $0xe8] sm:$0xf] %v1747
        %1812 = vst [vmem:[#allocation2 + $0xf4] sm:$0xf] %v1748
        %1813 = vst [vmem:[#allocation2 + $0x100] sm:$0xf] %v1749
        %1814 = vst [vmem:[#allocation2 + $0x10c] sm:$0xf] %v1750
        %1815 = vst [vmem:[#allocation2 + $0x118] sm:$0xf] %v1751
        %1816 = vst [vmem:[#allocation2 + $0x124] sm:$0xf] %v1752
        %1817 = vst [vmem:[#allocation2 + $0x130] sm:$0xf] %v1753
        %1818 = vst [vmem:[#allocation2 + $0x13c] sm:$0xf] %v1754
        %1819 = vst [vmem:[#allocation2 + $0x148] sm:$0xf] %v1755
        %1820 = vst [vmem:[#allocation2 + $0x154] sm:$0xf] %v1756
        %1821 = vst [vmem:[#allocation2 + $0x160] sm:$0xf] %v1757
        %1822 = vst [vmem:[#allocation2 + $0x16c] sm:$0xf] %v1758
        %1823 = vst [vmem:[#allocation2 + $0x178] sm:$0xf] %v1759
        %1824 = vst [vmem:[#allocation2 + $0x184] sm:$0xf] %v1760
        %1825 = vst [vmem:[#allocation2 + $0x190] sm:$0xf] %v1761
        %v1826 = vpack.c.bf16 %v1475, %v1474
        %v1827 = vpack.c.bf16 %v1477, %v1476
        %v1828 = vpack.c.bf16 %v1479, %v1478
        %v1829 = vpack.c.bf16 %v1481, %v1480
        %v1830 = vpack.c.bf16 %v1483, %v1482
        %v1831 = vpack.c.bf16 %v1485, %v1484
        %v1832 = vpack.c.bf16 %v1487, %v1486
        %v1833 = vpack.c.bf16 %v1489, %v1488
        %v1834 = vpack.c.bf16 %v1491, %v1490
        %v1835 = vpack.c.bf16 %v1493, %v1492
        %v1836 = vpack.c.bf16 %v1495, %v1494
        %v1837 = vpack.c.bf16 %v1497, %v1496
        %v1838 = vpack.c.bf16 %v1499, %v1498
        %v1839 = vpack.c.bf16 %v1501, %v1500
        %v1840 = vpack.c.bf16 %v1503, %v1502
        %v1841 = vpack.c.bf16 %v1505, %v1504
        %v1858 = vunpack.c.l.b16 %v1826
        %v1859 = vunpack.c.h.b16 %v1826
        %v1860 = vunpack.c.l.b16 %v1827
        %v1861 = vunpack.c.h.b16 %v1827
        %v1862 = vunpack.c.l.b16 %v1828
        %v1863 = vunpack.c.h.b16 %v1828
        %v1864 = vunpack.c.l.b16 %v1829
        %v1865 = vunpack.c.h.b16 %v1829
        %v1866 = vunpack.c.l.b16 %v1830
        %v1867 = vunpack.c.h.b16 %v1830
        %v1868 = vunpack.c.l.b16 %v1831
        %v1869 = vunpack.c.h.b16 %v1831
        %v1870 = vunpack.c.l.b16 %v1832
        %v1871 = vunpack.c.h.b16 %v1832
        %v1872 = vunpack.c.l.b16 %v1833
        %v1873 = vunpack.c.h.b16 %v1833
        %v1874 = vunpack.c.l.b16 %v1834
        %v1875 = vunpack.c.h.b16 %v1834
        %v1876 = vunpack.c.l.b16 %v1835
        %v1877 = vunpack.c.h.b16 %v1835
        %v1878 = vunpack.c.l.b16 %v1836
        %v1879 = vunpack.c.h.b16 %v1836
        %v1880 = vunpack.c.l.b16 %v1837
        %v1881 = vunpack.c.h.b16 %v1837
        %v1882 = vunpack.c.l.b16 %v1838
        %v1883 = vunpack.c.h.b16 %v1838
        %v1884 = vunpack.c.l.b16 %v1839
        %v1885 = vunpack.c.h.b16 %v1839
        %v1886 = vunpack.c.l.b16 %v1840
        %v1887 = vunpack.c.h.b16 %v1840
        %v1888 = vunpack.c.l.b16 %v1841
        %v1889 = vunpack.c.h.b16 %v1841
        %v1890 = vpack.c.b16 %v1858, %v1858
        %v1891 = vpack.c.b16 %v1859, %v1859
        %v1892 = vpack.c.b16 %v1860, %v1860
        %v1893 = vpack.c.b16 %v1861, %v1861
        %v1894 = vpack.c.b16 %v1862, %v1862
        %v1895 = vpack.c.b16 %v1863, %v1863
        %v1896 = vpack.c.b16 %v1864, %v1864
        %v1897 = vpack.c.b16 %v1865, %v1865
        %v1898 = vpack.c.b16 %v1866, %v1866
        %v1899 = vpack.c.b16 %v1867, %v1867
        %v1900 = vpack.c.b16 %v1868, %v1868
        %v1901 = vpack.c.b16 %v1869, %v1869
        %v1902 = vpack.c.b16 %v1870, %v1870
        %v1903 = vpack.c.b16 %v1871, %v1871
        %v1904 = vpack.c.b16 %v1872, %v1872
        %v1905 = vpack.c.b16 %v1873, %v1873
        %v1906 = vpack.c.b16 %v1874, %v1874
        %v1907 = vpack.c.b16 %v1875, %v1875
        %v1908 = vpack.c.b16 %v1876, %v1876
        %v1909 = vpack.c.b16 %v1877, %v1877
        %v1910 = vpack.c.b16 %v1878, %v1878
        %v1911 = vpack.c.b16 %v1879, %v1879
        %v1912 = vpack.c.b16 %v1880, %v1880
        %v1913 = vpack.c.b16 %v1881, %v1881
        %v1914 = vpack.c.b16 %v1882, %v1882
        %v1915 = vpack.c.b16 %v1883, %v1883
        %v1916 = vpack.c.b16 %v1884, %v1884
        %v1917 = vpack.c.b16 %v1885, %v1885
        %v1918 = vpack.c.b16 %v1886, %v1886
        %v1919 = vpack.c.b16 %v1887, %v1887
        %v1920 = vpack.c.b16 %v1888, %v1888
        %v1921 = vpack.c.b16 %v1889, %v1889
        %1954 = vst [vmem:[#allocation2 + $0x20] sm:$0xf] %v1890
        %1955 = vst [vmem:[#allocation2 + $0x2c] sm:$0xf] %v1891
        %1956 = vst [vmem:[#allocation2 + $0x38] sm:$0xf] %v1892
        %1957 = vst [vmem:[#allocation2 + $0x44] sm:$0xf] %v1893
        %1958 = vst [vmem:[#allocation2 + $0x50] sm:$0xf] %v1894
        %1959 = vst [vmem:[#allocation2 + $0x5c] sm:$0xf] %v1895
        %1960 = vst [vmem:[#allocation2 + $0x68] sm:$0xf] %v1896
        %1961 = vst [vmem:[#allocation2 + $0x74] sm:$0xf] %v1897
        %1962 = vst [vmem:[#allocation2 + $0x80] sm:$0xf] %v1898
        %1963 = vst [vmem:[#allocation2 + $0x8c] sm:$0xf] %v1899
        %1964 = vst [vmem:[#allocation2 + $0x98] sm:$0xf] %v1900
        %1965 = vst [vmem:[#allocation2 + $0xa4] sm:$0xf] %v1901
        %1966 = vst [vmem:[#allocation2 + $0xb0] sm:$0xf] %v1902
        %1967 = vst [vmem:[#allocation2 + $0xbc] sm:$0xf] %v1903
        %1968 = vst [vmem:[#allocation2 + $0xc8] sm:$0xf] %v1904
        %1969 = vst [vmem:[#allocation2 + $0xd4] sm:$0xf] %v1905
        %1970 = vst [vmem:[#allocation2 + $0xe0] sm:$0xf] %v1906
        %1971 = vst [vmem:[#allocation2 + $0xec] sm:$0xf] %v1907
        %1972 = vst [vmem:[#allocation2 + $0xf8] sm:$0xf] %v1908
        %1973 = vst [vmem:[#allocation2 + $0x104] sm:$0xf] %v1909
        %1974 = vst [vmem:[#allocation2 + $0x110] sm:$0xf] %v1910
        %1975 = vst [vmem:[#allocation2 + $0x11c] sm:$0xf] %v1911
        %1976 = vst [vmem:[#allocation2 + $0x128] sm:$0xf] %v1912
        %1977 = vst [vmem:[#allocation2 + $0x134] sm:$0xf] %v1913
        %1978 = vst [vmem:[#allocation2 + $0x140] sm:$0xf] %v1914
        %1979 = vst [vmem:[#allocation2 + $0x14c] sm:$0xf] %v1915
        %1980 = vst [vmem:[#allocation2 + $0x158] sm:$0xf] %v1916
        %1981 = vst [vmem:[#allocation2 + $0x164] sm:$0xf] %v1917
        %1982 = vst [vmem:[#allocation2 + $0x170] sm:$0xf] %v1918
        %1983 = vst [vmem:[#allocation2 + $0x17c] sm:$0xf] %v1919
        %1984 = vst [vmem:[#allocation2 + $0x188] sm:$0xf] %v1920
        %1985 = vst [vmem:[#allocation2 + $0x194] sm:$0xf] %v1921
        %v1986 = vld [vmem:[#allocation2] sm:$0xff]
        %v1987 = vld [vmem:[#allocation2 + $0x8] sm:$0xf]
        %v1988 = vld [vmem:[#allocation2 + $0xc] sm:$0xff]
        %v1989 = vld [vmem:[#allocation2 + $0x14] sm:$0xf]
        %v1990 = vld [vmem:[#allocation2 + $0x18] sm:$0xff]
        %v1991 = vld [vmem:[#allocation2 + $0x20] sm:$0xf]
        %v1992 = vld [vmem:[#allocation2 + $0x24] sm:$0xff]
        %v1993 = vld [vmem:[#allocation2 + $0x2c] sm:$0xf]
        %v1994 = vld [vmem:[#allocation2 + $0x30] sm:$0xff]
        %v1995 = vld [vmem:[#allocation2 + $0x38] sm:$0xf]
        %v1996 = vld [vmem:[#allocation2 + $0x3c] sm:$0xff]
        %v1997 = vld [vmem:[#allocation2 + $0x44] sm:$0xf]
        %v1998 = vld [vmem:[#allocation2 + $0x48] sm:$0xff]
        %v1999 = vld [vmem:[#allocation2 + $0x50] sm:$0xf]
        %v2000 = vld [vmem:[#allocation2 + $0x54] sm:$0xff]
        %v2001 = vld [vmem:[#allocation2 + $0x5c] sm:$0xf]
        %v2002 = vld [vmem:[#allocation2 + $0x60] sm:$0xff]
        %v2003 = vld [vmem:[#allocation2 + $0x68] sm:$0xf]
        %v2004 = vld [vmem:[#allocation2 + $0x6c] sm:$0xff]
        %v2005 = vld [vmem:[#allocation2 + $0x74] sm:$0xf]
        %v2006 = vld [vmem:[#allocation2 + $0x78] sm:$0xff]
        %v2007 = vld [vmem:[#allocation2 + $0x80] sm:$0xf]
        %v2008 = vld [vmem:[#allocation2 + $0x84] sm:$0xff]
        %v2009 = vld [vmem:[#allocation2 + $0x8c] sm:$0xf]
        %v2010 = vld [vmem:[#allocation2 + $0x90] sm:$0xff]
        %v2011 = vld [vmem:[#allocation2 + $0x98] sm:$0xf]
        %v2012 = vld [vmem:[#allocation2 + $0x9c] sm:$0xff]
        %v2013 = vld [vmem:[#allocation2 + $0xa4] sm:$0xf]
        %v2014 = vld [vmem:[#allocation2 + $0xa8] sm:$0xff]
        %v2015 = vld [vmem:[#allocation2 + $0xb0] sm:$0xf]
        %v2016 = vld [vmem:[#allocation2 + $0xb4] sm:$0xff]
        %v2017 = vld [vmem:[#allocation2 + $0xbc] sm:$0xf]
        %v2018 = vld [vmem:[#allocation2 + $0xc0] sm:$0xff]
        %v2019 = vld [vmem:[#allocation2 + $0xc8] sm:$0xf]
        %v2020 = vld [vmem:[#allocation2 + $0xcc] sm:$0xff]
        %v2021 = vld [vmem:[#allocation2 + $0xd4] sm:$0xf]
        %v2022 = vld [vmem:[#allocation2 + $0xd8] sm:$0xff]
        %v2023 = vld [vmem:[#allocation2 + $0xe0] sm:$0xf]
        %v2024 = vld [vmem:[#allocation2 + $0xe4] sm:$0xff]
        %v2025 = vld [vmem:[#allocation2 + $0xec] sm:$0xf]
        %v2026 = vld [vmem:[#allocation2 + $0xf0] sm:$0xff]
        %v2027 = vld [vmem:[#allocation2 + $0xf8] sm:$0xf]
        %v2028 = vld [vmem:[#allocation2 + $0xfc] sm:$0xff]
        %v2029 = vld [vmem:[#allocation2 + $0x104] sm:$0xf]
        %v2030 = vld [vmem:[#allocation2 + $0x108] sm:$0xff]
        %v2031 = vld [vmem:[#allocation2 + $0x110] sm:$0xf]
        %v2032 = vld [vmem:[#allocation2 + $0x114] sm:$0xff]
        %v2033 = vld [vmem:[#allocation2 + $0x11c] sm:$0xf]
        %v2034 = vld [vmem:[#allocation2 + $0x120] sm:$0xff]
        %v2035 = vld [vmem:[#allocation2 + $0x128] sm:$0xf]
        %v2036 = vld [vmem:[#allocation2 + $0x12c] sm:$0xff]
        %v2037 = vld [vmem:[#allocation2 + $0x134] sm:$0xf]
        %v2038 = vld [vmem:[#allocation2 + $0x138] sm:$0xff]
        %v2039 = vld [vmem:[#allocation2 + $0x140] sm:$0xf]
        %v2040 = vld [vmem:[#allocation2 + $0x144] sm:$0xff]
        %v2041 = vld [vmem:[#allocation2 + $0x14c] sm:$0xf]
        %v2042 = vld [vmem:[#allocation2 + $0x150] sm:$0xff]
        %v2043 = vld [vmem:[#allocation2 + $0x158] sm:$0xf]
        %v2044 = vld [vmem:[#allocation2 + $0x15c] sm:$0xff]
        %v2045 = vld [vmem:[#allocation2 + $0x164] sm:$0xf]
        %v2046 = vld [vmem:[#allocation2 + $0x168] sm:$0xff]
        %v2047 = vld [vmem:[#allocation2 + $0x170] sm:$0xf]
        %v2048 = vld [vmem:[#allocation2 + $0x174] sm:$0xff]
        %v2049 = vld [vmem:[#allocation2 + $0x17c] sm:$0xf]
        %v2050 = vld [vmem:[#allocation9] sm:$0xf]
        %v2051 = vld [vmem:[#allocation9 + $0x4] sm:$0xf]
        %v2052 = vld [vmem:[#allocation9 + $0x8] sm:$0xf]
        %v2053 = vld [vmem:[#allocation9 + $0xc] sm:$0xf]
        %v2054 = vld [vmem:[#allocation9 + $0x10] sm:$0xf]
        %v2055 = vld [vmem:[#allocation9 + $0x14] sm:$0xf]
        %v2056 = vld [vmem:[#allocation9 + $0x18] sm:$0xf]
        %v2057 = vld [vmem:[#allocation9 + $0x1c] sm:$0xf]
        %v2058 = vld [vmem:[#allocation9 + $0x20] sm:$0xf]
        %v2059 = vld [vmem:[#allocation9 + $0x24] sm:$0xf]
        %v2060 = vld [vmem:[#allocation9 + $0x28] sm:$0xf]
        %v2061 = vld [vmem:[#allocation9 + $0x2c] sm:$0xf]
        %v2062 = vld [vmem:[#allocation9 + $0x30] sm:$0xf]
        %v2063 = vld [vmem:[#allocation9 + $0x34] sm:$0xf]
        %v2064 = vld [vmem:[#allocation9 + $0x38] sm:$0xf]
        %v2065 = vld [vmem:[#allocation9 + $0x3c] sm:$0xf]
        %v2066 = vld [vmem:[#allocation9 + $0x40] sm:$0xf]
        %v2067 = vld [vmem:[#allocation9 + $0x44] sm:$0xf]
        %v2068 = vld [vmem:[#allocation9 + $0x48] sm:$0xf]
        %v2069 = vld [vmem:[#allocation9 + $0x4c] sm:$0xf]
        %v2070 = vld [vmem:[#allocation9 + $0x50] sm:$0xf]
        %v2071 = vld [vmem:[#allocation9 + $0x54] sm:$0xf]
        %v2072 = vld [vmem:[#allocation9 + $0x58] sm:$0xf]
        %v2073 = vld [vmem:[#allocation9 + $0x5c] sm:$0xf]
        %v2074 = vld [vmem:[#allocation9 + $0x60] sm:$0xf]
        %v2075 = vld [vmem:[#allocation9 + $0x64] sm:$0xf]
        %v2076 = vld [vmem:[#allocation9 + $0x68] sm:$0xf]
        %v2077 = vld [vmem:[#allocation9 + $0x6c] sm:$0xf]
        %v2078 = vld [vmem:[#allocation9 + $0x70] sm:$0xf]
        %v2079 = vld [vmem:[#allocation9 + $0x74] sm:$0xf]
        %v2080 = vld [vmem:[#allocation9 + $0x78] sm:$0xf]
        %v2081 = vld [vmem:[#allocation9 + $0x7c] sm:$0xf]
        %v2082 = vld [vmem:[#allocation9 + $0x80] sm:$0xf]
        %v2083 = vld [vmem:[#allocation9 + $0x84] sm:$0xf]
        %v2084 = vld [vmem:[#allocation9 + $0x88] sm:$0xf]
        %v2085 = vld [vmem:[#allocation9 + $0x8c] sm:$0xf]
        %v2086 = vld [vmem:[#allocation9 + $0x90] sm:$0xf]
        %v2087 = vld [vmem:[#allocation9 + $0x94] sm:$0xf]
        %v2088 = vld [vmem:[#allocation9 + $0x98] sm:$0xf]
        %v2089 = vld [vmem:[#allocation9 + $0x9c] sm:$0xf]
        %v2090 = vld [vmem:[#allocation9 + $0xa0] sm:$0xf]
        %v2091 = vld [vmem:[#allocation9 + $0xa4] sm:$0xf]
        %v2092 = vld [vmem:[#allocation9 + $0xa8] sm:$0xf]
        %v2093 = vld [vmem:[#allocation9 + $0xac] sm:$0xf]
        %v2094 = vld [vmem:[#allocation9 + $0xb0] sm:$0xf]
        %v2095 = vld [vmem:[#allocation9 + $0xb4] sm:$0xf]
        %v2096 = vld [vmem:[#allocation9 + $0xb8] sm:$0xf]
        %v2097 = vld [vmem:[#allocation9 + $0xbc] sm:$0xf]
        %v2098 = vld [vmem:[#allocation2 + $0x180] sm:$0xff]
        %v2099 = vld [vmem:[#allocation2 + $0x188] sm:$0xf]
        %v2100 = vld [vmem:[#allocation2 + $0x18c] sm:$0xff]
        %v2101 = vld [vmem:[#allocation2 + $0x194] sm:$0xf]
        %s2102 = scalar_lea.vmem [#allocation9], 192
        %v2103 = vld [vmem:[%s2102] sm:$0xf]
        %v2104 = vld [vmem:[%s2102 + $0x4] sm:$0xf]
        %v2105 = vld [vmem:[%s2102 + $0x8] sm:$0xf]
        %v2106 = vld [vmem:[%s2102 + $0xc] sm:$0xf]
        %v2107 = vld [vmem:[%s2102 + $0x10] sm:$0xf]
        %v2108 = vld [vmem:[%s2102 + $0x14] sm:$0xf]
        %v2109 = vld [vmem:[%s2102 + $0x18] sm:$0xf]
        %v2110 = vld [vmem:[%s2102 + $0x1c] sm:$0xf]
        %v2111 = vld [vmem:[%s2102 + $0x20] sm:$0xf]
        %v2112 = vld [vmem:[%s2102 + $0x24] sm:$0xf]
        %v2113 = vld [vmem:[%s2102 + $0x28] sm:$0xf]
        %v2114 = vld [vmem:[%s2102 + $0x2c] sm:$0xf]
        %v2115 = vld [vmem:[%s2102 + $0x30] sm:$0xf]
        %v2116 = vld [vmem:[%s2102 + $0x34] sm:$0xf]
        %v2117 = vld [vmem:[%s2102 + $0x38] sm:$0xf]
        %v2118 = vld [vmem:[%s2102 + $0x3c] sm:$0xf]
        %v2119 = vld [vmem:[%s2102 + $0x40] sm:$0xf]
        %v2120 = vld [vmem:[%s2102 + $0x44] sm:$0xf]
        %v2121 = vld [vmem:[%s2102 + $0x48] sm:$0xf]
        %v2122 = vld [vmem:[%s2102 + $0x4c] sm:$0xf]
        %v2123 = vld [vmem:[%s2102 + $0x50] sm:$0xf]
        %v2124 = vld [vmem:[%s2102 + $0x54] sm:$0xf]
        %v2125 = vld [vmem:[%s2102 + $0x58] sm:$0xf]
        %v2126 = vld [vmem:[%s2102 + $0x5c] sm:$0xf]
        %v2127 = vld [vmem:[%s2102 + $0x60] sm:$0xf]
        %v2128 = vld [vmem:[%s2102 + $0x64] sm:$0xf]
        %v2129 = vld [vmem:[%s2102 + $0x68] sm:$0xf]
        %v2130 = vld [vmem:[%s2102 + $0x6c] sm:$0xf]
        %v2131 = vld [vmem:[%s2102 + $0x70] sm:$0xf]
        %v2132 = vld [vmem:[%s2102 + $0x74] sm:$0xf]
        %v2133 = vld [vmem:[%s2102 + $0x78] sm:$0xf]
        %v2134 = vld [vmem:[%s2102 + $0x7c] sm:$0xf]
        %v2135 = vld [vmem:[%s2102 + $0x80] sm:$0xf]
        %v2136 = vld [vmem:[%s2102 + $0x84] sm:$0xf]
        %v2137 = vld [vmem:[%s2102 + $0x88] sm:$0xf]
        %v2138 = vld [vmem:[%s2102 + $0x8c] sm:$0xf]
        %v2139 = vld [vmem:[%s2102 + $0x90] sm:$0xf]
        %v2140 = vld [vmem:[%s2102 + $0x94] sm:$0xf]
        %v2141 = vld [vmem:[%s2102 + $0x98] sm:$0xf]
        %v2142 = vld [vmem:[%s2102 + $0x9c] sm:$0xf]
        %v2143 = vld [vmem:[%s2102 + $0xa0] sm:$0xf]
        %v2144 = vld [vmem:[%s2102 + $0xa4] sm:$0xf]
        %v2145 = vld [vmem:[%s2102 + $0xa8] sm:$0xf]
        %v2146 = vld [vmem:[%s2102 + $0xac] sm:$0xf]
        %v2147 = vld [vmem:[%s2102 + $0xb0] sm:$0xf]
        %v2148 = vld [vmem:[%s2102 + $0xb4] sm:$0xf]
        %v2149 = vld [vmem:[%s2102 + $0xb8] sm:$0xf]
        %v2150 = vld [vmem:[%s2102 + $0xbc] sm:$0xf]
        %v2215 = vunpack.c.l.b16 %v1990
        %v2216 = vunpack.c.h.b16 %v1990
        %v2217 = vunpack.c.l.b16 %v1991
        %v2218 = vunpack.c.l.b16 %v1992
        %v2219 = vunpack.c.h.b16 %v1992
        %v2220 = vunpack.c.l.b16 %v1993
        %v2221 = vunpack.c.l.b16 %v1994
        %v2222 = vunpack.c.h.b16 %v1994
        %v2223 = vunpack.c.l.b16 %v1995
        %v2224 = vunpack.c.l.b16 %v1996
        %v2225 = vunpack.c.h.b16 %v1996
        %v2226 = vunpack.c.l.b16 %v1997
        %v2227 = vunpack.c.l.b16 %v1998
        %v2228 = vunpack.c.h.b16 %v1998
        %v2229 = vunpack.c.l.b16 %v1999
        %v2230 = vunpack.c.l.b16 %v2000
        %v2231 = vunpack.c.h.b16 %v2000
        %v2232 = vunpack.c.l.b16 %v2001
        %v2233 = vunpack.c.l.b16 %v2002
        %v2234 = vunpack.c.h.b16 %v2002
        %v2235 = vunpack.c.l.b16 %v2003
        %v2236 = vunpack.c.l.b16 %v2004
        %v2237 = vunpack.c.h.b16 %v2004
        %v2238 = vunpack.c.l.b16 %v2005
        %v2239 = vunpack.c.l.b16 %v2006
        %v2240 = vunpack.c.h.b16 %v2006
        %v2241 = vunpack.c.l.b16 %v2007
        %v2242 = vunpack.c.l.b16 %v2008
        %v2243 = vunpack.c.h.b16 %v2008
        %v2244 = vunpack.c.l.b16 %v2009
        %v2245 = vunpack.c.l.b16 %v2010
        %v2246 = vunpack.c.h.b16 %v2010
        %v2247 = vunpack.c.l.b16 %v2011
        %v2248 = vunpack.c.l.b16 %v2012
        %v2249 = vunpack.c.h.b16 %v2012
        %v2250 = vunpack.c.l.b16 %v2013
        %v2251 = vunpack.c.l.b16 %v2014
        %v2252 = vunpack.c.h.b16 %v2014
        %v2253 = vunpack.c.l.b16 %v2015
        %v2254 = vunpack.c.l.b16 %v2016
        %v2255 = vunpack.c.h.b16 %v2016
        %v2256 = vunpack.c.l.b16 %v2017
        %v2257 = vunpack.c.l.b16 %v2018
        %v2258 = vunpack.c.h.b16 %v2018
        %v2259 = vunpack.c.l.b16 %v2019
        %v2260 = vunpack.c.l.b16 %v2020
        %v2261 = vunpack.c.h.b16 %v2020
        %v2262 = vunpack.c.l.b16 %v2021
        %v2263 = vunpack.c.l.b16 %v2022
        %v2264 = vunpack.c.h.b16 %v2022
        %v2265 = vunpack.c.l.b16 %v2023
        %v2266 = vunpack.c.l.b16 %v2024
        %v2267 = vunpack.c.h.b16 %v2024
        %v2268 = vunpack.c.l.b16 %v2025
        %v2269 = vunpack.c.l.b16 %v2026
        %v2270 = vunpack.c.h.b16 %v2026
        %v2271 = vunpack.c.l.b16 %v2027
        %v2272 = vunpack.c.l.b16 %v2028
        %v2273 = vunpack.c.h.b16 %v2028
        %v2274 = vunpack.c.l.b16 %v2029
        %v2275 = vunpack.c.l.b16 %v2030
        %v2276 = vunpack.c.h.b16 %v2030
        %v2277 = vunpack.c.l.b16 %v2031
        %v2278 = vunpack.c.l.b16 %v2032
        %v2279 = vunpack.c.h.b16 %v2032
        %v2280 = vunpack.c.l.b16 %v2033
        %v2281 = vunpack.c.l.b16 %v2034
        %v2282 = vunpack.c.h.b16 %v2034
        %v2283 = vunpack.c.l.b16 %v2035
        %v2284 = vunpack.c.l.b16 %v2036
        %v2285 = vunpack.c.h.b16 %v2036
        %v2286 = vunpack.c.l.b16 %v2037
        %v2287 = vunpack.c.l.b16 %v2038
        %v2288 = vunpack.c.h.b16 %v2038
        %v2289 = vunpack.c.l.b16 %v2039
        %v2290 = vunpack.c.l.b16 %v2040
        %v2291 = vunpack.c.h.b16 %v2040
        %v2292 = vunpack.c.l.b16 %v2041
        %v2293 = vunpack.c.l.b16 %v2042
        %v2294 = vunpack.c.h.b16 %v2042
        %v2295 = vunpack.c.l.b16 %v2043
        %v2296 = vunpack.c.l.b16 %v2044
        %v2297 = vunpack.c.h.b16 %v2044
        %v2298 = vunpack.c.l.b16 %v2045
        %v2299 = vunpack.c.l.b16 %v2046
        %v2300 = vunpack.c.h.b16 %v2046
        %v2301 = vunpack.c.l.b16 %v2047
        %v2302 = vunpack.c.l.b16 %v2048
        %v2303 = vunpack.c.h.b16 %v2048
        %v2304 = vunpack.c.l.b16 %v2049
        %v2305 = vunpack.c.l.b16 %v2098
        %v2306 = vunpack.c.h.b16 %v2098
        %v2307 = vunpack.c.l.b16 %v2099
        %v2308 = vunpack.c.l.b16 %v2100
        %v2309 = vunpack.c.h.b16 %v2100
        %v2310 = vunpack.c.l.b16 %v2101
        %v2311 = vpack.c.b16 %v2218, %v2215
        %v2312 = vpack.c.b16 %v2219, %v2216
        %v2313 = vpack.c.b16 %v2220, %v2217
        %v2314 = vpack.c.b16 %v2224, %v2221
        %v2315 = vpack.c.b16 %v2225, %v2222
        %v2316 = vpack.c.b16 %v2226, %v2223
        %v2317 = vpack.c.b16 %v2230, %v2227
        %v2318 = vpack.c.b16 %v2231, %v2228
        %v2319 = vpack.c.b16 %v2232, %v2229
        %v2320 = vpack.c.b16 %v2236, %v2233
        %v2321 = vpack.c.b16 %v2237, %v2234
        %v2322 = vpack.c.b16 %v2238, %v2235
        %v2323 = vpack.c.b16 %v2242, %v2239
        %v2324 = vpack.c.b16 %v2243, %v2240
        %v2325 = vpack.c.b16 %v2244, %v2241
        %v2326 = vpack.c.b16 %v2248, %v2245
        %v2327 = vpack.c.b16 %v2249, %v2246
        %v2328 = vpack.c.b16 %v2250, %v2247
        %v2329 = vpack.c.b16 %v2254, %v2251
        %v2330 = vpack.c.b16 %v2255, %v2252
        %v2331 = vpack.c.b16 %v2256, %v2253
        %v2332 = vpack.c.b16 %v2260, %v2257
        %v2333 = vpack.c.b16 %v2261, %v2258
        %v2334 = vpack.c.b16 %v2262, %v2259
        %v2335 = vpack.c.b16 %v2266, %v2263
        %v2336 = vpack.c.b16 %v2267, %v2264
        %v2337 = vpack.c.b16 %v2268, %v2265
        %v2338 = vpack.c.b16 %v2272, %v2269
        %v2339 = vpack.c.b16 %v2273, %v2270
        %v2340 = vpack.c.b16 %v2274, %v2271
        %v2341 = vpack.c.b16 %v2278, %v2275
        %v2342 = vpack.c.b16 %v2279, %v2276
        %v2343 = vpack.c.b16 %v2280, %v2277
        %v2344 = vpack.c.b16 %v2284, %v2281
        %v2345 = vpack.c.b16 %v2285, %v2282
        %v2346 = vpack.c.b16 %v2286, %v2283
        %v2347 = vpack.c.b16 %v2290, %v2287
        %v2348 = vpack.c.b16 %v2291, %v2288
        %v2349 = vpack.c.b16 %v2292, %v2289
        %v2350 = vpack.c.b16 %v2296, %v2293
        %v2351 = vpack.c.b16 %v2297, %v2294
        %v2352 = vpack.c.b16 %v2298, %v2295
        %v2353 = vpack.c.b16 %v2302, %v2299
        %v2354 = vpack.c.b16 %v2303, %v2300
        %v2355 = vpack.c.b16 %v2304, %v2301
        %v2356 = vpack.c.b16 %v2308, %v2305
        %v2357 = vpack.c.b16 %v2309, %v2306
        %v2358 = vpack.c.b16 %v2310, %v2307
        %v2455 = vunpack.c.l.b16 %v2103
        %v2456 = vunpack.c.l.b16 %v2104
        %v2457 = vunpack.c.l.b16 %v2105
        %v2458 = vunpack.c.l.b16 %v2106
        %v2459 = vunpack.c.l.b16 %v2107
        %v2460 = vunpack.c.l.b16 %v2108
        %v2461 = vunpack.c.l.b16 %v2109
        %v2462 = vunpack.c.l.b16 %v2110
        %v2463 = vunpack.c.l.b16 %v2111
        %v2464 = vunpack.c.l.b16 %v2112
        %v2465 = vunpack.c.l.b16 %v2113
        %v2466 = vunpack.c.l.b16 %v2114
        %v2467 = vunpack.c.l.b16 %v2115
        %v2468 = vunpack.c.l.b16 %v2116
        %v2469 = vunpack.c.l.b16 %v2117
        %v2470 = vunpack.c.l.b16 %v2118
        %v2471 = vunpack.c.l.b16 %v2119
        %v2472 = vunpack.c.l.b16 %v2120
        %v2473 = vunpack.c.l.b16 %v2121
        %v2474 = vunpack.c.l.b16 %v2122
        %v2475 = vunpack.c.l.b16 %v2123
        %v2476 = vunpack.c.l.b16 %v2124
        %v2477 = vunpack.c.l.b16 %v2125
        %v2478 = vunpack.c.l.b16 %v2126
        %v2479 = vunpack.c.l.b16 %v2127
        %v2480 = vunpack.c.l.b16 %v2128
        %v2481 = vunpack.c.l.b16 %v2129
        %v2482 = vunpack.c.l.b16 %v2130
        %v2483 = vunpack.c.l.b16 %v2131
        %v2484 = vunpack.c.l.b16 %v2132
        %v2485 = vunpack.c.l.b16 %v2133
        %v2486 = vunpack.c.l.b16 %v2134
        %v2487 = vunpack.c.l.b16 %v2135
        %v2488 = vunpack.c.l.b16 %v2136
        %v2489 = vunpack.c.l.b16 %v2137
        %v2490 = vunpack.c.l.b16 %v2138
        %v2491 = vunpack.c.l.b16 %v2139
        %v2492 = vunpack.c.l.b16 %v2140
        %v2493 = vunpack.c.l.b16 %v2141
        %v2494 = vunpack.c.l.b16 %v2142
        %v2495 = vunpack.c.l.b16 %v2143
        %v2496 = vunpack.c.l.b16 %v2144
        %v2497 = vunpack.c.l.b16 %v2145
        %v2498 = vunpack.c.l.b16 %v2146
        %v2499 = vunpack.c.l.b16 %v2147
        %v2500 = vunpack.c.l.b16 %v2148
        %v2501 = vunpack.c.l.b16 %v2149
        %v2502 = vunpack.c.l.b16 %v2150
        %v2503 = vpack.c.b16 %v2456, %v2455
        %v2504 = vpack.c.b16 %v2458, %v2457
        %v2505 = vpack.c.b16 %v2460, %v2459
        %v2506 = vpack.c.b16 %v2462, %v2461
        %v2507 = vpack.c.b16 %v2464, %v2463
        %v2508 = vpack.c.b16 %v2466, %v2465
        %v2509 = vpack.c.b16 %v2468, %v2467
        %v2510 = vpack.c.b16 %v2470, %v2469
        %v2511 = vpack.c.b16 %v2472, %v2471
        %v2512 = vpack.c.b16 %v2474, %v2473
        %v2513 = vpack.c.b16 %v2476, %v2475
        %v2514 = vpack.c.b16 %v2478, %v2477
        %v2515 = vpack.c.b16 %v2480, %v2479
        %v2516 = vpack.c.b16 %v2482, %v2481
        %v2517 = vpack.c.b16 %v2484, %v2483
        %v2518 = vpack.c.b16 %v2486, %v2485
        %v2519 = vpack.c.b16 %v2488, %v2487
        %v2520 = vpack.c.b16 %v2490, %v2489
        %v2521 = vpack.c.b16 %v2492, %v2491
        %v2522 = vpack.c.b16 %v2494, %v2493
        %v2523 = vpack.c.b16 %v2496, %v2495
        %v2524 = vpack.c.b16 %v2498, %v2497
        %v2525 = vpack.c.b16 %v2500, %v2499
        %v2526 = vpack.c.b16 %v2502, %v2501
        %2551 = vmatprep.subr.bf16.mxu0 0
        %2552 = vmatpush1.bf16.msra.mxu0 %v2510
        %2553 = vmatprep.subr.bf16.mxu0 0
        %2554 = vmatpush1.bf16.msra.mxu0 %v2509
        %2555 = vmatprep.subr.bf16.mxu0 0
        %2556 = vmatpush1.bf16.msra.mxu0 %v2508
        %2557 = vmatprep.subr.bf16.mxu0 0
        %2558 = vmatpush1.bf16.msra.mxu0 %v2507
        %2559 = vmatprep.subr.bf16.mxu0 0
        %2560 = vmatpush1.bf16.msra.mxu0 %v2506
        %2561 = vmatprep.subr.bf16.mxu0 0
        %2562 = vmatpush1.bf16.msra.mxu0 %v2505
        %2563 = vmatprep.subr.bf16.mxu0 0
        %2564 = vmatpush1.bf16.msra.mxu0 %v2504
        %2565 = vmatprep.subr.bf16.mxu0 0
        %2566 = vmatpush1.bf16.msra.mxu0 %v2503
        %2567 = vmatprep.subr.bf16.mxu0 0
        %2568 = vmatpush2.bf16.msra.mxu0 %v2518
        %2569 = vmatprep.subr.bf16.mxu0 0
        %2570 = vmatpush2.bf16.msra.mxu0 %v2517
        %2571 = vmatprep.subr.bf16.mxu0 0
        %2572 = vmatpush2.bf16.msra.mxu0 %v2516
        %2573 = vmatprep.subr.bf16.mxu0 0
        %2574 = vmatpush2.bf16.msra.mxu0 %v2515
        %2575 = vmatprep.subr.bf16.mxu0 0
        %2576 = vmatpush2.bf16.msra.mxu0 %v2514
        %2577 = vmatprep.subr.bf16.mxu0 0
        %2578 = vmatpush2.bf16.msra.mxu0 %v2513
        %2579 = vmatprep.subr.bf16.mxu0 0
        %2580 = vmatpush2.bf16.msra.mxu0 %v2512
        %2581 = vmatprep.subr.bf16.mxu0 0
        %2582 = vmatpush2.bf16.msra.mxu0 %v2511
        %2583 = vmatprep.mubr.bf16.mxu0 %v2312
        %2584 = vmatmul.mubr.bf16.gmra.mxu0 %v2311
        %v2585 = vpop.f32.mrf.mxu0
        %v2586 = vadd.f32 0.0, %v2585
        %v2587 = vpop.f32.mrf.mxu0
        %v2588 = vpop.f32.mrf.mxu0
        %v2589 = vadd.f32 0.0, %v2588
        %v2590 = vpop.f32.mrf.mxu0
        %2591 = vmatprep.mubr.bf16.mxu0 %v2315
        %2592 = vmatmul.mubr.bf16.gmra.mxu0 %v2314
        %v2593 = vpop.f32.mrf.mxu0
        %v2594 = vadd.f32 0.0, %v2593
        %v2595 = vpop.f32.mrf.mxu0
        %v2596 = vpop.f32.mrf.mxu0
        %v2597 = vadd.f32 0.0, %v2596
        %v2598 = vpop.f32.mrf.mxu0
        %2599 = vmatprep.mubr.bf16.mxu0 %v2318
        %2600 = vmatmul.mubr.bf16.gmra.mxu0 %v2317
        %v2601 = vpop.f32.mrf.mxu0
        %v2602 = vadd.f32 0.0, %v2601
        %v2603 = vpop.f32.mrf.mxu0
        %v2604 = vpop.f32.mrf.mxu0
        %v2605 = vadd.f32 0.0, %v2604
        %v2606 = vpop.f32.mrf.mxu0
        %2607 = vmatprep.mubr.bf16.mxu0 %v2321
        %2608 = vmatmul.mubr.bf16.gmra.mxu0 %v2320
        %v2609 = vpop.f32.mrf.mxu0
        %v2610 = vadd.f32 0.0, %v2609
        %v2611 = vpop.f32.mrf.mxu0
        %v2612 = vpop.f32.mrf.mxu0
        %v2613 = vadd.f32 0.0, %v2612
        %v2614 = vpop.f32.mrf.mxu0
        %2615 = vmatprep.mubr.bf16.mxu0 %v2324
        %2616 = vmatmul.mubr.bf16.gmra.mxu0 %v2323
        %v2617 = vpop.f32.mrf.mxu0
        %v2618 = vadd.f32 0.0, %v2617
        %v2619 = vpop.f32.mrf.mxu0
        %v2620 = vpop.f32.mrf.mxu0
        %v2621 = vadd.f32 0.0, %v2620
        %v2622 = vpop.f32.mrf.mxu0
        %2623 = vmatprep.mubr.bf16.mxu0 %v2327
        %2624 = vmatmul.mubr.bf16.gmra.mxu0 %v2326
        %v2625 = vpop.f32.mrf.mxu0
        %v2626 = vadd.f32 0.0, %v2625
        %v2627 = vpop.f32.mrf.mxu0
        %v2628 = vpop.f32.mrf.mxu0
        %v2629 = vadd.f32 0.0, %v2628
        %v2630 = vpop.f32.mrf.mxu0
        %2631 = vmatprep.mubr.bf16.mxu0 %v2330
        %2632 = vmatmul.mubr.bf16.gmra.mxu0 %v2329
        %v2633 = vpop.f32.mrf.mxu0
        %v2634 = vadd.f32 0.0, %v2633
        %v2635 = vpop.f32.mrf.mxu0
        %v2636 = vpop.f32.mrf.mxu0
        %v2637 = vadd.f32 0.0, %v2636
        %v2638 = vpop.f32.mrf.mxu0
        %2639 = vmatprep.mubr.bf16.mxu0 %v2333
        %2640 = vmatmul.mubr.bf16.gmra.mxu0 %v2332
        %v2641 = vpop.f32.mrf.mxu0
        %v2642 = vadd.f32 0.0, %v2641
        %v2643 = vpop.f32.mrf.mxu0
        %v2644 = vpop.f32.mrf.mxu0
        %v2645 = vadd.f32 0.0, %v2644
        %v2646 = vpop.f32.mrf.mxu0
        %2647 = vmatprep.mubr.bf16.mxu0 %v2336
        %2648 = vmatmul.mubr.bf16.gmra.mxu0 %v2335
        %v2649 = vpop.f32.mrf.mxu0
        %v2650 = vadd.f32 0.0, %v2649
        %v2651 = vpop.f32.mrf.mxu0
        %v2652 = vpop.f32.mrf.mxu0
        %v2653 = vadd.f32 0.0, %v2652
        %v2654 = vpop.f32.mrf.mxu0
        %2655 = vmatprep.mubr.bf16.mxu0 %v2339
        %2656 = vmatmul.mubr.bf16.gmra.mxu0 %v2338
        %v2657 = vpop.f32.mrf.mxu0
        %v2658 = vadd.f32 0.0, %v2657
        %v2659 = vpop.f32.mrf.mxu0
        %v2660 = vpop.f32.mrf.mxu0
        %v2661 = vadd.f32 0.0, %v2660
        %v2662 = vpop.f32.mrf.mxu0
        %2663 = vmatprep.mubr.bf16.mxu0 %v2342
        %2664 = vmatmul.mubr.bf16.gmra.mxu0 %v2341
        %v2665 = vpop.f32.mrf.mxu0
        %v2666 = vadd.f32 0.0, %v2665
        %v2667 = vpop.f32.mrf.mxu0
        %v2668 = vpop.f32.mrf.mxu0
        %v2669 = vadd.f32 0.0, %v2668
        %v2670 = vpop.f32.mrf.mxu0
        %2671 = vmatprep.mubr.bf16.mxu0 %v2345
        %2672 = vmatmul.mubr.bf16.gmra.mxu0 %v2344
        %v2673 = vpop.f32.mrf.mxu0
        %v2674 = vadd.f32 0.0, %v2673
        %v2675 = vpop.f32.mrf.mxu0
        %v2676 = vpop.f32.mrf.mxu0
        %v2677 = vadd.f32 0.0, %v2676
        %v2678 = vpop.f32.mrf.mxu0
        %2679 = vmatprep.mubr.bf16.mxu0 %v2348
        %2680 = vmatmul.mubr.bf16.gmra.mxu0 %v2347
        %v2681 = vpop.f32.mrf.mxu0
        %v2682 = vadd.f32 0.0, %v2681
        %v2683 = vpop.f32.mrf.mxu0
        %v2684 = vpop.f32.mrf.mxu0
        %v2685 = vadd.f32 0.0, %v2684
        %v2686 = vpop.f32.mrf.mxu0
        %2687 = vmatprep.mubr.bf16.mxu0 %v2351
        %2688 = vmatmul.mubr.bf16.gmra.mxu0 %v2350
        %v2689 = vpop.f32.mrf.mxu0
        %v2690 = vadd.f32 0.0, %v2689
        %v2691 = vpop.f32.mrf.mxu0
        %v2692 = vpop.f32.mrf.mxu0
        %v2693 = vadd.f32 0.0, %v2692
        %v2694 = vpop.f32.mrf.mxu0
        %2695 = vmatprep.mubr.bf16.mxu0 %v2354
        %2696 = vmatmul.mubr.bf16.gmra.mxu0 %v2353
        %v2697 = vpop.f32.mrf.mxu0
        %v2698 = vadd.f32 0.0, %v2697
        %v2699 = vpop.f32.mrf.mxu0
        %v2700 = vpop.f32.mrf.mxu0
        %v2701 = vadd.f32 0.0, %v2700
        %v2702 = vpop.f32.mrf.mxu0
        %2703 = vmatprep.mubr.bf16.mxu0 %v2357
        %2704 = vmatmul.mubr.bf16.gmra.mxu0 %v2356
        %v2705 = vpop.f32.mrf.mxu0
        %v2706 = vadd.f32 0.0, %v2705
        %v2707 = vpop.f32.mrf.mxu0
        %v2708 = vpop.f32.mrf.mxu0
        %v2709 = vadd.f32 0.0, %v2708
        %v2710 = vpop.f32.mrf.mxu0
        %2711 = vdwg.mxu0
        %2712 = vmatprep.subr.bf16.mxu0 0
        %2713 = vmatpush1.bf16.msra.mxu0 %v2526
        %2714 = vmatprep.subr.bf16.mxu0 0
        %2715 = vmatpush1.bf16.msra.mxu0 %v2525
        %2716 = vmatprep.subr.bf16.mxu0 0
        %2717 = vmatpush1.bf16.msra.mxu0 %v2524
        %2718 = vmatprep.subr.bf16.mxu0 0
        %2719 = vmatpush1.bf16.msra.mxu0 %v2523
        %2720 = vmatprep.subr.bf16.mxu0 0
        %2721 = vmatpush1.bf16.msra.mxu0 %v2522
        %2722 = vmatprep.subr.bf16.mxu0 0
        %2723 = vmatpush1.bf16.msra.mxu0 %v2521
        %2724 = vmatprep.subr.bf16.mxu0 0
        %2725 = vmatpush1.bf16.msra.mxu0 %v2520
        %2726 = vmatprep.subr.bf16.mxu0 0
        %2727 = vmatpush1.bf16.msra.mxu0 %v2519
        %2728 = vmatprep.subr.bf16.mxu0 0
        %2729 = vmatpush2.bf16.msra.mxu0 0
        %2730 = vmatprep.subr.bf16.mxu0 0
        %2731 = vmatpush2.bf16.msra.mxu0 0
        %2732 = vmatprep.subr.bf16.mxu0 0
        %2733 = vmatpush2.bf16.msra.mxu0 0
        %2734 = vmatprep.subr.bf16.mxu0 0
        %2735 = vmatpush2.bf16.msra.mxu0 0
        %2736 = vmatprep.subr.bf16.mxu0 0
        %2737 = vmatpush2.bf16.msra.mxu0 0
        %2738 = vmatprep.subr.bf16.mxu0 0
        %2739 = vmatpush2.bf16.msra.mxu0 0
        %2740 = vmatprep.subr.bf16.mxu0 0
        %2741 = vmatpush2.bf16.msra.mxu0 0
        %2742 = vmatprep.subr.bf16.mxu0 0
        %2743 = vmatpush2.bf16.msra.mxu0 0
        %2744 = vmatprep.mubr.bf16.mxu0 0
        %2745 = vmatmul.mubr.bf16.gmra.mxu0 %v2313
        %v2746 = vpop.f32.mrf.mxu0
        %v2747 = vadd.f32 %v2586, %v2746
        %v2748 = vpop.f32.mrf.mxu0
        %v2749 = vpop.f32.mrf.mxu0
        %v2750 = vadd.f32 %v2589, %v2749
        %v2751 = vpop.f32.mrf.mxu0
        %2752 = vmatprep.mubr.bf16.mxu0 0
        %2753 = vmatmul.mubr.bf16.gmra.mxu0 %v2316
        %v2754 = vpop.f32.mrf.mxu0
        %v2755 = vadd.f32 %v2594, %v2754
        %v2756 = vpop.f32.mrf.mxu0
        %v2757 = vpop.f32.mrf.mxu0
        %v2758 = vadd.f32 %v2597, %v2757
        %v2759 = vpop.f32.mrf.mxu0
        %2760 = vmatprep.mubr.bf16.mxu0 0
        %2761 = vmatmul.mubr.bf16.gmra.mxu0 %v2319
        %v2762 = vpop.f32.mrf.mxu0
        %v2763 = vadd.f32 %v2602, %v2762
        %v2764 = vpop.f32.mrf.mxu0
        %v2765 = vpop.f32.mrf.mxu0
        %v2766 = vadd.f32 %v2605, %v2765
        %v2767 = vpop.f32.mrf.mxu0
        %2768 = vmatprep.mubr.bf16.mxu0 0
        %2769 = vmatmul.mubr.bf16.gmra.mxu0 %v2322
        %v2770 = vpop.f32.mrf.mxu0
        %v2771 = vadd.f32 %v2610, %v2770
        %v2772 = vpop.f32.mrf.mxu0
        %v2773 = vpop.f32.mrf.mxu0
        %v2774 = vadd.f32 %v2613, %v2773
        %v2775 = vpop.f32.mrf.mxu0
        %2776 = vmatprep.mubr.bf16.mxu0 0
        %2777 = vmatmul.mubr.bf16.gmra.mxu0 %v2325
        %v2778 = vpop.f32.mrf.mxu0
        %v2779 = vadd.f32 %v2618, %v2778
        %v2780 = vpop.f32.mrf.mxu0
        %v2781 = vpop.f32.mrf.mxu0
        %v2782 = vadd.f32 %v2621, %v2781
        %v2783 = vpop.f32.mrf.mxu0
        %2784 = vmatprep.mubr.bf16.mxu0 0
        %2785 = vmatmul.mubr.bf16.gmra.mxu0 %v2328
        %v2786 = vpop.f32.mrf.mxu0
        %v2787 = vadd.f32 %v2626, %v2786
        %v2788 = vpop.f32.mrf.mxu0
        %v2789 = vpop.f32.mrf.mxu0
        %v2790 = vadd.f32 %v2629, %v2789
        %v2791 = vpop.f32.mrf.mxu0
        %2792 = vmatprep.mubr.bf16.mxu0 0
        %2793 = vmatmul.mubr.bf16.gmra.mxu0 %v2331
        %v2794 = vpop.f32.mrf.mxu0
        %v2795 = vadd.f32 %v2634, %v2794
        %v2796 = vpop.f32.mrf.mxu0
        %v2797 = vpop.f32.mrf.mxu0
        %v2798 = vadd.f32 %v2637, %v2797
        %v2799 = vpop.f32.mrf.mxu0
        %2800 = vmatprep.mubr.bf16.mxu0 0
        %2801 = vmatmul.mubr.bf16.gmra.mxu0 %v2334
        %v2802 = vpop.f32.mrf.mxu0
        %v2803 = vadd.f32 %v2642, %v2802
        %v2804 = vpop.f32.mrf.mxu0
        %v2805 = vpop.f32.mrf.mxu0
        %v2806 = vadd.f32 %v2645, %v2805
        %v2807 = vpop.f32.mrf.mxu0
        %2808 = vmatprep.mubr.bf16.mxu0 0
        %2809 = vmatmul.mubr.bf16.gmra.mxu0 %v2337
        %v2810 = vpop.f32.mrf.mxu0
        %v2811 = vadd.f32 %v2650, %v2810
        %v2812 = vpop.f32.mrf.mxu0
        %v2813 = vpop.f32.mrf.mxu0
        %v2814 = vadd.f32 %v2653, %v2813
        %v2815 = vpop.f32.mrf.mxu0
        %2816 = vmatprep.mubr.bf16.mxu0 0
        %2817 = vmatmul.mubr.bf16.gmra.mxu0 %v2340
        %v2818 = vpop.f32.mrf.mxu0
        %v2819 = vadd.f32 %v2658, %v2818
        %v2820 = vpop.f32.mrf.mxu0
        %v2821 = vpop.f32.mrf.mxu0
        %v2822 = vadd.f32 %v2661, %v2821
        %v2823 = vpop.f32.mrf.mxu0
        %2824 = vmatprep.mubr.bf16.mxu0 0
        %2825 = vmatmul.mubr.bf16.gmra.mxu0 %v2343
        %v2826 = vpop.f32.mrf.mxu0
        %v2827 = vadd.f32 %v2666, %v2826
        %v2828 = vpop.f32.mrf.mxu0
        %v2829 = vpop.f32.mrf.mxu0
        %v2830 = vadd.f32 %v2669, %v2829
        %v2831 = vpop.f32.mrf.mxu0
        %2832 = vmatprep.mubr.bf16.mxu0 0
        %2833 = vmatmul.mubr.bf16.gmra.mxu0 %v2346
        %v2834 = vpop.f32.mrf.mxu0
        %v2835 = vadd.f32 %v2674, %v2834
        %v2836 = vpop.f32.mrf.mxu0
        %v2837 = vpop.f32.mrf.mxu0
        %v2838 = vadd.f32 %v2677, %v2837
        %v2839 = vpop.f32.mrf.mxu0
        %2840 = vmatprep.mubr.bf16.mxu0 0
        %2841 = vmatmul.mubr.bf16.gmra.mxu0 %v2349
        %v2842 = vpop.f32.mrf.mxu0
        %v2843 = vadd.f32 %v2682, %v2842
        %v2844 = vpop.f32.mrf.mxu0
        %v2845 = vpop.f32.mrf.mxu0
        %v2846 = vadd.f32 %v2685, %v2845
        %v2847 = vpop.f32.mrf.mxu0
        %2848 = vmatprep.mubr.bf16.mxu0 0
        %2849 = vmatmul.mubr.bf16.gmra.mxu0 %v2352
        %v2850 = vpop.f32.mrf.mxu0
        %v2851 = vadd.f32 %v2690, %v2850
        %v2852 = vpop.f32.mrf.mxu0
        %v2853 = vpop.f32.mrf.mxu0
        %v2854 = vadd.f32 %v2693, %v2853
        %v2855 = vpop.f32.mrf.mxu0
        %2856 = vmatprep.mubr.bf16.mxu0 0
        %2857 = vmatmul.mubr.bf16.gmra.mxu0 %v2355
        %v2858 = vpop.f32.mrf.mxu0
        %v2859 = vadd.f32 %v2698, %v2858
        %v2860 = vpop.f32.mrf.mxu0
        %v2861 = vpop.f32.mrf.mxu0
        %v2862 = vadd.f32 %v2701, %v2861
        %v2863 = vpop.f32.mrf.mxu0
        %2864 = vmatprep.mubr.bf16.mxu0 0
        %2865 = vmatmul.mubr.bf16.gmra.mxu0 %v2358
        %v2866 = vpop.f32.mrf.mxu0
        %v2867 = vadd.f32 %v2706, %v2866
        %v2868 = vpop.f32.mrf.mxu0
        %v2869 = vpop.f32.mrf.mxu0
        %v2870 = vadd.f32 %v2709, %v2869
        %v2871 = vpop.f32.mrf.mxu0
        %2872 = vdwg.mxu0
        %v2877 = vunpack.c.l.b16 %v1986
        %v2878 = vunpack.c.h.b16 %v1986
        %v2879 = vunpack.c.l.b16 %v1987
        %v2880 = vunpack.c.l.b16 %v1988
        %v2881 = vunpack.c.h.b16 %v1988
        %v2882 = vunpack.c.l.b16 %v1989
        %v2883 = vpack.c.b16 %v2880, %v2877
        %v2884 = vpack.c.b16 %v2881, %v2878
        %v2885 = vpack.c.b16 %v2882, %v2879
        %v2937 = vunpack.c.l.b16 %v2050
        %v2938 = vunpack.c.l.b16 %v2051
        %v2939 = vunpack.c.l.b16 %v2052
        %v2940 = vunpack.c.l.b16 %v2053
        %v2941 = vunpack.c.l.b16 %v2054
        %v2942 = vunpack.c.l.b16 %v2055
        %v2943 = vunpack.c.l.b16 %v2056
        %v2944 = vunpack.c.l.b16 %v2057
        %v2945 = vunpack.c.l.b16 %v2058
        %v2946 = vunpack.c.l.b16 %v2059
        %v2947 = vunpack.c.l.b16 %v2060
        %v2948 = vunpack.c.l.b16 %v2061
        %v2949 = vunpack.c.l.b16 %v2062
        %v2950 = vunpack.c.l.b16 %v2063
        %v2951 = vunpack.c.l.b16 %v2064
        %v2952 = vunpack.c.l.b16 %v2065
        %v2953 = vunpack.c.l.b16 %v2066
        %v2954 = vunpack.c.l.b16 %v2067
        %v2955 = vunpack.c.l.b16 %v2068
        %v2956 = vunpack.c.l.b16 %v2069
        %v2957 = vunpack.c.l.b16 %v2070
        %v2958 = vunpack.c.l.b16 %v2071
        %v2959 = vunpack.c.l.b16 %v2072
        %v2960 = vunpack.c.l.b16 %v2073
        %v2961 = vunpack.c.l.b16 %v2074
        %v2962 = vunpack.c.l.b16 %v2075
        %v2963 = vunpack.c.l.b16 %v2076
        %v2964 = vunpack.c.l.b16 %v2077
        %v2965 = vunpack.c.l.b16 %v2078
        %v2966 = vunpack.c.l.b16 %v2079
        %v2967 = vunpack.c.l.b16 %v2080
        %v2968 = vunpack.c.l.b16 %v2081
        %v2969 = vunpack.c.l.b16 %v2082
        %v2970 = vunpack.c.l.b16 %v2083
        %v2971 = vunpack.c.l.b16 %v2084
        %v2972 = vunpack.c.l.b16 %v2085
        %v2973 = vunpack.c.l.b16 %v2086
        %v2974 = vunpack.c.l.b16 %v2087
        %v2975 = vunpack.c.l.b16 %v2088
        %v2976 = vunpack.c.l.b16 %v2089
        %v2977 = vunpack.c.l.b16 %v2090
        %v2978 = vunpack.c.l.b16 %v2091
        %v2979 = vunpack.c.l.b16 %v2092
        %v2980 = vunpack.c.l.b16 %v2093
        %v2981 = vunpack.c.l.b16 %v2094
        %v2982 = vunpack.c.l.b16 %v2095
        %v2983 = vunpack.c.l.b16 %v2096
        %v2984 = vunpack.c.l.b16 %v2097
        %v2985 = vpack.c.b16 %v2938, %v2937
        %v2986 = vpack.c.b16 %v2940, %v2939
        %v2987 = vpack.c.b16 %v2942, %v2941
        %v2988 = vpack.c.b16 %v2944, %v2943
        %v2989 = vpack.c.b16 %v2946, %v2945
        %v2990 = vpack.c.b16 %v2948, %v2947
        %v2991 = vpack.c.b16 %v2950, %v2949
        %v2992 = vpack.c.b16 %v2952, %v2951
        %v2993 = vpack.c.b16 %v2954, %v2953
        %v2994 = vpack.c.b16 %v2956, %v2955
        %v2995 = vpack.c.b16 %v2958, %v2957
        %v2996 = vpack.c.b16 %v2960, %v2959
        %v2997 = vpack.c.b16 %v2962, %v2961
        %v2998 = vpack.c.b16 %v2964, %v2963
        %v2999 = vpack.c.b16 %v2966, %v2965
        %v3000 = vpack.c.b16 %v2968, %v2967
        %v3001 = vpack.c.b16 %v2970, %v2969
        %v3002 = vpack.c.b16 %v2972, %v2971
        %v3003 = vpack.c.b16 %v2974, %v2973
        %v3004 = vpack.c.b16 %v2976, %v2975
        %v3005 = vpack.c.b16 %v2978, %v2977
        %v3006 = vpack.c.b16 %v2980, %v2979
        %v3007 = vpack.c.b16 %v2982, %v2981
        %v3008 = vpack.c.b16 %v2984, %v2983
        %3033 = vmatprep.subr.bf16.mxu0 0
        %3034 = vmatpush1.bf16.msra.mxu0 %v2992
        %3035 = vmatprep.subr.bf16.mxu0 0
        %3036 = vmatpush1.bf16.msra.mxu0 %v2991
        %3037 = vmatprep.subr.bf16.mxu0 0
        %3038 = vmatpush1.bf16.msra.mxu0 %v2990
        %3039 = vmatprep.subr.bf16.mxu0 0
        %3040 = vmatpush1.bf16.msra.mxu0 %v2989
        %3041 = vmatprep.subr.bf16.mxu0 0
        %3042 = vmatpush1.bf16.msra.mxu0 %v2988
        %3043 = vmatprep.subr.bf16.mxu0 0
        %3044 = vmatpush1.bf16.msra.mxu0 %v2987
        %3045 = vmatprep.subr.bf16.mxu0 0
        %3046 = vmatpush1.bf16.msra.mxu0 %v2986
        %3047 = vmatprep.subr.bf16.mxu0 0
        %3048 = vmatpush1.bf16.msra.mxu0 %v2985
        %3049 = vmatprep.subr.bf16.mxu0 0
        %3050 = vmatpush2.bf16.msra.mxu0 %v3000
        %3051 = vmatprep.subr.bf16.mxu0 0
        %3052 = vmatpush2.bf16.msra.mxu0 %v2999
        %3053 = vmatprep.subr.bf16.mxu0 0
        %3054 = vmatpush2.bf16.msra.mxu0 %v2998
        %3055 = vmatprep.subr.bf16.mxu0 0
        %3056 = vmatpush2.bf16.msra.mxu0 %v2997
        %3057 = vmatprep.subr.bf16.mxu0 0
        %3058 = vmatpush2.bf16.msra.mxu0 %v2996
        %3059 = vmatprep.subr.bf16.mxu0 0
        %3060 = vmatpush2.bf16.msra.mxu0 %v2995
        %3061 = vmatprep.subr.bf16.mxu0 0
        %3062 = vmatpush2.bf16.msra.mxu0 %v2994
        %3063 = vmatprep.subr.bf16.mxu0 0
        %3064 = vmatpush2.bf16.msra.mxu0 %v2993
        %3065 = vmatprep.mubr.bf16.mxu0 %v2884
        %3066 = vmatmul.mubr.bf16.gmra.mxu0 %v2883
        %v3067 = vpop.f32.mrf.mxu0
        %v3068 = vadd.f32 %v2747, %v3067
        %v3069 = vpop.f32.mrf.mxu0
        %v3070 = vpop.f32.mrf.mxu0
        %v3071 = vadd.f32 %v2750, %v3070
        %v3072 = vpop.f32.mrf.mxu0
        %3073 = vmatprep.mubr.bf16.mxu0 %v2312
        %3074 = vmatmul.mubr.bf16.gmra.mxu0 %v2311
        %v3075 = vpop.f32.mrf.mxu0
        %v3076 = vadd.f32 %v2755, %v3075
        %v3077 = vpop.f32.mrf.mxu0
        %v3078 = vpop.f32.mrf.mxu0
        %v3079 = vadd.f32 %v2758, %v3078
        %v3080 = vpop.f32.mrf.mxu0
        %3081 = vmatprep.mubr.bf16.mxu0 %v2315
        %3082 = vmatmul.mubr.bf16.gmra.mxu0 %v2314
        %v3083 = vpop.f32.mrf.mxu0
        %v3084 = vadd.f32 %v2763, %v3083
        %v3085 = vpop.f32.mrf.mxu0
        %v3086 = vpop.f32.mrf.mxu0
        %v3087 = vadd.f32 %v2766, %v3086
        %v3088 = vpop.f32.mrf.mxu0
        %3089 = vmatprep.mubr.bf16.mxu0 %v2318
        %3090 = vmatmul.mubr.bf16.gmra.mxu0 %v2317
        %v3091 = vpop.f32.mrf.mxu0
        %v3092 = vadd.f32 %v2771, %v3091
        %v3093 = vpop.f32.mrf.mxu0
        %v3094 = vpop.f32.mrf.mxu0
        %v3095 = vadd.f32 %v2774, %v3094
        %v3096 = vpop.f32.mrf.mxu0
        %3097 = vmatprep.mubr.bf16.mxu0 %v2321
        %3098 = vmatmul.mubr.bf16.gmra.mxu0 %v2320
        %v3099 = vpop.f32.mrf.mxu0
        %v3100 = vadd.f32 %v2779, %v3099
        %v3101 = vpop.f32.mrf.mxu0
        %v3102 = vpop.f32.mrf.mxu0
        %v3103 = vadd.f32 %v2782, %v3102
        %v3104 = vpop.f32.mrf.mxu0
        %3105 = vmatprep.mubr.bf16.mxu0 %v2324
        %3106 = vmatmul.mubr.bf16.gmra.mxu0 %v2323
        %v3107 = vpop.f32.mrf.mxu0
        %v3108 = vadd.f32 %v2787, %v3107
        %v3109 = vpop.f32.mrf.mxu0
        %v3110 = vpop.f32.mrf.mxu0
        %v3111 = vadd.f32 %v2790, %v3110
        %v3112 = vpop.f32.mrf.mxu0
        %3113 = vmatprep.mubr.bf16.mxu0 %v2327
        %3114 = vmatmul.mubr.bf16.gmra.mxu0 %v2326
        %v3115 = vpop.f32.mrf.mxu0
        %v3116 = vadd.f32 %v2795, %v3115
        %v3117 = vpop.f32.mrf.mxu0
        %v3118 = vpop.f32.mrf.mxu0
        %v3119 = vadd.f32 %v2798, %v3118
        %v3120 = vpop.f32.mrf.mxu0
        %3121 = vmatprep.mubr.bf16.mxu0 %v2330
        %3122 = vmatmul.mubr.bf16.gmra.mxu0 %v2329
        %v3123 = vpop.f32.mrf.mxu0
        %v3124 = vadd.f32 %v2803, %v3123
        %v3125 = vpop.f32.mrf.mxu0
        %v3126 = vpop.f32.mrf.mxu0
        %v3127 = vadd.f32 %v2806, %v3126
        %v3128 = vpop.f32.mrf.mxu0
        %3129 = vmatprep.mubr.bf16.mxu0 %v2333
        %3130 = vmatmul.mubr.bf16.gmra.mxu0 %v2332
        %v3131 = vpop.f32.mrf.mxu0
        %v3132 = vadd.f32 %v2811, %v3131
        %v3133 = vpop.f32.mrf.mxu0
        %v3134 = vpop.f32.mrf.mxu0
        %v3135 = vadd.f32 %v2814, %v3134
        %v3136 = vpop.f32.mrf.mxu0
        %3137 = vmatprep.mubr.bf16.mxu0 %v2336
        %3138 = vmatmul.mubr.bf16.gmra.mxu0 %v2335
        %v3139 = vpop.f32.mrf.mxu0
        %v3140 = vadd.f32 %v2819, %v3139
        %v3141 = vpop.f32.mrf.mxu0
        %v3142 = vpop.f32.mrf.mxu0
        %v3143 = vadd.f32 %v2822, %v3142
        %v3144 = vpop.f32.mrf.mxu0
        %3145 = vmatprep.mubr.bf16.mxu0 %v2339
        %3146 = vmatmul.mubr.bf16.gmra.mxu0 %v2338
        %v3147 = vpop.f32.mrf.mxu0
        %v3148 = vadd.f32 %v2827, %v3147
        %v3149 = vpop.f32.mrf.mxu0
        %v3150 = vpop.f32.mrf.mxu0
        %v3151 = vadd.f32 %v2830, %v3150
        %v3152 = vpop.f32.mrf.mxu0
        %3153 = vmatprep.mubr.bf16.mxu0 %v2342
        %3154 = vmatmul.mubr.bf16.gmra.mxu0 %v2341
        %v3155 = vpop.f32.mrf.mxu0
        %v3156 = vadd.f32 %v2835, %v3155
        %v3157 = vpop.f32.mrf.mxu0
        %v3158 = vpop.f32.mrf.mxu0
        %v3159 = vadd.f32 %v2838, %v3158
        %v3160 = vpop.f32.mrf.mxu0
        %3161 = vmatprep.mubr.bf16.mxu0 %v2345
        %3162 = vmatmul.mubr.bf16.gmra.mxu0 %v2344
        %v3163 = vpop.f32.mrf.mxu0
        %v3164 = vadd.f32 %v2843, %v3163
        %v3165 = vpop.f32.mrf.mxu0
        %v3166 = vpop.f32.mrf.mxu0
        %v3167 = vadd.f32 %v2846, %v3166
        %v3168 = vpop.f32.mrf.mxu0
        %3169 = vmatprep.mubr.bf16.mxu0 %v2348
        %3170 = vmatmul.mubr.bf16.gmra.mxu0 %v2347
        %v3171 = vpop.f32.mrf.mxu0
        %v3172 = vadd.f32 %v2851, %v3171
        %v3173 = vpop.f32.mrf.mxu0
        %v3174 = vpop.f32.mrf.mxu0
        %v3175 = vadd.f32 %v2854, %v3174
        %v3176 = vpop.f32.mrf.mxu0
        %3177 = vmatprep.mubr.bf16.mxu0 %v2351
        %3178 = vmatmul.mubr.bf16.gmra.mxu0 %v2350
        %v3179 = vpop.f32.mrf.mxu0
        %v3180 = vadd.f32 %v2859, %v3179
        %v3181 = vpop.f32.mrf.mxu0
        %v3182 = vpop.f32.mrf.mxu0
        %v3183 = vadd.f32 %v2862, %v3182
        %v3184 = vpop.f32.mrf.mxu0
        %3185 = vmatprep.mubr.bf16.mxu0 %v2354
        %3186 = vmatmul.mubr.bf16.gmra.mxu0 %v2353
        %v3187 = vpop.f32.mrf.mxu0
        %v3188 = vadd.f32 %v2867, %v3187
        %v3189 = vpop.f32.mrf.mxu0
        %v3190 = vpop.f32.mrf.mxu0
        %v3191 = vadd.f32 %v2870, %v3190
        %v3192 = vpop.f32.mrf.mxu0
        %3193 = vdwg.mxu0
        %3194 = vmatprep.subr.bf16.mxu0 0
        %3195 = vmatpush1.bf16.msra.mxu0 %v3008
        %3196 = vmatprep.subr.bf16.mxu0 0
        %3197 = vmatpush1.bf16.msra.mxu0 %v3007
        %3198 = vmatprep.subr.bf16.mxu0 0
        %3199 = vmatpush1.bf16.msra.mxu0 %v3006
        %3200 = vmatprep.subr.bf16.mxu0 0
        %3201 = vmatpush1.bf16.msra.mxu0 %v3005
        %3202 = vmatprep.subr.bf16.mxu0 0
        %3203 = vmatpush1.bf16.msra.mxu0 %v3004
        %3204 = vmatprep.subr.bf16.mxu0 0
        %3205 = vmatpush1.bf16.msra.mxu0 %v3003
        %3206 = vmatprep.subr.bf16.mxu0 0
        %3207 = vmatpush1.bf16.msra.mxu0 %v3002
        %3208 = vmatprep.subr.bf16.mxu0 0
        %3209 = vmatpush1.bf16.msra.mxu0 %v3001
        %3210 = vmatprep.subr.bf16.mxu0 0
        %3211 = vmatpush2.bf16.msra.mxu0 0
        %3212 = vmatprep.subr.bf16.mxu0 0
        %3213 = vmatpush2.bf16.msra.mxu0 0
        %3214 = vmatprep.subr.bf16.mxu0 0
        %3215 = vmatpush2.bf16.msra.mxu0 0
        %3216 = vmatprep.subr.bf16.mxu0 0
        %3217 = vmatpush2.bf16.msra.mxu0 0
        %3218 = vmatprep.subr.bf16.mxu0 0
        %3219 = vmatpush2.bf16.msra.mxu0 0
        %3220 = vmatprep.subr.bf16.mxu0 0
        %3221 = vmatpush2.bf16.msra.mxu0 0
        %3222 = vmatprep.subr.bf16.mxu0 0
        %3223 = vmatpush2.bf16.msra.mxu0 0
        %3224 = vmatprep.subr.bf16.mxu0 0
        %3225 = vmatpush2.bf16.msra.mxu0 0
        %3226 = vmatprep.mubr.bf16.mxu0 0
        %3227 = vmatmul.mubr.bf16.gmra.mxu0 %v2885
        %v3228 = vpop.f32.mrf.mxu0
        %v3229 = vadd.f32 %v3068, %v3228
        %v3230 = vpop.f32.mrf.mxu0
        %v3231 = vpop.f32.mrf.mxu0
        %v3232 = vadd.f32 %v3071, %v3231
        %v3233 = vpop.f32.mrf.mxu0
        %3234 = vmatprep.mubr.bf16.mxu0 0
        %3235 = vmatmul.mubr.bf16.gmra.mxu0 %v2313
        %v3236 = vpop.f32.mrf.mxu0
        %v3237 = vadd.f32 %v3076, %v3236
        %v3238 = vpop.f32.mrf.mxu0
        %v3239 = vpop.f32.mrf.mxu0
        %v3240 = vadd.f32 %v3079, %v3239
        %v3241 = vpop.f32.mrf.mxu0
        %3242 = vmatprep.mubr.bf16.mxu0 0
        %3243 = vmatmul.mubr.bf16.gmra.mxu0 %v2316
        %v3244 = vpop.f32.mrf.mxu0
        %v3245 = vadd.f32 %v3084, %v3244
        %v3246 = vpop.f32.mrf.mxu0
        %v3247 = vpop.f32.mrf.mxu0
        %v3248 = vadd.f32 %v3087, %v3247
        %v3249 = vpop.f32.mrf.mxu0
        %3250 = vmatprep.mubr.bf16.mxu0 0
        %3251 = vmatmul.mubr.bf16.gmra.mxu0 %v2319
        %v3252 = vpop.f32.mrf.mxu0
        %v3253 = vadd.f32 %v3092, %v3252
        %v3254 = vpop.f32.mrf.mxu0
        %v3255 = vpop.f32.mrf.mxu0
        %v3256 = vadd.f32 %v3095, %v3255
        %v3257 = vpop.f32.mrf.mxu0
        %3258 = vmatprep.mubr.bf16.mxu0 0
        %3259 = vmatmul.mubr.bf16.gmra.mxu0 %v2322
        %v3260 = vpop.f32.mrf.mxu0
        %v3261 = vadd.f32 %v3100, %v3260
        %v3262 = vpop.f32.mrf.mxu0
        %v3263 = vpop.f32.mrf.mxu0
        %v3264 = vadd.f32 %v3103, %v3263
        %v3265 = vpop.f32.mrf.mxu0
        %3266 = vmatprep.mubr.bf16.mxu0 0
        %3267 = vmatmul.mubr.bf16.gmra.mxu0 %v2325
        %v3268 = vpop.f32.mrf.mxu0
        %v3269 = vadd.f32 %v3108, %v3268
        %v3270 = vpop.f32.mrf.mxu0
        %v3271 = vpop.f32.mrf.mxu0
        %v3272 = vadd.f32 %v3111, %v3271
        %v3273 = vpop.f32.mrf.mxu0
        %3274 = vmatprep.mubr.bf16.mxu0 0
        %3275 = vmatmul.mubr.bf16.gmra.mxu0 %v2328
        %v3276 = vpop.f32.mrf.mxu0
        %v3277 = vadd.f32 %v3116, %v3276
        %v3278 = vpop.f32.mrf.mxu0
        %v3279 = vpop.f32.mrf.mxu0
        %v3280 = vadd.f32 %v3119, %v3279
        %v3281 = vpop.f32.mrf.mxu0
        %3282 = vmatprep.mubr.bf16.mxu0 0
        %3283 = vmatmul.mubr.bf16.gmra.mxu0 %v2331
        %v3284 = vpop.f32.mrf.mxu0
        %v3285 = vadd.f32 %v3124, %v3284
        %v3286 = vpop.f32.mrf.mxu0
        %v3287 = vpop.f32.mrf.mxu0
        %v3288 = vadd.f32 %v3127, %v3287
        %v3289 = vpop.f32.mrf.mxu0
        %3290 = vmatprep.mubr.bf16.mxu0 0
        %3291 = vmatmul.mubr.bf16.gmra.mxu0 %v2334
        %v3292 = vpop.f32.mrf.mxu0
        %v3293 = vadd.f32 %v3132, %v3292
        %v3294 = vpop.f32.mrf.mxu0
        %v3295 = vpop.f32.mrf.mxu0
        %v3296 = vadd.f32 %v3135, %v3295
        %v3297 = vpop.f32.mrf.mxu0
        %3298 = vmatprep.mubr.bf16.mxu0 0
        %3299 = vmatmul.mubr.bf16.gmra.mxu0 %v2337
        %v3300 = vpop.f32.mrf.mxu0
        %v3301 = vadd.f32 %v3140, %v3300
        %v3302 = vpop.f32.mrf.mxu0
        %v3303 = vpop.f32.mrf.mxu0
        %v3304 = vadd.f32 %v3143, %v3303
        %v3305 = vpop.f32.mrf.mxu0
        %3306 = vmatprep.mubr.bf16.mxu0 0
        %3307 = vmatmul.mubr.bf16.gmra.mxu0 %v2340
        %v3308 = vpop.f32.mrf.mxu0
        %v3309 = vadd.f32 %v3148, %v3308
        %v3310 = vpop.f32.mrf.mxu0
        %v3311 = vpop.f32.mrf.mxu0
        %v3312 = vadd.f32 %v3151, %v3311
        %v3313 = vpop.f32.mrf.mxu0
        %3314 = vmatprep.mubr.bf16.mxu0 0
        %3315 = vmatmul.mubr.bf16.gmra.mxu0 %v2343
        %v3316 = vpop.f32.mrf.mxu0
        %v3317 = vadd.f32 %v3156, %v3316
        %v3318 = vpop.f32.mrf.mxu0
        %v3319 = vpop.f32.mrf.mxu0
        %v3320 = vadd.f32 %v3159, %v3319
        %v3321 = vpop.f32.mrf.mxu0
        %3322 = vmatprep.mubr.bf16.mxu0 0
        %3323 = vmatmul.mubr.bf16.gmra.mxu0 %v2346
        %v3324 = vpop.f32.mrf.mxu0
        %v3325 = vadd.f32 %v3164, %v3324
        %v3326 = vpop.f32.mrf.mxu0
        %v3327 = vpop.f32.mrf.mxu0
        %v3328 = vadd.f32 %v3167, %v3327
        %v3329 = vpop.f32.mrf.mxu0
        %3330 = vmatprep.mubr.bf16.mxu0 0
        %3331 = vmatmul.mubr.bf16.gmra.mxu0 %v2349
        %v3332 = vpop.f32.mrf.mxu0
        %v3333 = vadd.f32 %v3172, %v3332
        %v3334 = vpop.f32.mrf.mxu0
        %v3335 = vpop.f32.mrf.mxu0
        %v3336 = vadd.f32 %v3175, %v3335
        %v3337 = vpop.f32.mrf.mxu0
        %3338 = vmatprep.mubr.bf16.mxu0 0
        %3339 = vmatmul.mubr.bf16.gmra.mxu0 %v2352
        %v3340 = vpop.f32.mrf.mxu0
        %v3341 = vadd.f32 %v3180, %v3340
        %v3342 = vpop.f32.mrf.mxu0
        %v3343 = vpop.f32.mrf.mxu0
        %v3344 = vadd.f32 %v3183, %v3343
        %v3345 = vpop.f32.mrf.mxu0
        %3346 = vmatprep.mubr.bf16.mxu0 0
        %3347 = vmatmul.mubr.bf16.gmra.mxu0 %v2355
        %v3348 = vpop.f32.mrf.mxu0
        %v3349 = vadd.f32 %v3188, %v3348
        %v3350 = vpop.f32.mrf.mxu0
        %v3351 = vpop.f32.mrf.mxu0
        %v3352 = vadd.f32 %v3191, %v3351
        %v3353 = vpop.f32.mrf.mxu0
        %3354 = vdwg.mxu0
        %v3355 = vld [vmem:[#allocation2 + $0x30] sm:$0xff]
        %v3356 = vld [vmem:[#allocation2 + $0x38] sm:$0xf]
        %v3357 = vld [vmem:[#allocation2 + $0x3c] sm:$0xff]
        %v3358 = vld [vmem:[#allocation2 + $0x44] sm:$0xf]
        %v3359 = vld [vmem:[#allocation2 + $0x48] sm:$0xff]
        %v3360 = vld [vmem:[#allocation2 + $0x50] sm:$0xf]
        %v3361 = vld [vmem:[#allocation2 + $0x54] sm:$0xff]
        %v3362 = vld [vmem:[#allocation2 + $0x5c] sm:$0xf]
        %v3363 = vld [vmem:[#allocation2 + $0x60] sm:$0xff]
        %v3364 = vld [vmem:[#allocation2 + $0x68] sm:$0xf]
        %v3365 = vld [vmem:[#allocation2 + $0x6c] sm:$0xff]
        %v3366 = vld [vmem:[#allocation2 + $0x74] sm:$0xf]
        %v3367 = vld [vmem:[#allocation2 + $0x78] sm:$0xff]
        %v3368 = vld [vmem:[#allocation2 + $0x80] sm:$0xf]
        %v3369 = vld [vmem:[#allocation2 + $0x84] sm:$0xff]
        %v3370 = vld [vmem:[#allocation2 + $0x8c] sm:$0xf]
        %v3371 = vld [vmem:[#allocation2 + $0x90] sm:$0xff]
        %v3372 = vld [vmem:[#allocation2 + $0x98] sm:$0xf]
        %v3373 = vld [vmem:[#allocation2 + $0x9c] sm:$0xff]
        %v3374 = vld [vmem:[#allocation2 + $0xa4] sm:$0xf]
        %v3375 = vld [vmem:[#allocation2 + $0xa8] sm:$0xff]
        %v3376 = vld [vmem:[#allocation2 + $0xb0] sm:$0xf]
        %v3377 = vld [vmem:[#allocation2 + $0xb4] sm:$0xff]
        %v3378 = vld [vmem:[#allocation2 + $0xbc] sm:$0xf]
        %v3379 = vld [vmem:[#allocation2 + $0xc0] sm:$0xff]
        %v3380 = vld [vmem:[#allocation2 + $0xc8] sm:$0xf]
        %v3381 = vld [vmem:[#allocation2 + $0xcc] sm:$0xff]
        %v3382 = vld [vmem:[#allocation2 + $0xd4] sm:$0xf]
        %v3383 = vld [vmem:[#allocation2 + $0xd8] sm:$0xff]
        %v3384 = vld [vmem:[#allocation2 + $0xe0] sm:$0xf]
        %v3385 = vld [vmem:[#allocation2 + $0xe4] sm:$0xff]
        %v3386 = vld [vmem:[#allocation2 + $0xec] sm:$0xf]
        %v3387 = vld [vmem:[#allocation2 + $0xf0] sm:$0xff]
        %v3388 = vld [vmem:[#allocation2 + $0xf8] sm:$0xf]
        %v3389 = vld [vmem:[#allocation2 + $0xfc] sm:$0xff]
        %v3390 = vld [vmem:[#allocation2 + $0x104] sm:$0xf]
        %v3391 = vld [vmem:[#allocation2 + $0x108] sm:$0xff]
        %v3392 = vld [vmem:[#allocation2 + $0x110] sm:$0xf]
        %v3393 = vld [vmem:[#allocation2 + $0x114] sm:$0xff]
        %v3394 = vld [vmem:[#allocation2 + $0x11c] sm:$0xf]
        %v3395 = vld [vmem:[#allocation2 + $0x120] sm:$0xff]
        %v3396 = vld [vmem:[#allocation2 + $0x128] sm:$0xf]
        %v3397 = vld [vmem:[#allocation2 + $0x12c] sm:$0xff]
        %v3398 = vld [vmem:[#allocation2 + $0x134] sm:$0xf]
        %v3399 = vld [vmem:[#allocation2 + $0x138] sm:$0xff]
        %v3400 = vld [vmem:[#allocation2 + $0x140] sm:$0xf]
        %v3401 = vld [vmem:[#allocation2 + $0x144] sm:$0xff]
        %v3402 = vld [vmem:[#allocation2 + $0x14c] sm:$0xf]
        %v3403 = vld [vmem:[#allocation2 + $0x150] sm:$0xff]
        %v3404 = vld [vmem:[#allocation2 + $0x158] sm:$0xf]
        %v3405 = vld [vmem:[#allocation2 + $0x15c] sm:$0xff]
        %v3406 = vld [vmem:[#allocation2 + $0x164] sm:$0xf]
        %v3407 = vld [vmem:[#allocation2 + $0x168] sm:$0xff]
        %v3408 = vld [vmem:[#allocation2 + $0x170] sm:$0xf]
        %v3409 = vld [vmem:[#allocation2 + $0x174] sm:$0xff]
        %v3410 = vld [vmem:[#allocation2 + $0x17c] sm:$0xf]
        %v3411 = vld [vmem:[#allocation2 + $0x180] sm:$0xff]
        %v3412 = vld [vmem:[#allocation2 + $0x188] sm:$0xf]
        %v3413 = vld [vmem:[#allocation2 + $0x18c] sm:$0xff]
        %v3414 = vld [vmem:[#allocation2 + $0x194] sm:$0xf]
        %v3415 = vld [vmem:[#allocation2 + $0x198] sm:$0xff]
        %v3416 = vld [vmem:[#allocation2 + $0x1a0] sm:$0xf]
        %v3417 = vld [vmem:[#allocation2 + $0x1a4] sm:$0xff]
        %v3418 = vld [vmem:[#allocation2 + $0x1ac] sm:$0xf]
        %s3419 = scalar_lea.vmem [#allocation9], 384
        %v3420 = vld [vmem:[%s3419] sm:$0xf]
        %v3421 = vld [vmem:[%s3419 + $0x4] sm:$0xf]
        %v3422 = vld [vmem:[%s3419 + $0x8] sm:$0xf]
        %v3423 = vld [vmem:[%s3419 + $0xc] sm:$0xf]
        %v3424 = vld [vmem:[%s3419 + $0x10] sm:$0xf]
        %v3425 = vld [vmem:[%s3419 + $0x14] sm:$0xf]
        %v3426 = vld [vmem:[%s3419 + $0x18] sm:$0xf]
        %v3427 = vld [vmem:[%s3419 + $0x1c] sm:$0xf]
        %v3428 = vld [vmem:[%s3419 + $0x20] sm:$0xf]
        %v3429 = vld [vmem:[%s3419 + $0x24] sm:$0xf]
        %v3430 = vld [vmem:[%s3419 + $0x28] sm:$0xf]
        %v3431 = vld [vmem:[%s3419 + $0x2c] sm:$0xf]
        %v3432 = vld [vmem:[%s3419 + $0x30] sm:$0xf]
        %v3433 = vld [vmem:[%s3419 + $0x34] sm:$0xf]
        %v3434 = vld [vmem:[%s3419 + $0x38] sm:$0xf]
        %v3435 = vld [vmem:[%s3419 + $0x3c] sm:$0xf]
        %v3436 = vld [vmem:[%s3419 + $0x40] sm:$0xf]
        %v3437 = vld [vmem:[%s3419 + $0x44] sm:$0xf]
        %v3438 = vld [vmem:[%s3419 + $0x48] sm:$0xf]
        %v3439 = vld [vmem:[%s3419 + $0x4c] sm:$0xf]
        %v3440 = vld [vmem:[%s3419 + $0x50] sm:$0xf]
        %v3441 = vld [vmem:[%s3419 + $0x54] sm:$0xf]
        %v3442 = vld [vmem:[%s3419 + $0x58] sm:$0xf]
        %v3443 = vld [vmem:[%s3419 + $0x5c] sm:$0xf]
        %v3444 = vld [vmem:[%s3419 + $0x60] sm:$0xf]
        %v3445 = vld [vmem:[%s3419 + $0x64] sm:$0xf]
        %v3446 = vld [vmem:[%s3419 + $0x68] sm:$0xf]
        %v3447 = vld [vmem:[%s3419 + $0x6c] sm:$0xf]
        %v3448 = vld [vmem:[%s3419 + $0x70] sm:$0xf]
        %v3449 = vld [vmem:[%s3419 + $0x74] sm:$0xf]
        %v3450 = vld [vmem:[%s3419 + $0x78] sm:$0xf]
        %v3451 = vld [vmem:[%s3419 + $0x7c] sm:$0xf]
        %v3452 = vld [vmem:[%s3419 + $0x80] sm:$0xf]
        %v3453 = vld [vmem:[%s3419 + $0x84] sm:$0xf]
        %v3454 = vld [vmem:[%s3419 + $0x88] sm:$0xf]
        %v3455 = vld [vmem:[%s3419 + $0x8c] sm:$0xf]
        %v3456 = vld [vmem:[%s3419 + $0x90] sm:$0xf]
        %v3457 = vld [vmem:[%s3419 + $0x94] sm:$0xf]
        %v3458 = vld [vmem:[%s3419 + $0x98] sm:$0xf]
        %v3459 = vld [vmem:[%s3419 + $0x9c] sm:$0xf]
        %v3460 = vld [vmem:[%s3419 + $0xa0] sm:$0xf]
        %v3461 = vld [vmem:[%s3419 + $0xa4] sm:$0xf]
        %v3462 = vld [vmem:[%s3419 + $0xa8] sm:$0xf]
        %v3463 = vld [vmem:[%s3419 + $0xac] sm:$0xf]
        %v3464 = vld [vmem:[%s3419 + $0xb0] sm:$0xf]
        %v3465 = vld [vmem:[%s3419 + $0xb4] sm:$0xf]
        %v3466 = vld [vmem:[%s3419 + $0xb8] sm:$0xf]
        %v3467 = vld [vmem:[%s3419 + $0xbc] sm:$0xf]
        %v3532 = vunpack.c.l.b16 %v3355
        %v3533 = vunpack.c.h.b16 %v3355
        %v3534 = vunpack.c.l.b16 %v3356
        %v3535 = vunpack.c.l.b16 %v3357
        %v3536 = vunpack.c.h.b16 %v3357
        %v3537 = vunpack.c.l.b16 %v3358
        %v3538 = vunpack.c.l.b16 %v3359
        %v3539 = vunpack.c.h.b16 %v3359
        %v3540 = vunpack.c.l.b16 %v3360
        %v3541 = vunpack.c.l.b16 %v3361
        %v3542 = vunpack.c.h.b16 %v3361
        %v3543 = vunpack.c.l.b16 %v3362
        %v3544 = vunpack.c.l.b16 %v3363
        %v3545 = vunpack.c.h.b16 %v3363
        %v3546 = vunpack.c.l.b16 %v3364
        %v3547 = vunpack.c.l.b16 %v3365
        %v3548 = vunpack.c.h.b16 %v3365
        %v3549 = vunpack.c.l.b16 %v3366
        %v3550 = vunpack.c.l.b16 %v3367
        %v3551 = vunpack.c.h.b16 %v3367
        %v3552 = vunpack.c.l.b16 %v3368
        %v3553 = vunpack.c.l.b16 %v3369
        %v3554 = vunpack.c.h.b16 %v3369
        %v3555 = vunpack.c.l.b16 %v3370
        %v3556 = vunpack.c.l.b16 %v3371
        %v3557 = vunpack.c.h.b16 %v3371
        %v3558 = vunpack.c.l.b16 %v3372
        %v3559 = vunpack.c.l.b16 %v3373
        %v3560 = vunpack.c.h.b16 %v3373
        %v3561 = vunpack.c.l.b16 %v3374
        %v3562 = vunpack.c.l.b16 %v3375
        %v3563 = vunpack.c.h.b16 %v3375
        %v3564 = vunpack.c.l.b16 %v3376
        %v3565 = vunpack.c.l.b16 %v3377
        %v3566 = vunpack.c.h.b16 %v3377
        %v3567 = vunpack.c.l.b16 %v3378
        %v3568 = vunpack.c.l.b16 %v3379
        %v3569 = vunpack.c.h.b16 %v3379
        %v3570 = vunpack.c.l.b16 %v3380
        %v3571 = vunpack.c.l.b16 %v3381
        %v3572 = vunpack.c.h.b16 %v3381
        %v3573 = vunpack.c.l.b16 %v3382
        %v3574 = vunpack.c.l.b16 %v3383
        %v3575 = vunpack.c.h.b16 %v3383
        %v3576 = vunpack.c.l.b16 %v3384
        %v3577 = vunpack.c.l.b16 %v3385
        %v3578 = vunpack.c.h.b16 %v3385
        %v3579 = vunpack.c.l.b16 %v3386
        %v3580 = vunpack.c.l.b16 %v3387
        %v3581 = vunpack.c.h.b16 %v3387
        %v3582 = vunpack.c.l.b16 %v3388
        %v3583 = vunpack.c.l.b16 %v3389
        %v3584 = vunpack.c.h.b16 %v3389
        %v3585 = vunpack.c.l.b16 %v3390
        %v3586 = vunpack.c.l.b16 %v3391
        %v3587 = vunpack.c.h.b16 %v3391
        %v3588 = vunpack.c.l.b16 %v3392
        %v3589 = vunpack.c.l.b16 %v3393
        %v3590 = vunpack.c.h.b16 %v3393
        %v3591 = vunpack.c.l.b16 %v3394
        %v3592 = vunpack.c.l.b16 %v3395
        %v3593 = vunpack.c.h.b16 %v3395
        %v3594 = vunpack.c.l.b16 %v3396
        %v3595 = vunpack.c.l.b16 %v3397
        %v3596 = vunpack.c.h.b16 %v3397
        %v3597 = vunpack.c.l.b16 %v3398
        %v3598 = vunpack.c.l.b16 %v3399
        %v3599 = vunpack.c.h.b16 %v3399
        %v3600 = vunpack.c.l.b16 %v3400
        %v3601 = vunpack.c.l.b16 %v3401
        %v3602 = vunpack.c.h.b16 %v3401
        %v3603 = vunpack.c.l.b16 %v3402
        %v3604 = vunpack.c.l.b16 %v3403
        %v3605 = vunpack.c.h.b16 %v3403
        %v3606 = vunpack.c.l.b16 %v3404
        %v3607 = vunpack.c.l.b16 %v3405
        %v3608 = vunpack.c.h.b16 %v3405
        %v3609 = vunpack.c.l.b16 %v3406
        %v3610 = vunpack.c.l.b16 %v3407
        %v3611 = vunpack.c.h.b16 %v3407
        %v3612 = vunpack.c.l.b16 %v3408
        %v3613 = vunpack.c.l.b16 %v3409
        %v3614 = vunpack.c.h.b16 %v3409
        %v3615 = vunpack.c.l.b16 %v3410
        %v3616 = vunpack.c.l.b16 %v3411
        %v3617 = vunpack.c.h.b16 %v3411
        %v3618 = vunpack.c.l.b16 %v3412
        %v3619 = vunpack.c.l.b16 %v3413
        %v3620 = vunpack.c.h.b16 %v3413
        %v3621 = vunpack.c.l.b16 %v3414
        %v3622 = vunpack.c.l.b16 %v3415
        %v3623 = vunpack.c.h.b16 %v3415
        %v3624 = vunpack.c.l.b16 %v3416
        %v3625 = vunpack.c.l.b16 %v3417
        %v3626 = vunpack.c.h.b16 %v3417
        %v3627 = vunpack.c.l.b16 %v3418
        %v3628 = vpack.c.b16 %v3535, %v3532
        %v3629 = vpack.c.b16 %v3536, %v3533
        %v3630 = vpack.c.b16 %v3537, %v3534
        %v3631 = vpack.c.b16 %v3541, %v3538
        %v3632 = vpack.c.b16 %v3542, %v3539
        %v3633 = vpack.c.b16 %v3543, %v3540
        %v3634 = vpack.c.b16 %v3547, %v3544
        %v3635 = vpack.c.b16 %v3548, %v3545
        %v3636 = vpack.c.b16 %v3549, %v3546
        %v3637 = vpack.c.b16 %v3553, %v3550
        %v3638 = vpack.c.b16 %v3554, %v3551
        %v3639 = vpack.c.b16 %v3555, %v3552
        %v3640 = vpack.c.b16 %v3559, %v3556
        %v3641 = vpack.c.b16 %v3560, %v3557
        %v3642 = vpack.c.b16 %v3561, %v3558
        %v3643 = vpack.c.b16 %v3565, %v3562
        %v3644 = vpack.c.b16 %v3566, %v3563
        %v3645 = vpack.c.b16 %v3567, %v3564
        %v3646 = vpack.c.b16 %v3571, %v3568
        %v3647 = vpack.c.b16 %v3572, %v3569
        %v3648 = vpack.c.b16 %v3573, %v3570
        %v3649 = vpack.c.b16 %v3577, %v3574
        %v3650 = vpack.c.b16 %v3578, %v3575
        %v3651 = vpack.c.b16 %v3579, %v3576
        %v3652 = vpack.c.b16 %v3583, %v3580
        %v3653 = vpack.c.b16 %v3584, %v3581
        %v3654 = vpack.c.b16 %v3585, %v3582
        %v3655 = vpack.c.b16 %v3589, %v3586
        %v3656 = vpack.c.b16 %v3590, %v3587
        %v3657 = vpack.c.b16 %v3591, %v3588
        %v3658 = vpack.c.b16 %v3595, %v3592
        %v3659 = vpack.c.b16 %v3596, %v3593
        %v3660 = vpack.c.b16 %v3597, %v3594
        %v3661 = vpack.c.b16 %v3601, %v3598
        %v3662 = vpack.c.b16 %v3602, %v3599
        %v3663 = vpack.c.b16 %v3603, %v3600
        %v3664 = vpack.c.b16 %v3607, %v3604
        %v3665 = vpack.c.b16 %v3608, %v3605
        %v3666 = vpack.c.b16 %v3609, %v3606
        %v3667 = vpack.c.b16 %v3613, %v3610
        %v3668 = vpack.c.b16 %v3614, %v3611
        %v3669 = vpack.c.b16 %v3615, %v3612
        %v3670 = vpack.c.b16 %v3619, %v3616
        %v3671 = vpack.c.b16 %v3620, %v3617
        %v3672 = vpack.c.b16 %v3621, %v3618
        %v3673 = vpack.c.b16 %v3625, %v3622
        %v3674 = vpack.c.b16 %v3626, %v3623
        %v3675 = vpack.c.b16 %v3627, %v3624
        %v3772 = vunpack.c.l.b16 %v3420
        %v3773 = vunpack.c.l.b16 %v3421
        %v3774 = vunpack.c.l.b16 %v3422
        %v3775 = vunpack.c.l.b16 %v3423
        %v3776 = vunpack.c.l.b16 %v3424
        %v3777 = vunpack.c.l.b16 %v3425
        %v3778 = vunpack.c.l.b16 %v3426
        %v3779 = vunpack.c.l.b16 %v3427
        %v3780 = vunpack.c.l.b16 %v3428
        %v3781 = vunpack.c.l.b16 %v3429
        %v3782 = vunpack.c.l.b16 %v3430
        %v3783 = vunpack.c.l.b16 %v3431
        %v3784 = vunpack.c.l.b16 %v3432
        %v3785 = vunpack.c.l.b16 %v3433
        %v3786 = vunpack.c.l.b16 %v3434
        %v3787 = vunpack.c.l.b16 %v3435
        %v3788 = vunpack.c.l.b16 %v3436
        %v3789 = vunpack.c.l.b16 %v3437
        %v3790 = vunpack.c.l.b16 %v3438
        %v3791 = vunpack.c.l.b16 %v3439
        %v3792 = vunpack.c.l.b16 %v3440
        %v3793 = vunpack.c.l.b16 %v3441
        %v3794 = vunpack.c.l.b16 %v3442
        %v3795 = vunpack.c.l.b16 %v3443
        %v3796 = vunpack.c.l.b16 %v3444
        %v3797 = vunpack.c.l.b16 %v3445
        %v3798 = vunpack.c.l.b16 %v3446
        %v3799 = vunpack.c.l.b16 %v3447
        %v3800 = vunpack.c.l.b16 %v3448
        %v3801 = vunpack.c.l.b16 %v3449
        %v3802 = vunpack.c.l.b16 %v3450
        %v3803 = vunpack.c.l.b16 %v3451
        %v3804 = vunpack.c.l.b16 %v3452
        %v3805 = vunpack.c.l.b16 %v3453
        %v3806 = vunpack.c.l.b16 %v3454
        %v3807 = vunpack.c.l.b16 %v3455
        %v3808 = vunpack.c.l.b16 %v3456
        %v3809 = vunpack.c.l.b16 %v3457
        %v3810 = vunpack.c.l.b16 %v3458
        %v3811 = vunpack.c.l.b16 %v3459
        %v3812 = vunpack.c.l.b16 %v3460
        %v3813 = vunpack.c.l.b16 %v3461
        %v3814 = vunpack.c.l.b16 %v3462
        %v3815 = vunpack.c.l.b16 %v3463
        %v3816 = vunpack.c.l.b16 %v3464
        %v3817 = vunpack.c.l.b16 %v3465
        %v3818 = vunpack.c.l.b16 %v3466
        %v3819 = vunpack.c.l.b16 %v3467
        %v3820 = vpack.c.b16 %v3773, %v3772
        %v3821 = vpack.c.b16 %v3775, %v3774
        %v3822 = vpack.c.b16 %v3777, %v3776
        %v3823 = vpack.c.b16 %v3779, %v3778
        %v3824 = vpack.c.b16 %v3781, %v3780
        %v3825 = vpack.c.b16 %v3783, %v3782
        %v3826 = vpack.c.b16 %v3785, %v3784
        %v3827 = vpack.c.b16 %v3787, %v3786
        %v3828 = vpack.c.b16 %v3789, %v3788
        %v3829 = vpack.c.b16 %v3791, %v3790
        %v3830 = vpack.c.b16 %v3793, %v3792
        %v3831 = vpack.c.b16 %v3795, %v3794
        %v3832 = vpack.c.b16 %v3797, %v3796
        %v3833 = vpack.c.b16 %v3799, %v3798
        %v3834 = vpack.c.b16 %v3801, %v3800
        %v3835 = vpack.c.b16 %v3803, %v3802
        %v3836 = vpack.c.b16 %v3805, %v3804
        %v3837 = vpack.c.b16 %v3807, %v3806
        %v3838 = vpack.c.b16 %v3809, %v3808
        %v3839 = vpack.c.b16 %v3811, %v3810
        %v3840 = vpack.c.b16 %v3813, %v3812
        %v3841 = vpack.c.b16 %v3815, %v3814
        %v3842 = vpack.c.b16 %v3817, %v3816
        %v3843 = vpack.c.b16 %v3819, %v3818
        %3868 = vmatprep.subr.bf16.mxu0 0
        %3869 = vmatpush1.bf16.msra.mxu0 %v3827
        %3870 = vmatprep.subr.bf16.mxu0 0
        %3871 = vmatpush1.bf16.msra.mxu0 %v3826
        %3872 = vmatprep.subr.bf16.mxu0 0
        %3873 = vmatpush1.bf16.msra.mxu0 %v3825
        %3874 = vmatprep.subr.bf16.mxu0 0
        %3875 = vmatpush1.bf16.msra.mxu0 %v3824
        %3876 = vmatprep.subr.bf16.mxu0 0
        %3877 = vmatpush1.bf16.msra.mxu0 %v3823
        %3878 = vmatprep.subr.bf16.mxu0 0
        %3879 = vmatpush1.bf16.msra.mxu0 %v3822
        %3880 = vmatprep.subr.bf16.mxu0 0
        %3881 = vmatpush1.bf16.msra.mxu0 %v3821
        %3882 = vmatprep.subr.bf16.mxu0 0
        %3883 = vmatpush1.bf16.msra.mxu0 %v3820
        %3884 = vmatprep.subr.bf16.mxu0 0
        %3885 = vmatpush2.bf16.msra.mxu0 %v3835
        %3886 = vmatprep.subr.bf16.mxu0 0
        %3887 = vmatpush2.bf16.msra.mxu0 %v3834
        %3888 = vmatprep.subr.bf16.mxu0 0
        %3889 = vmatpush2.bf16.msra.mxu0 %v3833
        %3890 = vmatprep.subr.bf16.mxu0 0
        %3891 = vmatpush2.bf16.msra.mxu0 %v3832
        %3892 = vmatprep.subr.bf16.mxu0 0
        %3893 = vmatpush2.bf16.msra.mxu0 %v3831
        %3894 = vmatprep.subr.bf16.mxu0 0
        %3895 = vmatpush2.bf16.msra.mxu0 %v3830
        %3896 = vmatprep.subr.bf16.mxu0 0
        %3897 = vmatpush2.bf16.msra.mxu0 %v3829
        %3898 = vmatprep.subr.bf16.mxu0 0
        %3899 = vmatpush2.bf16.msra.mxu0 %v3828
        %3900 = vmatprep.mubr.bf16.mxu0 %v3629
        %3901 = vmatmul.mubr.bf16.gmra.mxu0 %v3628
        %v3902 = vpop.f32.mrf.mxu0
        %v3903 = vadd.f32 0.0, %v3902
        %v3904 = vpop.f32.mrf.mxu0
        %v3905 = vpop.f32.mrf.mxu0
        %v3906 = vadd.f32 0.0, %v3905
        %v3907 = vpop.f32.mrf.mxu0
        %3908 = vmatprep.mubr.bf16.mxu0 %v3632
        %3909 = vmatmul.mubr.bf16.gmra.mxu0 %v3631
        %v3910 = vpop.f32.mrf.mxu0
        %v3911 = vadd.f32 0.0, %v3910
        %v3912 = vpop.f32.mrf.mxu0
        %v3913 = vpop.f32.mrf.mxu0
        %v3914 = vadd.f32 0.0, %v3913
        %v3915 = vpop.f32.mrf.mxu0
        %3916 = vmatprep.mubr.bf16.mxu0 %v3635
        %3917 = vmatmul.mubr.bf16.gmra.mxu0 %v3634
        %v3918 = vpop.f32.mrf.mxu0
        %v3919 = vadd.f32 0.0, %v3918
        %v3920 = vpop.f32.mrf.mxu0
        %v3921 = vpop.f32.mrf.mxu0
        %v3922 = vadd.f32 0.0, %v3921
        %v3923 = vpop.f32.mrf.mxu0
        %3924 = vmatprep.mubr.bf16.mxu0 %v3638
        %3925 = vmatmul.mubr.bf16.gmra.mxu0 %v3637
        %v3926 = vpop.f32.mrf.mxu0
        %v3927 = vadd.f32 0.0, %v3926
        %v3928 = vpop.f32.mrf.mxu0
        %v3929 = vpop.f32.mrf.mxu0
        %v3930 = vadd.f32 0.0, %v3929
        %v3931 = vpop.f32.mrf.mxu0
        %3932 = vmatprep.mubr.bf16.mxu0 %v3641
        %3933 = vmatmul.mubr.bf16.gmra.mxu0 %v3640
        %v3934 = vpop.f32.mrf.mxu0
        %v3935 = vadd.f32 0.0, %v3934
        %v3936 = vpop.f32.mrf.mxu0
        %v3937 = vpop.f32.mrf.mxu0
        %v3938 = vadd.f32 0.0, %v3937
        %v3939 = vpop.f32.mrf.mxu0
        %3940 = vmatprep.mubr.bf16.mxu0 %v3644
        %3941 = vmatmul.mubr.bf16.gmra.mxu0 %v3643
        %v3942 = vpop.f32.mrf.mxu0
        %v3943 = vadd.f32 0.0, %v3942
        %v3944 = vpop.f32.mrf.mxu0
        %v3945 = vpop.f32.mrf.mxu0
        %v3946 = vadd.f32 0.0, %v3945
        %v3947 = vpop.f32.mrf.mxu0
        %3948 = vmatprep.mubr.bf16.mxu0 %v3647
        %3949 = vmatmul.mubr.bf16.gmra.mxu0 %v3646
        %v3950 = vpop.f32.mrf.mxu0
        %v3951 = vadd.f32 0.0, %v3950
        %v3952 = vpop.f32.mrf.mxu0
        %v3953 = vpop.f32.mrf.mxu0
        %v3954 = vadd.f32 0.0, %v3953
        %v3955 = vpop.f32.mrf.mxu0
        %3956 = vmatprep.mubr.bf16.mxu0 %v3650
        %3957 = vmatmul.mubr.bf16.gmra.mxu0 %v3649
        %v3958 = vpop.f32.mrf.mxu0
        %v3959 = vadd.f32 0.0, %v3958
        %v3960 = vpop.f32.mrf.mxu0
        %v3961 = vpop.f32.mrf.mxu0
        %v3962 = vadd.f32 0.0, %v3961
        %v3963 = vpop.f32.mrf.mxu0
        %3964 = vmatprep.mubr.bf16.mxu0 %v3653
        %3965 = vmatmul.mubr.bf16.gmra.mxu0 %v3652
        %v3966 = vpop.f32.mrf.mxu0
        %v3967 = vadd.f32 0.0, %v3966
        %v3968 = vpop.f32.mrf.mxu0
        %v3969 = vpop.f32.mrf.mxu0
        %v3970 = vadd.f32 0.0, %v3969
        %v3971 = vpop.f32.mrf.mxu0
        %3972 = vmatprep.mubr.bf16.mxu0 %v3656
        %3973 = vmatmul.mubr.bf16.gmra.mxu0 %v3655
        %v3974 = vpop.f32.mrf.mxu0
        %v3975 = vadd.f32 0.0, %v3974
        %v3976 = vpop.f32.mrf.mxu0
        %v3977 = vpop.f32.mrf.mxu0
        %v3978 = vadd.f32 0.0, %v3977
        %v3979 = vpop.f32.mrf.mxu0
        %3980 = vmatprep.mubr.bf16.mxu0 %v3659
        %3981 = vmatmul.mubr.bf16.gmra.mxu0 %v3658
        %v3982 = vpop.f32.mrf.mxu0
        %v3983 = vadd.f32 0.0, %v3982
        %v3984 = vpop.f32.mrf.mxu0
        %v3985 = vpop.f32.mrf.mxu0
        %v3986 = vadd.f32 0.0, %v3985
        %v3987 = vpop.f32.mrf.mxu0
        %3988 = vmatprep.mubr.bf16.mxu0 %v3662
        %3989 = vmatmul.mubr.bf16.gmra.mxu0 %v3661
        %v3990 = vpop.f32.mrf.mxu0
        %v3991 = vadd.f32 0.0, %v3990
        %v3992 = vpop.f32.mrf.mxu0
        %v3993 = vpop.f32.mrf.mxu0
        %v3994 = vadd.f32 0.0, %v3993
        %v3995 = vpop.f32.mrf.mxu0
        %3996 = vmatprep.mubr.bf16.mxu0 %v3665
        %3997 = vmatmul.mubr.bf16.gmra.mxu0 %v3664
        %v3998 = vpop.f32.mrf.mxu0
        %v3999 = vadd.f32 0.0, %v3998
        %v4000 = vpop.f32.mrf.mxu0
        %v4001 = vpop.f32.mrf.mxu0
        %v4002 = vadd.f32 0.0, %v4001
        %v4003 = vpop.f32.mrf.mxu0
        %4004 = vmatprep.mubr.bf16.mxu0 %v3668
        %4005 = vmatmul.mubr.bf16.gmra.mxu0 %v3667
        %v4006 = vpop.f32.mrf.mxu0
        %v4007 = vadd.f32 0.0, %v4006
        %v4008 = vpop.f32.mrf.mxu0
        %v4009 = vpop.f32.mrf.mxu0
        %v4010 = vadd.f32 0.0, %v4009
        %v4011 = vpop.f32.mrf.mxu0
        %4012 = vmatprep.mubr.bf16.mxu0 %v3671
        %4013 = vmatmul.mubr.bf16.gmra.mxu0 %v3670
        %v4014 = vpop.f32.mrf.mxu0
        %v4015 = vadd.f32 0.0, %v4014
        %v4016 = vpop.f32.mrf.mxu0
        %v4017 = vpop.f32.mrf.mxu0
        %v4018 = vadd.f32 0.0, %v4017
        %v4019 = vpop.f32.mrf.mxu0
        %4020 = vmatprep.mubr.bf16.mxu0 %v3674
        %4021 = vmatmul.mubr.bf16.gmra.mxu0 %v3673
        %v4022 = vpop.f32.mrf.mxu0
        %v4023 = vadd.f32 0.0, %v4022
        %v4024 = vpop.f32.mrf.mxu0
        %v4025 = vpop.f32.mrf.mxu0
        %v4026 = vadd.f32 0.0, %v4025
        %v4027 = vpop.f32.mrf.mxu0
        %4028 = vdwg.mxu0
        %4029 = vmatprep.subr.bf16.mxu0 0
        %4030 = vmatpush1.bf16.msra.mxu0 %v3843
        %4031 = vmatprep.subr.bf16.mxu0 0
        %4032 = vmatpush1.bf16.msra.mxu0 %v3842
        %4033 = vmatprep.subr.bf16.mxu0 0
        %4034 = vmatpush1.bf16.msra.mxu0 %v3841
        %4035 = vmatprep.subr.bf16.mxu0 0
        %4036 = vmatpush1.bf16.msra.mxu0 %v3840
        %4037 = vmatprep.subr.bf16.mxu0 0
        %4038 = vmatpush1.bf16.msra.mxu0 %v3839
        %4039 = vmatprep.subr.bf16.mxu0 0
        %4040 = vmatpush1.bf16.msra.mxu0 %v3838
        %4041 = vmatprep.subr.bf16.mxu0 0
        %4042 = vmatpush1.bf16.msra.mxu0 %v3837
        %4043 = vmatprep.subr.bf16.mxu0 0
        %4044 = vmatpush1.bf16.msra.mxu0 %v3836
        %4045 = vmatprep.subr.bf16.mxu0 0
        %4046 = vmatpush2.bf16.msra.mxu0 0
        %4047 = vmatprep.subr.bf16.mxu0 0
        %4048 = vmatpush2.bf16.msra.mxu0 0
        %4049 = vmatprep.subr.bf16.mxu0 0
        %4050 = vmatpush2.bf16.msra.mxu0 0
        %4051 = vmatprep.subr.bf16.mxu0 0
        %4052 = vmatpush2.bf16.msra.mxu0 0
        %4053 = vmatprep.subr.bf16.mxu0 0
        %4054 = vmatpush2.bf16.msra.mxu0 0
        %4055 = vmatprep.subr.bf16.mxu0 0
        %4056 = vmatpush2.bf16.msra.mxu0 0
        %4057 = vmatprep.subr.bf16.mxu0 0
        %4058 = vmatpush2.bf16.msra.mxu0 0
        %4059 = vmatprep.subr.bf16.mxu0 0
        %4060 = vmatpush2.bf16.msra.mxu0 0
        %4061 = vmatprep.mubr.bf16.mxu0 0
        %4062 = vmatmul.mubr.bf16.gmra.mxu0 %v3630
        %v4063 = vpop.f32.mrf.mxu0
        %v4064 = vadd.f32 %v3903, %v4063
        %v4065 = vpop.f32.mrf.mxu0
        %v4066 = vpop.f32.mrf.mxu0
        %v4067 = vadd.f32 %v3906, %v4066
        %v4068 = vpop.f32.mrf.mxu0
        %4069 = vmatprep.mubr.bf16.mxu0 0
        %4070 = vmatmul.mubr.bf16.gmra.mxu0 %v3633
        %v4071 = vpop.f32.mrf.mxu0
        %v4072 = vadd.f32 %v3911, %v4071
        %v4073 = vpop.f32.mrf.mxu0
        %v4074 = vpop.f32.mrf.mxu0
        %v4075 = vadd.f32 %v3914, %v4074
        %v4076 = vpop.f32.mrf.mxu0
        %4077 = vmatprep.mubr.bf16.mxu0 0
        %4078 = vmatmul.mubr.bf16.gmra.mxu0 %v3636
        %v4079 = vpop.f32.mrf.mxu0
        %v4080 = vadd.f32 %v3919, %v4079
        %v4081 = vpop.f32.mrf.mxu0
        %v4082 = vpop.f32.mrf.mxu0
        %v4083 = vadd.f32 %v3922, %v4082
        %v4084 = vpop.f32.mrf.mxu0
        %4085 = vmatprep.mubr.bf16.mxu0 0
        %4086 = vmatmul.mubr.bf16.gmra.mxu0 %v3639
        %v4087 = vpop.f32.mrf.mxu0
        %v4088 = vadd.f32 %v3927, %v4087
        %v4089 = vpop.f32.mrf.mxu0
        %v4090 = vpop.f32.mrf.mxu0
        %v4091 = vadd.f32 %v3930, %v4090
        %v4092 = vpop.f32.mrf.mxu0
        %4093 = vmatprep.mubr.bf16.mxu0 0
        %4094 = vmatmul.mubr.bf16.gmra.mxu0 %v3642
        %v4095 = vpop.f32.mrf.mxu0
        %v4096 = vadd.f32 %v3935, %v4095
        %v4097 = vpop.f32.mrf.mxu0
        %v4098 = vpop.f32.mrf.mxu0
        %v4099 = vadd.f32 %v3938, %v4098
        %v4100 = vpop.f32.mrf.mxu0
        %4101 = vmatprep.mubr.bf16.mxu0 0
        %4102 = vmatmul.mubr.bf16.gmra.mxu0 %v3645
        %v4103 = vpop.f32.mrf.mxu0
        %v4104 = vadd.f32 %v3943, %v4103
        %v4105 = vpop.f32.mrf.mxu0
        %v4106 = vpop.f32.mrf.mxu0
        %v4107 = vadd.f32 %v3946, %v4106
        %v4108 = vpop.f32.mrf.mxu0
        %4109 = vmatprep.mubr.bf16.mxu0 0
        %4110 = vmatmul.mubr.bf16.gmra.mxu0 %v3648
        %v4111 = vpop.f32.mrf.mxu0
        %v4112 = vadd.f32 %v3951, %v4111
        %v4113 = vpop.f32.mrf.mxu0
        %v4114 = vpop.f32.mrf.mxu0
        %v4115 = vadd.f32 %v3954, %v4114
        %v4116 = vpop.f32.mrf.mxu0
        %4117 = vmatprep.mubr.bf16.mxu0 0
        %4118 = vmatmul.mubr.bf16.gmra.mxu0 %v3651
        %v4119 = vpop.f32.mrf.mxu0
        %v4120 = vadd.f32 %v3959, %v4119
        %v4121 = vpop.f32.mrf.mxu0
        %v4122 = vpop.f32.mrf.mxu0
        %v4123 = vadd.f32 %v3962, %v4122
        %v4124 = vpop.f32.mrf.mxu0
        %4125 = vmatprep.mubr.bf16.mxu0 0
        %4126 = vmatmul.mubr.bf16.gmra.mxu0 %v3654
        %v4127 = vpop.f32.mrf.mxu0
        %v4128 = vadd.f32 %v3967, %v4127
        %v4129 = vpop.f32.mrf.mxu0
        %v4130 = vpop.f32.mrf.mxu0
        %v4131 = vadd.f32 %v3970, %v4130
        %v4132 = vpop.f32.mrf.mxu0
        %4133 = vmatprep.mubr.bf16.mxu0 0
        %4134 = vmatmul.mubr.bf16.gmra.mxu0 %v3657
        %v4135 = vpop.f32.mrf.mxu0
        %v4136 = vadd.f32 %v3975, %v4135
        %v4137 = vpop.f32.mrf.mxu0
        %v4138 = vpop.f32.mrf.mxu0
        %v4139 = vadd.f32 %v3978, %v4138
        %v4140 = vpop.f32.mrf.mxu0
        %4141 = vmatprep.mubr.bf16.mxu0 0
        %4142 = vmatmul.mubr.bf16.gmra.mxu0 %v3660
        %v4143 = vpop.f32.mrf.mxu0
        %v4144 = vadd.f32 %v3983, %v4143
        %v4145 = vpop.f32.mrf.mxu0
        %v4146 = vpop.f32.mrf.mxu0
        %v4147 = vadd.f32 %v3986, %v4146
        %v4148 = vpop.f32.mrf.mxu0
        %4149 = vmatprep.mubr.bf16.mxu0 0
        %4150 = vmatmul.mubr.bf16.gmra.mxu0 %v3663
        %v4151 = vpop.f32.mrf.mxu0
        %v4152 = vadd.f32 %v3991, %v4151
        %v4153 = vpop.f32.mrf.mxu0
        %v4154 = vpop.f32.mrf.mxu0
        %v4155 = vadd.f32 %v3994, %v4154
        %v4156 = vpop.f32.mrf.mxu0
        %4157 = vmatprep.mubr.bf16.mxu0 0
        %4158 = vmatmul.mubr.bf16.gmra.mxu0 %v3666
        %v4159 = vpop.f32.mrf.mxu0
        %v4160 = vadd.f32 %v3999, %v4159
        %v4161 = vpop.f32.mrf.mxu0
        %v4162 = vpop.f32.mrf.mxu0
        %v4163 = vadd.f32 %v4002, %v4162
        %v4164 = vpop.f32.mrf.mxu0
        %4165 = vmatprep.mubr.bf16.mxu0 0
        %4166 = vmatmul.mubr.bf16.gmra.mxu0 %v3669
        %v4167 = vpop.f32.mrf.mxu0
        %v4168 = vadd.f32 %v4007, %v4167
        %v4169 = vpop.f32.mrf.mxu0
        %v4170 = vpop.f32.mrf.mxu0
        %v4171 = vadd.f32 %v4010, %v4170
        %v4172 = vpop.f32.mrf.mxu0
        %4173 = vmatprep.mubr.bf16.mxu0 0
        %4174 = vmatmul.mubr.bf16.gmra.mxu0 %v3672
        %v4175 = vpop.f32.mrf.mxu0
        %v4176 = vadd.f32 %v4015, %v4175
        %v4177 = vpop.f32.mrf.mxu0
        %v4178 = vpop.f32.mrf.mxu0
        %v4179 = vadd.f32 %v4018, %v4178
        %v4180 = vpop.f32.mrf.mxu0
        %4181 = vmatprep.mubr.bf16.mxu0 0
        %4182 = vmatmul.mubr.bf16.gmra.mxu0 %v3675
        %v4183 = vpop.f32.mrf.mxu0
        %v4184 = vadd.f32 %v4023, %v4183
        %v4185 = vpop.f32.mrf.mxu0
        %v4186 = vpop.f32.mrf.mxu0
        %v4187 = vadd.f32 %v4026, %v4186
        %v4188 = vpop.f32.mrf.mxu0
        %4189 = vdwg.mxu0
        %v4190 = vadd.f32 %v3229, %v4064
        %v4191 = vadd.f32 %v3232, %v4067
        %v4192 = vadd.f32 %v3237, %v4072
        %v4193 = vadd.f32 %v3240, %v4075
        %v4194 = vadd.f32 %v3245, %v4080
        %v4195 = vadd.f32 %v3248, %v4083
        %v4196 = vadd.f32 %v3253, %v4088
        %v4197 = vadd.f32 %v3256, %v4091
        %v4198 = vadd.f32 %v3261, %v4096
        %v4199 = vadd.f32 %v3264, %v4099
        %v4200 = vadd.f32 %v3269, %v4104
        %v4201 = vadd.f32 %v3272, %v4107
        %v4202 = vadd.f32 %v3277, %v4112
        %v4203 = vadd.f32 %v3280, %v4115
        %v4204 = vadd.f32 %v3285, %v4120
        %v4205 = vadd.f32 %v3288, %v4123
        %v4206 = vadd.f32 %v3293, %v4128
        %v4207 = vadd.f32 %v3296, %v4131
        %v4208 = vadd.f32 %v3301, %v4136
        %v4209 = vadd.f32 %v3304, %v4139
        %v4210 = vadd.f32 %v3309, %v4144
        %v4211 = vadd.f32 %v3312, %v4147
        %v4212 = vadd.f32 %v3317, %v4152
        %v4213 = vadd.f32 %v3320, %v4155
        %v4214 = vadd.f32 %v3325, %v4160
        %v4215 = vadd.f32 %v3328, %v4163
        %v4216 = vadd.f32 %v3333, %v4168
        %v4217 = vadd.f32 %v3336, %v4171
        %v4218 = vadd.f32 %v3341, %v4176
        %v4219 = vadd.f32 %v3344, %v4179
        %v4220 = vadd.f32 %v3349, %v4184
        %v4221 = vadd.f32 %v3352, %v4187
        %v4222 = vld [vmem:[%s4] sm:$0x1]
        %v4224 = vlaneseq
        %v4225 = vshrl.u32 %v4224, 7
        %v4226 = vsub.s32 0, %v4225
        %v4227 = vrot.slane %v4222, %v4226
        %v4229 = vadd.f32 %v4190, %v4227
        %v4230 = vadd.f32 %v4191, %v4227
        %v4231 = vadd.f32 %v4192, %v4227
        %v4232 = vadd.f32 %v4193, %v4227
        %v4233 = vadd.f32 %v4194, %v4227
        %v4234 = vadd.f32 %v4195, %v4227
        %v4235 = vadd.f32 %v4196, %v4227
        %v4236 = vadd.f32 %v4197, %v4227
        %v4237 = vadd.f32 %v4198, %v4227
        %v4238 = vadd.f32 %v4199, %v4227
        %v4239 = vadd.f32 %v4200, %v4227
        %v4240 = vadd.f32 %v4201, %v4227
        %v4241 = vadd.f32 %v4202, %v4227
        %v4242 = vadd.f32 %v4203, %v4227
        %v4243 = vadd.f32 %v4204, %v4227
        %v4244 = vadd.f32 %v4205, %v4227
        %v4245 = vadd.f32 %v4206, %v4227
        %v4246 = vadd.f32 %v4207, %v4227
        %v4247 = vadd.f32 %v4208, %v4227
        %v4248 = vadd.f32 %v4209, %v4227
        %v4249 = vadd.f32 %v4210, %v4227
        %v4250 = vadd.f32 %v4211, %v4227
        %v4251 = vadd.f32 %v4212, %v4227
        %v4252 = vadd.f32 %v4213, %v4227
        %v4253 = vadd.f32 %v4214, %v4227
        %v4254 = vadd.f32 %v4215, %v4227
        %v4255 = vadd.f32 %v4216, %v4227
        %v4256 = vadd.f32 %v4217, %v4227
        %v4257 = vadd.f32 %v4218, %v4227
        %v4258 = vadd.f32 %v4219, %v4227
        %v4259 = vadd.f32 %v4220, %v4227
        %v4260 = vadd.f32 %v4221, %v4227
        %v4261 = vmax.f32 %v4229, 0.0
        %v4262 = vmax.f32 %v4230, 0.0
        %v4263 = vmax.f32 %v4231, 0.0
        %v4264 = vmax.f32 %v4232, 0.0
        %v4265 = vmax.f32 %v4233, 0.0
        %v4266 = vmax.f32 %v4234, 0.0
        %v4267 = vmax.f32 %v4235, 0.0
        %v4268 = vmax.f32 %v4236, 0.0
        %v4269 = vmax.f32 %v4237, 0.0
        %v4270 = vmax.f32 %v4238, 0.0
        %v4271 = vmax.f32 %v4239, 0.0
        %v4272 = vmax.f32 %v4240, 0.0
        %v4273 = vmax.f32 %v4241, 0.0
        %v4274 = vmax.f32 %v4242, 0.0
        %v4275 = vmax.f32 %v4243, 0.0
        %v4276 = vmax.f32 %v4244, 0.0
        %v4277 = vmax.f32 %v4245, 0.0
        %v4278 = vmax.f32 %v4246, 0.0
        %v4279 = vmax.f32 %v4247, 0.0
        %v4280 = vmax.f32 %v4248, 0.0
        %v4281 = vmax.f32 %v4249, 0.0
        %v4282 = vmax.f32 %v4250, 0.0
        %v4283 = vmax.f32 %v4251, 0.0
        %v4284 = vmax.f32 %v4252, 0.0
        %v4285 = vmax.f32 %v4253, 0.0
        %v4286 = vmax.f32 %v4254, 0.0
        %v4287 = vmax.f32 %v4255, 0.0
        %v4288 = vmax.f32 %v4256, 0.0
        %v4289 = vmax.f32 %v4257, 0.0
        %v4290 = vmax.f32 %v4258, 0.0
        %v4291 = vmax.f32 %v4259, 0.0
        %v4292 = vmax.f32 %v4260, 0.0
        %v4293 = vpack.c.bf16 %v4262, %v4261
        %v4294 = vpack.c.bf16 %v4264, %v4263
        %v4295 = vpack.c.bf16 %v4266, %v4265
        %v4296 = vpack.c.bf16 %v4268, %v4267
        %v4297 = vpack.c.bf16 %v4270, %v4269
        %v4298 = vpack.c.bf16 %v4272, %v4271
        %v4299 = vpack.c.bf16 %v4274, %v4273
        %v4300 = vpack.c.bf16 %v4276, %v4275
        %v4301 = vpack.c.bf16 %v4278, %v4277
        %v4302 = vpack.c.bf16 %v4280, %v4279
        %v4303 = vpack.c.bf16 %v4282, %v4281
        %v4304 = vpack.c.bf16 %v4284, %v4283
        %v4305 = vpack.c.bf16 %v4286, %v4285
        %v4306 = vpack.c.bf16 %v4288, %v4287
        %v4307 = vpack.c.bf16 %v4290, %v4289
        %v4308 = vpack.c.bf16 %v4292, %v4291
        %v4309 = vld [vmem:[#allocation10] sm:$0xf]
        %v4310 = vld [vmem:[#allocation10 + $0x4] sm:$0xf]
        %v4311 = vld [vmem:[#allocation10 + $0x8] sm:$0xf]
        %v4312 = vld [vmem:[#allocation10 + $0xc] sm:$0xf]
        %v4313 = vld [vmem:[#allocation10 + $0x10] sm:$0xf]
        %v4314 = vld [vmem:[#allocation10 + $0x14] sm:$0xf]
        %v4315 = vld [vmem:[#allocation10 + $0x18] sm:$0xf]
        %v4316 = vld [vmem:[#allocation10 + $0x1c] sm:$0xf]
        %v4317 = vld [vmem:[#allocation10 + $0x20] sm:$0xf]
        %v4318 = vld [vmem:[#allocation10 + $0x24] sm:$0xf]
        %v4319 = vld [vmem:[#allocation10 + $0x28] sm:$0xf]
        %v4320 = vld [vmem:[#allocation10 + $0x2c] sm:$0xf]
        %v4321 = vld [vmem:[#allocation10 + $0x30] sm:$0xf]
        %v4322 = vld [vmem:[#allocation10 + $0x34] sm:$0xf]
        %v4323 = vld [vmem:[#allocation10 + $0x38] sm:$0xf]
        %v4324 = vld [vmem:[#allocation10 + $0x3c] sm:$0xf]
        %v4325 = vld [vmem:[%s6] sm:$0x1]
        %v4327 = vlaneseq
        %v4328 = vshrl.u32 %v4327, 7
        %v4329 = vsub.s32 0, %v4328
        %v4330 = vrot.slane %v4325, %v4329
        %v4348 = vunpack.c.l.b16 %v4309
        %v4349 = vunpack.c.l.b16 %v4310
        %v4350 = vunpack.c.l.b16 %v4311
        %v4351 = vunpack.c.l.b16 %v4312
        %v4352 = vunpack.c.l.b16 %v4313
        %v4353 = vunpack.c.l.b16 %v4314
        %v4354 = vunpack.c.l.b16 %v4315
        %v4355 = vunpack.c.l.b16 %v4316
        %v4356 = vunpack.c.l.b16 %v4317
        %v4357 = vunpack.c.l.b16 %v4318
        %v4358 = vunpack.c.l.b16 %v4319
        %v4359 = vunpack.c.l.b16 %v4320
        %v4360 = vunpack.c.l.b16 %v4321
        %v4361 = vunpack.c.l.b16 %v4322
        %v4362 = vunpack.c.l.b16 %v4323
        %v4363 = vunpack.c.l.b16 %v4324
        %v4364 = vpack.c.b16 %v4349, %v4348
        %v4365 = vpack.c.b16 %v4351, %v4350
        %v4366 = vpack.c.b16 %v4353, %v4352
        %v4367 = vpack.c.b16 %v4355, %v4354
        %v4368 = vpack.c.b16 %v4357, %v4356
        %v4369 = vpack.c.b16 %v4359, %v4358
        %v4370 = vpack.c.b16 %v4361, %v4360
        %v4371 = vpack.c.b16 %v4363, %v4362
        %4380 = vmatprep.subr.bf16.mxu0 0
        %4381 = vmatpush1.bf16.msra.mxu0 %v4371
        %4382 = vmatprep.subr.bf16.mxu0 0
        %4383 = vmatpush1.bf16.msra.mxu0 %v4370
        %4384 = vmatprep.subr.bf16.mxu0 0
        %4385 = vmatpush1.bf16.msra.mxu0 %v4369
        %4386 = vmatprep.subr.bf16.mxu0 0
        %4387 = vmatpush1.bf16.msra.mxu0 %v4368
        %4388 = vmatprep.subr.bf16.mxu0 0
        %4389 = vmatpush1.bf16.msra.mxu0 %v4367
        %4390 = vmatprep.subr.bf16.mxu0 0
        %4391 = vmatpush1.bf16.msra.mxu0 %v4366
        %4392 = vmatprep.subr.bf16.mxu0 0
        %4393 = vmatpush1.bf16.msra.mxu0 %v4365
        %4394 = vmatprep.subr.bf16.mxu0 0
        %4395 = vmatpush1.bf16.msra.mxu0 %v4364
        %4396 = vmatprep.subr.bf16.mxu0 0
        %4397 = vmatpush2.bf16.msra.mxu0 0
        %4398 = vmatprep.subr.bf16.mxu0 0
        %4399 = vmatpush2.bf16.msra.mxu0 0
        %4400 = vmatprep.subr.bf16.mxu0 0
        %4401 = vmatpush2.bf16.msra.mxu0 0
        %4402 = vmatprep.subr.bf16.mxu0 0
        %4403 = vmatpush2.bf16.msra.mxu0 0
        %4404 = vmatprep.subr.bf16.mxu0 0
        %4405 = vmatpush2.bf16.msra.mxu0 0
        %4406 = vmatprep.subr.bf16.mxu0 0
        %4407 = vmatpush2.bf16.msra.mxu0 0
        %4408 = vmatprep.subr.bf16.mxu0 0
        %4409 = vmatpush2.bf16.msra.mxu0 0
        %4410 = vmatprep.subr.bf16.mxu0 0
        %4411 = vmatpush2.bf16.msra.mxu0 0
        %4412 = vmatprep.mubr.bf16.mxu0 0
        %4413 = vmatmul.mubr.bf16.gmra.mxu0 %v4293
        %v4414 = vpop.f32.mrf.mxu0
        %v4415 = vadd.f32 %v4330, %v4414
        %v4416 = vpop.f32.mrf.mxu0
        %v4417 = vpop.f32.mrf.mxu0
        %v4418 = vadd.f32 %v4330, %v4417
        %v4419 = vpop.f32.mrf.mxu0
        %4420 = vmatprep.mubr.bf16.mxu0 0
        %4421 = vmatmul.mubr.bf16.gmra.mxu0 %v4294
        %v4422 = vpop.f32.mrf.mxu0
        %v4423 = vadd.f32 %v4330, %v4422
        %v4424 = vpop.f32.mrf.mxu0
        %v4425 = vpop.f32.mrf.mxu0
        %v4426 = vadd.f32 %v4330, %v4425
        %v4427 = vpop.f32.mrf.mxu0
        %4428 = vmatprep.mubr.bf16.mxu0 0
        %4429 = vmatmul.mubr.bf16.gmra.mxu0 %v4295
        %v4430 = vpop.f32.mrf.mxu0
        %v4431 = vadd.f32 %v4330, %v4430
        %v4432 = vpop.f32.mrf.mxu0
        %v4433 = vpop.f32.mrf.mxu0
        %v4434 = vadd.f32 %v4330, %v4433
        %v4435 = vpop.f32.mrf.mxu0
        %4436 = vmatprep.mubr.bf16.mxu0 0
        %4437 = vmatmul.mubr.bf16.gmra.mxu0 %v4296
        %v4438 = vpop.f32.mrf.mxu0
        %v4439 = vadd.f32 %v4330, %v4438
        %v4440 = vpop.f32.mrf.mxu0
        %v4441 = vpop.f32.mrf.mxu0
        %v4442 = vadd.f32 %v4330, %v4441
        %v4443 = vpop.f32.mrf.mxu0
        %4444 = vmatprep.mubr.bf16.mxu0 0
        %4445 = vmatmul.mubr.bf16.gmra.mxu0 %v4297
        %v4446 = vpop.f32.mrf.mxu0
        %v4447 = vadd.f32 %v4330, %v4446
        %v4448 = vpop.f32.mrf.mxu0
        %v4449 = vpop.f32.mrf.mxu0
        %v4450 = vadd.f32 %v4330, %v4449
        %v4451 = vpop.f32.mrf.mxu0
        %4452 = vmatprep.mubr.bf16.mxu0 0
        %4453 = vmatmul.mubr.bf16.gmra.mxu0 %v4298
        %v4454 = vpop.f32.mrf.mxu0
        %v4455 = vadd.f32 %v4330, %v4454
        %v4456 = vpop.f32.mrf.mxu0
        %v4457 = vpop.f32.mrf.mxu0
        %v4458 = vadd.f32 %v4330, %v4457
        %v4459 = vpop.f32.mrf.mxu0
        %4460 = vmatprep.mubr.bf16.mxu0 0
        %4461 = vmatmul.mubr.bf16.gmra.mxu0 %v4299
        %v4462 = vpop.f32.mrf.mxu0
        %v4463 = vadd.f32 %v4330, %v4462
        %v4464 = vpop.f32.mrf.mxu0
        %v4465 = vpop.f32.mrf.mxu0
        %v4466 = vadd.f32 %v4330, %v4465
        %v4467 = vpop.f32.mrf.mxu0
        %4468 = vmatprep.mubr.bf16.mxu0 0
        %4469 = vmatmul.mubr.bf16.gmra.mxu0 %v4300
        %v4470 = vpop.f32.mrf.mxu0
        %v4471 = vadd.f32 %v4330, %v4470
        %v4472 = vpop.f32.mrf.mxu0
        %v4473 = vpop.f32.mrf.mxu0
        %v4474 = vadd.f32 %v4330, %v4473
        %v4475 = vpop.f32.mrf.mxu0
        %4476 = vmatprep.mubr.bf16.mxu0 0
        %4477 = vmatmul.mubr.bf16.gmra.mxu0 %v4301
        %v4478 = vpop.f32.mrf.mxu0
        %v4479 = vadd.f32 %v4330, %v4478
        %v4480 = vpop.f32.mrf.mxu0
        %v4481 = vpop.f32.mrf.mxu0
        %v4482 = vadd.f32 %v4330, %v4481
        %v4483 = vpop.f32.mrf.mxu0
        %4484 = vmatprep.mubr.bf16.mxu0 0
        %4485 = vmatmul.mubr.bf16.gmra.mxu0 %v4302
        %v4486 = vpop.f32.mrf.mxu0
        %v4487 = vadd.f32 %v4330, %v4486
        %v4488 = vpop.f32.mrf.mxu0
        %v4489 = vpop.f32.mrf.mxu0
        %v4490 = vadd.f32 %v4330, %v4489
        %v4491 = vpop.f32.mrf.mxu0
        %4492 = vmatprep.mubr.bf16.mxu0 0
        %4493 = vmatmul.mubr.bf16.gmra.mxu0 %v4303
        %v4494 = vpop.f32.mrf.mxu0
        %v4495 = vadd.f32 %v4330, %v4494
        %v4496 = vpop.f32.mrf.mxu0
        %v4497 = vpop.f32.mrf.mxu0
        %v4498 = vadd.f32 %v4330, %v4497
        %v4499 = vpop.f32.mrf.mxu0
        %4500 = vmatprep.mubr.bf16.mxu0 0
        %4501 = vmatmul.mubr.bf16.gmra.mxu0 %v4304
        %v4502 = vpop.f32.mrf.mxu0
        %v4503 = vadd.f32 %v4330, %v4502
        %v4504 = vpop.f32.mrf.mxu0
        %v4505 = vpop.f32.mrf.mxu0
        %v4506 = vadd.f32 %v4330, %v4505
        %v4507 = vpop.f32.mrf.mxu0
        %4508 = vmatprep.mubr.bf16.mxu0 0
        %4509 = vmatmul.mubr.bf16.gmra.mxu0 %v4305
        %v4510 = vpop.f32.mrf.mxu0
        %v4511 = vadd.f32 %v4330, %v4510
        %v4512 = vpop.f32.mrf.mxu0
        %v4513 = vpop.f32.mrf.mxu0
        %v4514 = vadd.f32 %v4330, %v4513
        %v4515 = vpop.f32.mrf.mxu0
        %4516 = vmatprep.mubr.bf16.mxu0 0
        %4517 = vmatmul.mubr.bf16.gmra.mxu0 %v4306
        %v4518 = vpop.f32.mrf.mxu0
        %v4519 = vadd.f32 %v4330, %v4518
        %v4520 = vpop.f32.mrf.mxu0
        %v4521 = vpop.f32.mrf.mxu0
        %v4522 = vadd.f32 %v4330, %v4521
        %v4523 = vpop.f32.mrf.mxu0
        %4524 = vmatprep.mubr.bf16.mxu0 0
        %4525 = vmatmul.mubr.bf16.gmra.mxu0 %v4307
        %v4526 = vpop.f32.mrf.mxu0
        %v4527 = vadd.f32 %v4330, %v4526
        %v4528 = vpop.f32.mrf.mxu0
        %v4529 = vpop.f32.mrf.mxu0
        %v4530 = vadd.f32 %v4330, %v4529
        %v4531 = vpop.f32.mrf.mxu0
        %4532 = vmatprep.mubr.bf16.mxu0 0
        %4533 = vmatmul.mubr.bf16.gmra.mxu0 %v4308
        %v4534 = vpop.f32.mrf.mxu0
        %v4535 = vadd.f32 %v4330, %v4534
        %v4536 = vpop.f32.mrf.mxu0
        %v4537 = vpop.f32.mrf.mxu0
        %v4538 = vadd.f32 %v4330, %v4537
        %v4539 = vpop.f32.mrf.mxu0
        %4540 = vdwg.mxu0
        %v4541 = vadd.f32 %v4415, %v4418
        %v4542 = vadd.f32 %v4541, %v4423
        %v4543 = vadd.f32 %v4542, %v4426
        %v4544 = vadd.f32 %v4543, %v4431
        %v4545 = vadd.f32 %v4544, %v4434
        %v4546 = vadd.f32 %v4545, %v4439
        %v4547 = vadd.f32 %v4546, %v4442
        %v4548 = vadd.f32 %v4547, %v4447
        %v4549 = vadd.f32 %v4548, %v4450
        %v4550 = vadd.f32 %v4549, %v4455
        %v4551 = vadd.f32 %v4550, %v4458
        %v4552 = vadd.f32 %v4551, %v4463
        %v4553 = vadd.f32 %v4552, %v4466
        %v4554 = vadd.f32 %v4553, %v4471
        %v4555 = vadd.f32 %v4554, %v4474
        %v4556 = vadd.f32 %v4555, %v4479
        %v4557 = vadd.f32 %v4556, %v4482
        %v4558 = vadd.f32 %v4557, %v4487
        %v4559 = vadd.f32 %v4558, %v4490
        %v4560 = vadd.f32 %v4559, %v4495
        %v4561 = vadd.f32 %v4560, %v4498
        %v4562 = vadd.f32 %v4561, %v4503
        %v4563 = vadd.f32 %v4562, %v4506
        %v4564 = vadd.f32 %v4563, %v4511
        %v4565 = vadd.f32 %v4564, %v4514
        %v4566 = vadd.f32 %v4565, %v4519
        %v4567 = vadd.f32 %v4566, %v4522
        %v4568 = vadd.f32 %v4567, %v4527
        %v4569 = vadd.f32 %v4568, %v4530
        %v4570 = vadd.f32 %v4569, %v4535
        %v4571 = vadd.f32 %v4570, %v4538
        %v4572 = vrot.slane %v4571, 4
        %v4573 = vadd.f32 %v4571, %v4572
        %v4574 = vrot.slane %v4573, 2
        %v4575 = vadd.f32 %v4573, %v4574
        %v4576 = vrot.slane %v4575, 1
        %v4577 = vadd.f32 %v4575, %v4576
        %v4578 = vrcp.pop 256.0
        %v4579 = vmul.f32 %v4577, %v4578
        %v4580 = vlaneseq
        %v4581 = vand.u32 %v4580, 127
        %vm4582 = vcmp.eq.s32.totalorder %v4581, 0
        %4583 = vrot.lane.b32.xlu0 %v4579, 1
        %v4584 = vpop.permute.xlu0 %4583
        %v4585 = vsel %vm4582, 0.0, %v4584
        %vm4586 = vcmp.eq.s32.totalorder %v4581, 127
        %4587 = vrot.lane.b32.xlu0 %v4579, 127
        %v4588 = vpop.permute.xlu0 %4587
        %v4589 = vsel %vm4586, 0.0, %v4588
        %s4590 = sld [smem:[#allocation12]]
        %v4591 = vstv %s4590
        %v4592 = vmul.f32 %v4591, %v4585
        %s4593 = sld [smem:[#allocation12 + $0x1]]
        %v4594 = vstv %s4593
        %v4595 = vmul.f32 %v4594, %v4579
        %v4596 = vadd.f32 %v4592, %v4595
        %s4597 = sld [smem:[#allocation12 + $0x2]]
        %v4598 = vstv %s4597
        %v4599 = vmul.f32 %v4598, %v4589
        %v4600 = vadd.f32 %v4596, %v4599
        %v4601 = vxor.u32 %v4600, 2147483648
        %v4602 = vmul.f32 %v4601, 1.442695
        %v4603 = vpow.pop %v4602
        %v4604 = vadd.f32 %v4603, 1.0
        %v4605 = vrcp.pop %v4604
        %v4606 = vmul.f32 1.0, %v4605
        %v4607 = vlaneseq
        %v4608 = vshrl.u32 %v4607, 7
        %v4609 = vsub.s32 0, %v4608
        %v4610 = vrot.slane %v4606, %v4609
        %v4611 = vmul.f32 %v4415, %v4610
        %v4612 = vmul.f32 %v4418, %v4610
        %v4613 = vmul.f32 %v4423, %v4610
        %v4614 = vmul.f32 %v4426, %v4610
        %v4615 = vmul.f32 %v4431, %v4610
        %v4616 = vmul.f32 %v4434, %v4610
        %v4617 = vmul.f32 %v4439, %v4610
        %v4618 = vmul.f32 %v4442, %v4610
        %v4619 = vmul.f32 %v4447, %v4610
        %v4620 = vmul.f32 %v4450, %v4610
        %v4621 = vmul.f32 %v4455, %v4610
        %v4622 = vmul.f32 %v4458, %v4610
        %v4623 = vmul.f32 %v4463, %v4610
        %v4624 = vmul.f32 %v4466, %v4610
        %v4625 = vmul.f32 %v4471, %v4610
        %v4626 = vmul.f32 %v4474, %v4610
        %v4627 = vmul.f32 %v4479, %v4610
        %v4628 = vmul.f32 %v4482, %v4610
        %v4629 = vmul.f32 %v4487, %v4610
        %v4630 = vmul.f32 %v4490, %v4610
        %v4631 = vmul.f32 %v4495, %v4610
        %v4632 = vmul.f32 %v4498, %v4610
        %v4633 = vmul.f32 %v4503, %v4610
        %v4634 = vmul.f32 %v4506, %v4610
        %v4635 = vmul.f32 %v4511, %v4610
        %v4636 = vmul.f32 %v4514, %v4610
        %v4637 = vmul.f32 %v4519, %v4610
        %v4638 = vmul.f32 %v4522, %v4610
        %v4639 = vmul.f32 %v4527, %v4610
        %v4640 = vmul.f32 %v4530, %v4610
        %v4641 = vmul.f32 %v4535, %v4610
        %v4642 = vmul.f32 %v4538, %v4610
        %v4643 = vadd.f32 %v4611, %v383
        %v4644 = vadd.f32 %v4612, %v384
        %v4645 = vadd.f32 %v4613, %v385
        %v4646 = vadd.f32 %v4614, %v386
        %v4647 = vadd.f32 %v4615, %v387
        %v4648 = vadd.f32 %v4616, %v388
        %v4649 = vadd.f32 %v4617, %v389
        %v4650 = vadd.f32 %v4618, %v390
        %v4651 = vadd.f32 %v4619, %v391
        %v4652 = vadd.f32 %v4620, %v392
        %v4653 = vadd.f32 %v4621, %v393
        %v4654 = vadd.f32 %v4622, %v394
        %v4655 = vadd.f32 %v4623, %v395
        %v4656 = vadd.f32 %v4624, %v396
        %v4657 = vadd.f32 %v4625, %v397
        %v4658 = vadd.f32 %v4626, %v398
        %v4659 = vadd.f32 %v4627, %v399
        %v4660 = vadd.f32 %v4628, %v400
        %v4661 = vadd.f32 %v4629, %v401
        %v4662 = vadd.f32 %v4630, %v402
        %v4663 = vadd.f32 %v4631, %v403
        %v4664 = vadd.f32 %v4632, %v404
        %v4665 = vadd.f32 %v4633, %v405
        %v4666 = vadd.f32 %v4634, %v406
        %v4667 = vadd.f32 %v4635, %v407
        %v4668 = vadd.f32 %v4636, %v408
        %v4669 = vadd.f32 %v4637, %v409
        %v4670 = vadd.f32 %v4638, %v410
        %v4671 = vadd.f32 %v4639, %v411
        %v4672 = vadd.f32 %v4640, %v412
        %v4673 = vadd.f32 %v4641, %v413
        %v4674 = vadd.f32 %v4642, %v414
        %v4675 = vmax.f32 %v4643, 0.0
        %v4676 = vmax.f32 %v4644, 0.0
        %v4677 = vmax.f32 %v4645, 0.0
        %v4678 = vmax.f32 %v4646, 0.0
        %v4679 = vmax.f32 %v4647, 0.0
        %v4680 = vmax.f32 %v4648, 0.0
        %v4681 = vmax.f32 %v4649, 0.0
        %v4682 = vmax.f32 %v4650, 0.0
        %v4683 = vmax.f32 %v4651, 0.0
        %v4684 = vmax.f32 %v4652, 0.0
        %v4685 = vmax.f32 %v4653, 0.0
        %v4686 = vmax.f32 %v4654, 0.0
        %v4687 = vmax.f32 %v4655, 0.0
        %v4688 = vmax.f32 %v4656, 0.0
        %v4689 = vmax.f32 %v4657, 0.0
        %v4690 = vmax.f32 %v4658, 0.0
        %v4691 = vmax.f32 %v4659, 0.0
        %v4692 = vmax.f32 %v4660, 0.0
        %v4693 = vmax.f32 %v4661, 0.0
        %v4694 = vmax.f32 %v4662, 0.0
        %v4695 = vmax.f32 %v4663, 0.0
        %v4696 = vmax.f32 %v4664, 0.0
        %v4697 = vmax.f32 %v4665, 0.0
        %v4698 = vmax.f32 %v4666, 0.0
        %v4699 = vmax.f32 %v4667, 0.0
        %v4700 = vmax.f32 %v4668, 0.0
        %v4701 = vmax.f32 %v4669, 0.0
        %v4702 = vmax.f32 %v4670, 0.0
        %v4703 = vmax.f32 %v4671, 0.0
        %v4704 = vmax.f32 %v4672, 0.0
        %v4705 = vmax.f32 %v4673, 0.0
        %v4706 = vmax.f32 %v4674, 0.0
        %4707 = vst [vmem:[%s381] sm:$0xff] %v4675
        %4708 = vst [vmem:[%s381 + $0x8] sm:$0xff] %v4676
        %4709 = vst [vmem:[%s381 + $0x10] sm:$0xff] %v4677
        %4710 = vst [vmem:[%s381 + $0x18] sm:$0xff] %v4678
        %4711 = vst [vmem:[%s381 + $0x20] sm:$0xff] %v4679
        %4712 = vst [vmem:[%s381 + $0x28] sm:$0xff] %v4680
        %4713 = vst [vmem:[%s381 + $0x30] sm:$0xff] %v4681
        %4714 = vst [vmem:[%s381 + $0x38] sm:$0xff] %v4682
        %4715 = vst [vmem:[%s381 + $0x40] sm:$0xff] %v4683
        %4716 = vst [vmem:[%s381 + $0x48] sm:$0xff] %v4684
        %4717 = vst [vmem:[%s381 + $0x50] sm:$0xff] %v4685
        %4718 = vst [vmem:[%s381 + $0x58] sm:$0xff] %v4686
        %4719 = vst [vmem:[%s381 + $0x60] sm:$0xff] %v4687
        %4720 = vst [vmem:[%s381 + $0x68] sm:$0xff] %v4688
        %4721 = vst [vmem:[%s381 + $0x70] sm:$0xff] %v4689
        %4722 = vst [vmem:[%s381 + $0x78] sm:$0xff] %v4690
        %4723 = vst [vmem:[%s381 + $0x80] sm:$0xff] %v4691
        %4724 = vst [vmem:[%s381 + $0x88] sm:$0xff] %v4692
        %4725 = vst [vmem:[%s381 + $0x90] sm:$0xff] %v4693
        %4726 = vst [vmem:[%s381 + $0x98] sm:$0xff] %v4694
        %4727 = vst [vmem:[%s381 + $0xa0] sm:$0xff] %v4695
        %4728 = vst [vmem:[%s381 + $0xa8] sm:$0xff] %v4696
        %4729 = vst [vmem:[%s381 + $0xb0] sm:$0xff] %v4697
        %4730 = vst [vmem:[%s381 + $0xb8] sm:$0xff] %v4698
        %4731 = vst [vmem:[%s381 + $0xc0] sm:$0xff] %v4699
        %4732 = vst [vmem:[%s381 + $0xc8] sm:$0xff] %v4700
        %4733 = vst [vmem:[%s381 + $0xd0] sm:$0xff] %v4701
        %4734 = vst [vmem:[%s381 + $0xd8] sm:$0xff] %v4702
        %4735 = vst [vmem:[%s381 + $0xe0] sm:$0xff] %v4703
        %4736 = vst [vmem:[%s381 + $0xe8] sm:$0xff] %v4704
        %4737 = vst [vmem:[%s381 + $0xf0] sm:$0xff] %v4705
        %4738 = vst [vmem:[%s381 + $0xf8] sm:$0xff] %v4706
        %s4739 = sand.u32 %s209, 1
        %s4740 = scalar_lea.sflag [#allocation5], %s4739
        %s4741 = sand.u32 %s209, 1
        %s4742 = smul.addr %s4741, 256
        %s4743 = scalar_lea.vmem [#allocation13], %s4742
        // Predicated region
        $region73: #{tpu_custom_call.1} parent=51 // pred_check
          %p4744 = pneg %p219
        $region74: #{tpu_custom_call.1} parent=51 // pred_check_branch
          %4746 = sbr.rel (%p4744) target = $region76
        $region75: #{tpu_custom_call.1} parent=51 // pred_region
          %s4748 = ssub.s32 4096, 4096
          %4749 = vsyncadd %s4740, %s4748
          %s4750 = smul.addr %s28, 32
          %s4751 = smul.addr %s4750, 128
          %s4752 = scalar_lea.hbm %s8, %s4751
          %s4753 = sshll.u32 %s4743, 4
          %s4754 = int_to_ptr.vmem [resolvable:$true] %s4753
          %4759 = dma.vmem_to_hbm [thread:$0]  %s4754, 4096, %s4752, %s4740, 128, 128, 8
        $region76: #{tpu_custom_call.1} parent=51 // pred_fallthru
          _
      $region52: #{tpu_custom_call.1} parent=5 // pred_fallthru
        _
      %p4760 = scmp.le.s32.totalorder 2, %s23
      // Predicated region
      $region77: #{tpu_custom_call.1} parent=5 // pred_check
        %p4761 = pneg %p4760
      $region78: #{tpu_custom_call.1} parent=5 // pred_check_branch
        %4763 = sbr.rel (%p4761) target = $region80
      $region79: #{tpu_custom_call.1} parent=5 // pred_region
        %s4764 = ssub.s32 %s23, 2
        // Predicated region
        $region81: #{tpu_custom_call.1} parent=79 // pred_check
          %p4765 = pneg %p225
        $region82: #{tpu_custom_call.1} parent=79 // pred_check_branch
          %4767 = sbr.rel (%p4765) target = $region84
        $region83: #{tpu_custom_call.1} parent=79 // pred_region
          %s4768 = sand.u32 %s210, 1
          %s4769 = scalar_lea.sflag [#allocation5], %s4768
          %s4770 = sand.u32 %s210, 1
          %s4771 = smul.addr %s4770, 256
          %s4772 = scalar_lea.vmem [#allocation13], %s4771
          %4773 = dma.done %s4769, 4096
        $region84: #{tpu_custom_call.1} parent=79 // pred_fallthru
          _
      $region80: #{tpu_custom_call.1} parent=5 // pred_fallthru
        _
    $region6: #{tpu_custom_call.1} parent=1 // loop_footer
      %s27 = sadd.s32 1, %s23
    $region7: #{tpu_custom_call.1} parent=1 // loop_footer_branch
      %22 = sbr.rel target = $region3
    $region8: #{tpu_custom_call.1} parent=1 // loop_exit
      _
    %4774 = vsyncpa [#allocation4], 1
    %s4775 = scalar_lea.sflag [#allocation4], 1
    %4776 = vsyncpa %s4775, 1
    %4777 = vsyncpa [#allocation8], 1
    %4778 = vsyncpa [#allocation11], 1
    %4779 = vsyncpa [#allocation5], 1
    %s4780 = scalar_lea.sflag [#allocation5], 1
    %4781 = vsyncpa %s4780, 1
    %4782 = vsyncpa [#allocation6], 1
    %s4783 = scalar_lea.sflag [#allocation6], 1
    %4784 = vsyncpa %s4783, 1

</llo_original>
